<compile_context>
chip_gen: v6e
topology: v6e:2x2x1
jax: 0.10.0
libtpu: 0.0.40
codegen_flags: <defaults>
</compile_context>

<pallas_src>
import numpy as np
import jax
import jax.numpy as jnp
from jax import lax
from jax.experimental import pallas as pl
from jax.experimental.pallas import tpu as pltpu


# ---------------------------------------------------------------------------
# Fused ResConv kernel (operates on the margin-flat pooled volume of one batch).
# ---------------------------------------------------------------------------
def _make_resconv_kernel(c_in, c_mid, S, M, Lf, tap_offsets, compute_dtype):
    K1 = 27 * c_in
    K2 = 27 * c_mid

    def kernel(x_ref, w1_ref, s1_ref, t1_ref, w2_ref, s2_ref, t2_ref, mask_ref,
               o_ref, a_ref, im_ref):
        # x_ref   : (1, C_in, Lf)   pooled volume, flat, zero margins of width M (bf16)
        # w1_ref  : (C_mid, 27*C_in)  im2col weight matrix, columns ordered [tap, ch]
        # w2_ref  : (C_mid, 27*C_mid)
        # s*,t*   : (C_mid, 1) f32   folded conv-bias + eval-BN scale / shift (resident)
        # mask_ref: (27, S)          per-tap boundary validity masks
        # o_ref   : (1, C_mid, S)    lane-dense output block (no pad planes)
        # a_ref   : (C_mid, Lf)      VMEM scratch: margin-flat conv1 activation
        # im_ref  : (Kmax, S)        VMEM scratch: im2col operand (reused by both convs)

        # ---- conv1: im2col fill (27 static lane-offset slices, masked) + one matmul ----
        for t, u in enumerate(tap_offsets):
            im_ref[t * c_in:(t + 1) * c_in, :] = (
                x_ref[0, :, M + u:M + u + S] * mask_ref[t:t + 1, :])
        acc1 = jnp.dot(w1_ref[...], im_ref[0:K1, :],
                       preferred_element_type=jnp.float32)
        act = jnp.maximum(acc1 * s1_ref[...] + t1_ref[...], 0.0)      # f32 epilogue

        # margin-flat activation for conv2's tap slices.  Margins must be finite (masked
        # to zero anyway); re-zero them every step because with "parallel" semantics each
        # TensorCore owns its own scratch instance (cannot rely on program_id==0).
        a_ref[:, 0:M] = jnp.zeros((c_mid, M), compute_dtype)
        a_ref[:, M + S:Lf] = jnp.zeros((c_mid, Lf - M - S), compute_dtype)
        a_ref[:, M:M + S] = act.astype(compute_dtype)                 # aligned, lane-dense

        # ---- conv2: im2col fill + one matmul + BN + ReLU + residual ----
        for t, u in enumerate(tap_offsets):
            im_ref[t * c_mid:(t + 1) * c_mid, :] = (
                a_ref[:, M + u:M + u + S] * mask_ref[t:t + 1, :])
        acc2 = jnp.dot(w2_ref[...], im_ref[0:K2, :],
                       preferred_element_type=jnp.float32)
        y = jnp.maximum(acc2 * s2_ref[...] + t2_ref[...], 0.0) + act
        o_ref[0] = y.astype(o_ref.dtype)                              # full-block store

    return kernel


def down_forward(x, w1, b1, g1, be1, rm1, rv1, w2, b2, g2, be2, rm2, rv2,
                 eps=1e-5, compute_dtype=jnp.bfloat16):
    """Forward pass of Down(in_channels, out_channels) in eval mode (NCDHW)."""
    N, C_in, D, H, W = x.shape
    C_mid = w1.shape[0]
    assert D % 2 == 0 and H % 2 == 0 and W % 2 == 0, "MaxPool3d(2) needs even D/H/W"
    Dp, Hp, Wp = D // 2, H // 2, W // 2
    S = Dp * Hp * Wp                       # flat voxel count (lane axis of the matmuls)
    sd, sh = Hp * Wp, Wp                   # flat strides of d / h
    M0 = sd + sh + 1                       # max |tap offset|
    M = ((M0 + 127) // 128) * 128          # 128-aligned zero margin
    Lf = S + 2 * M

    # --- MaxPool3d(2) + flatten + margin pad: one fused XLA pass, 1/8-sized result ---
    xq = x.astype(compute_dtype)
    pooled = xq.reshape(N, C_in, Dp, 2, Hp, 2, Wp, 2).max(axis=(3, 5, 7))
    xflat = jnp.pad(pooled.reshape(N, C_in, S), ((0, 0), (0, 0), (M, M)))

    # tap offsets in the flat (unpadded) voxel space, ordered as (kd, kh, kw)
    tap_offsets = tuple((kd - 1) * sd + (kh - 1) * sh + (kw - 1)
                        for kd in range(3) for kh in range(3) for kw in range(3))

    # fold conv bias + eval-mode BatchNorm into per-channel scale / shift (f32)
    s1 = g1 / jnp.sqrt(rv1 + eps)
    t1 = (b1 - rm1) * s1 + be1
    s2 = g2 / jnp.sqrt(rv2 + eps)
    t2 = (b2 - rm2) * s2 + be2

    # weights as single im2col matrices, column order [tap, in-channel]
    K1, K2 = 27 * C_in, 27 * C_mid
    w1m = jnp.transpose(w1.reshape(C_mid, C_in, 27), (0, 2, 1)).reshape(C_mid, K1)
    w2m = jnp.transpose(w2.reshape(C_mid, C_mid, 27), (0, 2, 1)).reshape(C_mid, K2)
    w1m = w1m.astype(compute_dtype)
    w2m = w2m.astype(compute_dtype)

    # per-tap boundary validity masks over the flat voxel space (host-built constant)
    dd, hh, ww = np.meshgrid(np.arange(Dp), np.arange(Hp), np.arange(Wp), indexing="ij")
    masks = []
    for kd in range(3):
        for kh in range(3):
            for kw in range(3):
                ok = ((dd + kd - 1 >= 0) & (dd + kd - 1 < Dp)
                      & (hh + kh - 1 >= 0) & (hh + kh - 1 < Hp)
                      & (ww + kw - 1 >= 0) & (ww + kw - 1 < Wp))
                masks.append(ok.reshape(-1))
    mask27 = jnp.asarray(np.stack(masks).astype(np.float32), dtype=compute_dtype)  # (27,S)

    kernel = _make_resconv_kernel(C_in, C_mid, S, M, Lf, tap_offsets, compute_dtype)
    Kmax = max(K1, K2)
    itm = jnp.dtype(compute_dtype).itemsize
    flops = 2 * N * S * C_mid * (K1 + K2)
    bytes_accessed = (N * C_in * Lf * itm + N * C_mid * S * 4
                      + (w1m.size + w2m.size + mask27.size) * itm)

    y_flat = pl.pallas_call(
        kernel,
        out_shape=jax.ShapeDtypeStruct((N, C_mid, S), x.dtype),
        grid_spec=pltpu.PrefetchScalarGridSpec(
            num_scalar_prefetch=0,
            grid=(N,),
            in_specs=[
                pl.BlockSpec((1, C_in, Lf), lambda n: (n, 0, 0)),
                pl.BlockSpec((C_mid, K1), lambda n: (0, 0)),
                pl.BlockSpec((C_mid, 1), lambda n: (0, 0)),
                pl.BlockSpec((C_mid, 1), lambda n: (0, 0)),
                pl.BlockSpec((C_mid, K2), lambda n: (0, 0)),
                pl.BlockSpec((C_mid, 1), lambda n: (0, 0)),
                pl.BlockSpec((C_mid, 1), lambda n: (0, 0)),
                pl.BlockSpec((27, S), lambda n: (0, 0)),
            ],
            out_specs=pl.BlockSpec((1, C_mid, S), lambda n: (n, 0, 0)),
            scratch_shapes=[pltpu.VMEM((C_mid, Lf), compute_dtype),
                            pltpu.VMEM((Kmax, S), compute_dtype)],
        ),
        compiler_params=pltpu.CompilerParams(
            dimension_semantics=("parallel",),
            vmem_limit_bytes=48 * 1024 * 1024,
        ),
        cost_estimate=pl.CostEstimate(flops=flops, transcendentals=0,
                                      bytes_accessed=int(bytes_accessed)),
    )(xflat, w1m, s1.reshape(C_mid, 1), t1.reshape(C_mid, 1),
      w2m, s2.reshape(C_mid, 1), t2.reshape(C_mid, 1), mask27)

    # free reshape: every output voxel was written in-kernel, no interior slicing needed.
    return y_flat.reshape(N, C_mid, Dp, Hp, Wp)


# ---------------------------------------------------------------------------
# Pure-JAX reference (eval-mode BN, precision-matched: bf16 conv operands,
# f32 accumulation / epilogue — exactly the kernel's compute precision).
# ---------------------------------------------------------------------------
def _conv3d_ref(z, w, b, compute_dtype):
    dn = lax.conv_dimension_numbers(z.shape, w.shape, ("NCDHW", "OIDHW", "NCDHW"))
    y = lax.conv_general_dilated(z.astype(compute_dtype), w.astype(compute_dtype),
                                 window_strides=(1, 1, 1),
                                 padding=((1, 1), (1, 1), (1, 1)),
                                 dimension_numbers=dn,
                                 preferred_element_type=jnp.float32)
    return y + b[None, :, None, None, None]


def _bn_eval(z, g, b, m, v, eps):
    e = lambda a: a[None, :, None, None, None]
    return e(g) * (z - e(m)) / jnp.sqrt(e(v) + eps) + e(b)


def _down_ref(x, w1, b1, g1, be1, m1, v1, w2, b2, g2, be2, m2, v2, eps=1e-5,
              compute_dtype=jnp.bfloat16):
    N, C, D, H, W = x.shape
    p = x.reshape(N, C, D // 2, 2, H // 2, 2, W // 2, 2).max(axis=(3, 5, 7))
    a = jax.nn.relu(_bn_eval(_conv3d_ref(p, w1, b1, compute_dtype), g1, be1, m1, v1, eps))
    y = jax.nn.relu(_bn_eval(_conv3d_ref(a, w2, b2, compute_dtype), g2, be2, m2, v2, eps))
    return a + y


if __name__ == "__main__":
    key = jax.random.PRNGKey(0)
    ks = jax.random.split(key, 13)
    N, C_in, C_out = 2, 4, 8
    D = H = W = 16

    x = jax.random.normal(ks[0], (N, C_in, D, H, W), jnp.float32)

    w1 = jax.random.normal(ks[1], (C_out, C_in, 3, 3, 3), jnp.float32) * 0.2
    b1 = jax.random.normal(ks[2], (C_out,), jnp.float32) * 0.1
    g1 = 1.0 + 0.1 * jax.random.normal(ks[3], (C_out,), jnp.float32)
    be1 = 0.1 * jax.random.normal(ks[4], (C_out,), jnp.float32)
    m1 = 0.1 * jax.random.normal(ks[5], (C_out,), jnp.float32)
    v1 = 0.5 + jnp.abs(jax.random.normal(ks[6], (C_out,), jnp.float32))

    w2 = jax.random.normal(ks[7], (C_out, C_out, 3, 3, 3), jnp.float32) * 0.15
    b2 = jax.random.normal(ks[8], (C_out,), jnp.float32) * 0.1
    g2 = 1.0 + 0.1 * jax.random.normal(ks[9], (C_out,), jnp.float32)
    be2 = 0.1 * jax.random.normal(ks[10], (C_out,), jnp.float32)
    m2 = 0.1 * jax.random.normal(ks[11], (C_out,), jnp.float32)
    v2 = 0.5 + jnp.abs(jax.random.normal(ks[12], (C_out,), jnp.float32))

    down_fn = jax.jit(down_forward)
    out = down_fn(x, w1, b1, g1, be1, m1, v1, w2, b2, g2, be2, m2, v2)
    out = jax.block_until_ready(out)

    ref = _down_ref(x, w1, b1, g1, be1, m1, v1, w2, b2, g2, be2, m2, v2)

    assert out.shape == (N, C_out, D // 2, H // 2, W // 2), out.shape
    max_err = float(jnp.max(jnp.abs(out - ref)))
    assert jnp.allclose(out, ref, atol=1e-2, rtol=1e-2), max_err

    print("KERNEL_OK")
</pallas_src>

<mosaic_0001>
module attributes {stable_mosaic.version = 11 : i64} {
  func.func @kernel(%arg0: i32, %arg1: memref<1x4x768xbf16, #tpu.memory_space<vmem>>, %arg2: memref<8x108xbf16, #tpu.memory_space<vmem>>, %arg3: memref<8x1xf32, #tpu.memory_space<vmem>>, %arg4: memref<8x1xf32, #tpu.memory_space<vmem>>, %arg5: memref<8x216xbf16, #tpu.memory_space<vmem>>, %arg6: memref<8x1xf32, #tpu.memory_space<vmem>>, %arg7: memref<8x1xf32, #tpu.memory_space<vmem>>, %arg8: memref<27x512xbf16, #tpu.memory_space<vmem>>, %arg9: memref<1x8x512xf32, #tpu.memory_space<vmem>>, %arg10: memref<8x768xbf16, #tpu.memory_space<vmem>>, %arg11: memref<216x512xbf16, #tpu.memory_space<vmem>>) attributes {dimension_semantics = [#tpu.dimension_semantics<parallel>], iteration_bounds = array<i64: 2>, scalar_prefetch = 0 : i64, scratch_operands = 2 : i64, tpu.core_type = #tpu.core_type<tc>, window_params = [{transform_indices = @transform_0, window_bounds = array<i64: 1, 4, 768>}, {pipeline_mode = #tpu.pipeline_mode<synchronous>, transform_indices = @transform_1, window_bounds = array<i64: 8, 108>}, {pipeline_mode = #tpu.pipeline_mode<synchronous>, transform_indices = @transform_2, window_bounds = array<i64: 8, 1>}, {pipeline_mode = #tpu.pipeline_mode<synchronous>, transform_indices = @transform_3, window_bounds = array<i64: 8, 1>}, {pipeline_mode = #tpu.pipeline_mode<synchronous>, transform_indices = @transform_4, window_bounds = array<i64: 8, 216>}, {pipeline_mode = #tpu.pipeline_mode<synchronous>, transform_indices = @transform_5, window_bounds = array<i64: 8, 1>}, {pipeline_mode = #tpu.pipeline_mode<synchronous>, transform_indices = @transform_6, window_bounds = array<i64: 8, 1>}, {pipeline_mode = #tpu.pipeline_mode<synchronous>, transform_indices = @transform_7, window_bounds = array<i64: 27, 512>}, {transform_indices = @transform_8, window_bounds = array<i64: 1, 8, 512>}]} {
    %c0 = arith.constant 0 : index
    %c0_0 = arith.constant 0 : index
    %c55 = arith.constant 55 : index
    %0 = vector.load %arg1[%c0, %c0_0, %c55] : memref<1x4x768xbf16, #tpu.memory_space<vmem>>, vector<1x4x512xbf16>
    %1 = vector.shape_cast %0 : vector<1x4x512xbf16> to vector<4x512xbf16>
    %c0_1 = arith.constant 0 : index
    %c0_2 = arith.constant 0 : index
    %2 = vector.load %arg8[%c0_1, %c0_2] : memref<27x512xbf16, #tpu.memory_space<vmem>>, vector<1x512xbf16>
    %3 = vector.broadcast %2 : vector<1x512xbf16> to vector<4x512xbf16>
    %4 = arith.mulf %1, %3 : vector<4x512xbf16>
    %c0_3 = arith.constant 0 : index
    %c0_4 = arith.constant 0 : index
    %5 = vector.load %arg11[%c0_3, %c0_4] : memref<216x512xbf16, #tpu.memory_space<vmem>>, vector<4x512xbf16>
    tpu.vector_store %arg11[%c0_3, %c0_4], %4 {strides = array<i32>} : memref<216x512xbf16, #tpu.memory_space<vmem>>, vector<4x512xbf16>,
    %c0_5 = arith.constant 0 : index
    %c0_6 = arith.constant 0 : index
    %c56 = arith.constant 56 : index
    %6 = vector.load %arg1[%c0_5, %c0_6, %c56] : memref<1x4x768xbf16, #tpu.memory_space<vmem>>, vector<1x4x512xbf16>
    %7 = vector.shape_cast %6 : vector<1x4x512xbf16> to vector<4x512xbf16>
    %c1 = arith.constant 1 : index
    %c0_7 = arith.constant 0 : index
    %8 = vector.load %arg8[%c1, %c0_7] : memref<27x512xbf16, #tpu.memory_space<vmem>>, vector<1x512xbf16>
    %9 = vector.broadcast %8 : vector<1x512xbf16> to vector<4x512xbf16>
    %10 = arith.mulf %7, %9 : vector<4x512xbf16>
    %c4 = arith.constant 4 : index
    %c0_8 = arith.constant 0 : index
    %11 = vector.load %arg11[%c4, %c0_8] : memref<216x512xbf16, #tpu.memory_space<vmem>>, vector<4x512xbf16>
    tpu.vector_store %arg11[%c4, %c0_8], %10 {strides = array<i32>} : memref<216x512xbf16, #tpu.memory_space<vmem>>, vector<4x512xbf16>,
    %c0_9 = arith.constant 0 : index
    %c0_10 = arith.constant 0 : index
    %c57 = arith.constant 57 : index
    %12 = vector.load %arg1[%c0_9, %c0_10, %c57] : memref<1x4x768xbf16, #tpu.memory_space<vmem>>, vector<1x4x512xbf16>
    %13 = vector.shape_cast %12 : vector<1x4x512xbf16> to vector<4x512xbf16>
    %c2 = arith.constant 2 : index
    %c0_11 = arith.constant 0 : index
    %14 = vector.load %arg8[%c2, %c0_11] : memref<27x512xbf16, #tpu.memory_space<vmem>>, vector<1x512xbf16>
    %15 = vector.broadcast %14 : vector<1x512xbf16> to vector<4x512xbf16>
    %16 = arith.mulf %13, %15 : vector<4x512xbf16>
    %c8 = arith.constant 8 : index
    %c0_12 = arith.constant 0 : index
    %17 = vector.load %arg11[%c8, %c0_12] : memref<216x512xbf16, #tpu.memory_space<vmem>>, vector<4x512xbf16>
    tpu.vector_store %arg11[%c8, %c0_12], %16 {strides = array<i32>} : memref<216x512xbf16, #tpu.memory_space<vmem>>, vector<4x512xbf16>,
    %c0_13 = arith.constant 0 : index
    %c0_14 = arith.constant 0 : index
    %c63 = arith.constant 63 : index
    %18 = vector.load %arg1[%c0_13, %c0_14, %c63] : memref<1x4x768xbf16, #tpu.memory_space<vmem>>, vector<1x4x512xbf16>
    %19 = vector.shape_cast %18 : vector<1x4x512xbf16> to vector<4x512xbf16>
    %c3 = arith.constant 3 : index
    %c0_15 = arith.constant 0 : index
    %20 = vector.load %arg8[%c3, %c0_15] : memref<27x512xbf16, #tpu.memory_space<vmem>>, vector<1x512xbf16>
    %21 = vector.broadcast %20 : vector<1x512xbf16> to vector<4x512xbf16>
    %22 = arith.mulf %19, %21 : vector<4x512xbf16>
    %c12 = arith.constant 12 : index
    %c0_16 = arith.constant 0 : index
    %23 = vector.load %arg11[%c12, %c0_16] : memref<216x512xbf16, #tpu.memory_space<vmem>>, vector<4x512xbf16>
    tpu.vector_store %arg11[%c12, %c0_16], %22 {strides = array<i32>} : memref<216x512xbf16, #tpu.memory_space<vmem>>, vector<4x512xbf16>,
    %c0_17 = arith.constant 0 : index
    %c0_18 = arith.constant 0 : index
    %c64 = arith.constant 64 : index
    %24 = vector.load %arg1[%c0_17, %c0_18, %c64] : memref<1x4x768xbf16, #tpu.memory_space<vmem>>, vector<1x4x512xbf16>
    %25 = vector.shape_cast %24 : vector<1x4x512xbf16> to vector<4x512xbf16>
    %c4_19 = arith.constant 4 : index
    %c0_20 = arith.constant 0 : index
    %26 = vector.load %arg8[%c4_19, %c0_20] : memref<27x512xbf16, #tpu.memory_space<vmem>>, vector<1x512xbf16>
    %27 = vector.broadcast %26 : vector<1x512xbf16> to vector<4x512xbf16>
    %28 = arith.mulf %25, %27 : vector<4x512xbf16>
    %c16 = arith.constant 16 : index
    %c0_21 = arith.constant 0 : index
    %29 = vector.load %arg11[%c16, %c0_21] : memref<216x512xbf16, #tpu.memory_space<vmem>>, vector<4x512xbf16>
    tpu.vector_store %arg11[%c16, %c0_21], %28 {strides = array<i32>} : memref<216x512xbf16, #tpu.memory_space<vmem>>, vector<4x512xbf16>,
    %c0_22 = arith.constant 0 : index
    %c0_23 = arith.constant 0 : index
    %c65 = arith.constant 65 : index
    %30 = vector.load %arg1[%c0_22, %c0_23, %c65] : memref<1x4x768xbf16, #tpu.memory_space<vmem>>, vector<1x4x512xbf16>
    %31 = vector.shape_cast %30 : vector<1x4x512xbf16> to vector<4x512xbf16>
    %c5 = arith.constant 5 : index
    %c0_24 = arith.constant 0 : index
    %32 = vector.load %arg8[%c5, %c0_24] : memref<27x512xbf16, #tpu.memory_space<vmem>>, vector<1x512xbf16>
    %33 = vector.broadcast %32 : vector<1x512xbf16> to vector<4x512xbf16>
    %34 = arith.mulf %31, %33 : vector<4x512xbf16>
    %c20 = arith.constant 20 : index
    %c0_25 = arith.constant 0 : index
    %35 = vector.load %arg11[%c20, %c0_25] : memref<216x512xbf16, #tpu.memory_space<vmem>>, vector<4x512xbf16>
    tpu.vector_store %arg11[%c20, %c0_25], %34 {strides = array<i32>} : memref<216x512xbf16, #tpu.memory_space<vmem>>, vector<4x512xbf16>,
    %c0_26 = arith.constant 0 : index
    %c0_27 = arith.constant 0 : index
    %c71 = arith.constant 71 : index
    %36 = vector.load %arg1[%c0_26, %c0_27, %c71] : memref<1x4x768xbf16, #tpu.memory_space<vmem>>, vector<1x4x512xbf16>
    %37 = vector.shape_cast %36 : vector<1x4x512xbf16> to vector<4x512xbf16>
    %c6 = arith.constant 6 : index
    %c0_28 = arith.constant 0 : index
    %38 = vector.load %arg8[%c6, %c0_28] : memref<27x512xbf16, #tpu.memory_space<vmem>>, vector<1x512xbf16>
    %39 = vector.broadcast %38 : vector<1x512xbf16> to vector<4x512xbf16>
    %40 = arith.mulf %37, %39 : vector<4x512xbf16>
    %c24 = arith.constant 24 : index
    %c0_29 = arith.constant 0 : index
    %41 = vector.load %arg11[%c24, %c0_29] : memref<216x512xbf16, #tpu.memory_space<vmem>>, vector<4x512xbf16>
    tpu.vector_store %arg11[%c24, %c0_29], %40 {strides = array<i32>} : memref<216x512xbf16, #tpu.memory_space<vmem>>, vector<4x512xbf16>,
    %c0_30 = arith.constant 0 : index
    %c0_31 = arith.constant 0 : index
    %c72 = arith.constant 72 : index
    %42 = vector.load %arg1[%c0_30, %c0_31, %c72] : memref<1x4x768xbf16, #tpu.memory_space<vmem>>, vector<1x4x512xbf16>
    %43 = vector.shape_cast %42 : vector<1x4x512xbf16> to vector<4x512xbf16>
    %c7 = arith.constant 7 : index
    %c0_32 = arith.constant 0 : index
    %44 = vector.load %arg8[%c7, %c0_32] : memref<27x512xbf16, #tpu.memory_space<vmem>>, vector<1x512xbf16>
    %45 = vector.broadcast %44 : vector<1x512xbf16> to vector<4x512xbf16>
    %46 = arith.mulf %43, %45 : vector<4x512xbf16>
    %c28 = arith.constant 28 : index
    %c0_33 = arith.constant 0 : index
    %47 = vector.load %arg11[%c28, %c0_33] : memref<216x512xbf16, #tpu.memory_space<vmem>>, vector<4x512xbf16>
    tpu.vector_store %arg11[%c28, %c0_33], %46 {strides = array<i32>} : memref<216x512xbf16, #tpu.memory_space<vmem>>, vector<4x512xbf16>,
    %c0_34 = arith.constant 0 : index
    %c0_35 = arith.constant 0 : index
    %c73 = arith.constant 73 : index
    %48 = vector.load %arg1[%c0_34, %c0_35, %c73] : memref<1x4x768xbf16, #tpu.memory_space<vmem>>, vector<1x4x512xbf16>
    %49 = vector.shape_cast %48 : vector<1x4x512xbf16> to vector<4x512xbf16>
    %c8_36 = arith.constant 8 : index
    %c0_37 = arith.constant 0 : index
    %50 = vector.load %arg8[%c8_36, %c0_37] : memref<27x512xbf16, #tpu.memory_space<vmem>>, vector<1x512xbf16>
    %51 = vector.broadcast %50 : vector<1x512xbf16> to vector<4x512xbf16>
    %52 = arith.mulf %49, %51 : vector<4x512xbf16>
    %c32 = arith.constant 32 : index
    %c0_38 = arith.constant 0 : index
    %53 = vector.load %arg11[%c32, %c0_38] : memref<216x512xbf16, #tpu.memory_space<vmem>>, vector<4x512xbf16>
    tpu.vector_store %arg11[%c32, %c0_38], %52 {strides = array<i32>} : memref<216x512xbf16, #tpu.memory_space<vmem>>, vector<4x512xbf16>,
    %c0_39 = arith.constant 0 : index
    %c0_40 = arith.constant 0 : index
    %c119 = arith.constant 119 : index
    %54 = vector.load %arg1[%c0_39, %c0_40, %c119] : memref<1x4x768xbf16, #tpu.memory_space<vmem>>, vector<1x4x512xbf16>
    %55 = vector.shape_cast %54 : vector<1x4x512xbf16> to vector<4x512xbf16>
    %c9 = arith.constant 9 : index
    %c0_41 = arith.constant 0 : index
    %56 = vector.load %arg8[%c9, %c0_41] : memref<27x512xbf16, #tpu.memory_space<vmem>>, vector<1x512xbf16>
    %57 = vector.broadcast %56 : vector<1x512xbf16> to vector<4x512xbf16>
    %58 = arith.mulf %55, %57 : vector<4x512xbf16>
    %c36 = arith.constant 36 : index
    %c0_42 = arith.constant 0 : index
    %59 = vector.load %arg11[%c36, %c0_42] : memref<216x512xbf16, #tpu.memory_space<vmem>>, vector<4x512xbf16>
    tpu.vector_store %arg11[%c36, %c0_42], %58 {strides = array<i32>} : memref<216x512xbf16, #tpu.memory_space<vmem>>, vector<4x512xbf16>,
    %c0_43 = arith.constant 0 : index
    %c0_44 = arith.constant 0 : index
    %c120 = arith.constant 120 : index
    %60 = vector.load %arg1[%c0_43, %c0_44, %c120] : memref<1x4x768xbf16, #tpu.memory_space<vmem>>, vector<1x4x512xbf16>
    %61 = vector.shape_cast %60 : vector<1x4x512xbf16> to vector<4x512xbf16>
    %c10 = arith.constant 10 : index
    %c0_45 = arith.constant 0 : index
    %62 = vector.load %arg8[%c10, %c0_45] : memref<27x512xbf16, #tpu.memory_space<vmem>>, vector<1x512xbf16>
    %63 = vector.broadcast %62 : vector<1x512xbf16> to vector<4x512xbf16>
    %64 = arith.mulf %61, %63 : vector<4x512xbf16>
    %c40 = arith.constant 40 : index
    %c0_46 = arith.constant 0 : index
    %65 = vector.load %arg11[%c40, %c0_46] : memref<216x512xbf16, #tpu.memory_space<vmem>>, vector<4x512xbf16>
    tpu.vector_store %arg11[%c40, %c0_46], %64 {strides = array<i32>} : memref<216x512xbf16, #tpu.memory_space<vmem>>, vector<4x512xbf16>,
    %c0_47 = arith.constant 0 : index
    %c0_48 = arith.constant 0 : index
    %c121 = arith.constant 121 : index
    %66 = vector.load %arg1[%c0_47, %c0_48, %c121] : memref<1x4x768xbf16, #tpu.memory_space<vmem>>, vector<1x4x512xbf16>
    %67 = vector.shape_cast %66 : vector<1x4x512xbf16> to vector<4x512xbf16>
    %c11 = arith.constant 11 : index
    %c0_49 = arith.constant 0 : index
    %68 = vector.load %arg8[%c11, %c0_49] : memref<27x512xbf16, #tpu.memory_space<vmem>>, vector<1x512xbf16>
    %69 = vector.broadcast %68 : vector<1x512xbf16> to vector<4x512xbf16>
    %70 = arith.mulf %67, %69 : vector<4x512xbf16>
    %c44 = arith.constant 44 : index
    %c0_50 = arith.constant 0 : index
    %71 = vector.load %arg11[%c44, %c0_50] : memref<216x512xbf16, #tpu.memory_space<vmem>>, vector<4x512xbf16>
    tpu.vector_store %arg11[%c44, %c0_50], %70 {strides = array<i32>} : memref<216x512xbf16, #tpu.memory_space<vmem>>, vector<4x512xbf16>,
    %c0_51 = arith.constant 0 : index
    %c0_52 = arith.constant 0 : index
    %c127 = arith.constant 127 : index
    %72 = vector.load %arg1[%c0_51, %c0_52, %c127] : memref<1x4x768xbf16, #tpu.memory_space<vmem>>, vector<1x4x512xbf16>
    %73 = vector.shape_cast %72 : vector<1x4x512xbf16> to vector<4x512xbf16>
    %c12_53 = arith.constant 12 : index
    %c0_54 = arith.constant 0 : index
    %74 = vector.load %arg8[%c12_53, %c0_54] : memref<27x512xbf16, #tpu.memory_space<vmem>>, vector<1x512xbf16>
    %75 = vector.broadcast %74 : vector<1x512xbf16> to vector<4x512xbf16>
    %76 = arith.mulf %73, %75 : vector<4x512xbf16>
    %c48 = arith.constant 48 : index
    %c0_55 = arith.constant 0 : index
    %77 = vector.load %arg11[%c48, %c0_55] : memref<216x512xbf16, #tpu.memory_space<vmem>>, vector<4x512xbf16>
    tpu.vector_store %arg11[%c48, %c0_55], %76 {strides = array<i32>} : memref<216x512xbf16, #tpu.memory_space<vmem>>, vector<4x512xbf16>,
    %c0_56 = arith.constant 0 : index
    %c0_57 = arith.constant 0 : index
    %c128 = arith.constant 128 : index
    %78 = vector.load %arg1[%c0_56, %c0_57, %c128] : memref<1x4x768xbf16, #tpu.memory_space<vmem>>, vector<1x4x512xbf16>
    %79 = vector.shape_cast %78 : vector<1x4x512xbf16> to vector<4x512xbf16>
    %c13 = arith.constant 13 : index
    %c0_58 = arith.constant 0 : index
    %80 = vector.load %arg8[%c13, %c0_58] : memref<27x512xbf16, #tpu.memory_space<vmem>>, vector<1x512xbf16>
    %81 = vector.broadcast %80 : vector<1x512xbf16> to vector<4x512xbf16>
    %82 = arith.mulf %79, %81 : vector<4x512xbf16>
    %c52 = arith.constant 52 : index
    %c0_59 = arith.constant 0 : index
    %83 = vector.load %arg11[%c52, %c0_59] : memref<216x512xbf16, #tpu.memory_space<vmem>>, vector<4x512xbf16>
    tpu.vector_store %arg11[%c52, %c0_59], %82 {strides = array<i32>} : memref<216x512xbf16, #tpu.memory_space<vmem>>, vector<4x512xbf16>,
    %c0_60 = arith.constant 0 : index
    %c0_61 = arith.constant 0 : index
    %c129 = arith.constant 129 : index
    %84 = vector.load %arg1[%c0_60, %c0_61, %c129] : memref<1x4x768xbf16, #tpu.memory_space<vmem>>, vector<1x4x512xbf16>
    %85 = vector.shape_cast %84 : vector<1x4x512xbf16> to vector<4x512xbf16>
    %c14 = arith.constant 14 : index
    %c0_62 = arith.constant 0 : index
    %86 = vector.load %arg8[%c14, %c0_62] : memref<27x512xbf16, #tpu.memory_space<vmem>>, vector<1x512xbf16>
    %87 = vector.broadcast %86 : vector<1x512xbf16> to vector<4x512xbf16>
    %88 = arith.mulf %85, %87 : vector<4x512xbf16>
    %c56_63 = arith.constant 56 : index
    %c0_64 = arith.constant 0 : index
    %89 = vector.load %arg11[%c56_63, %c0_64] : memref<216x512xbf16, #tpu.memory_space<vmem>>, vector<4x512xbf16>
    tpu.vector_store %arg11[%c56_63, %c0_64], %88 {strides = array<i32>} : memref<216x512xbf16, #tpu.memory_space<vmem>>, vector<4x512xbf16>,
    %c0_65 = arith.constant 0 : index
    %c0_66 = arith.constant 0 : index
    %c135 = arith.constant 135 : index
    %90 = vector.load %arg1[%c0_65, %c0_66, %c135] : memref<1x4x768xbf16, #tpu.memory_space<vmem>>, vector<1x4x512xbf16>
    %91 = vector.shape_cast %90 : vector<1x4x512xbf16> to vector<4x512xbf16>
    %c15 = arith.constant 15 : index
    %c0_67 = arith.constant 0 : index
    %92 = vector.load %arg8[%c15, %c0_67] : memref<27x512xbf16, #tpu.memory_space<vmem>>, vector<1x512xbf16>
    %93 = vector.broadcast %92 : vector<1x512xbf16> to vector<4x512xbf16>
    %94 = arith.mulf %91, %93 : vector<4x512xbf16>
    %c60 = arith.constant 60 : index
    %c0_68 = arith.constant 0 : index
    %95 = vector.load %arg11[%c60, %c0_68] : memref<216x512xbf16, #tpu.memory_space<vmem>>, vector<4x512xbf16>
    tpu.vector_store %arg11[%c60, %c0_68], %94 {strides = array<i32>} : memref<216x512xbf16, #tpu.memory_space<vmem>>, vector<4x512xbf16>,
    %c0_69 = arith.constant 0 : index
    %c0_70 = arith.constant 0 : index
    %c136 = arith.constant 136 : index
    %96 = vector.load %arg1[%c0_69, %c0_70, %c136] : memref<1x4x768xbf16, #tpu.memory_space<vmem>>, vector<1x4x512xbf16>
    %97 = vector.shape_cast %96 : vector<1x4x512xbf16> to vector<4x512xbf16>
    %c16_71 = arith.constant 16 : index
    %c0_72 = arith.constant 0 : index
    %98 = vector.load %arg8[%c16_71, %c0_72] : memref<27x512xbf16, #tpu.memory_space<vmem>>, vector<1x512xbf16>
    %99 = vector.broadcast %98 : vector<1x512xbf16> to vector<4x512xbf16>
    %100 = arith.mulf %97, %99 : vector<4x512xbf16>
    %c64_73 = arith.constant 64 : index
    %c0_74 = arith.constant 0 : index
    %101 = vector.load %arg11[%c64_73, %c0_74] : memref<216x512xbf16, #tpu.memory_space<vmem>>, vector<4x512xbf16>
    tpu.vector_store %arg11[%c64_73, %c0_74], %100 {strides = array<i32>} : memref<216x512xbf16, #tpu.memory_space<vmem>>, vector<4x512xbf16>,
    %c0_75 = arith.constant 0 : index
    %c0_76 = arith.constant 0 : index
    %c137 = arith.constant 137 : index
    %102 = vector.load %arg1[%c0_75, %c0_76, %c137] : memref<1x4x768xbf16, #tpu.memory_space<vmem>>, vector<1x4x512xbf16>
    %103 = vector.shape_cast %102 : vector<1x4x512xbf16> to vector<4x512xbf16>
    %c17 = arith.constant 17 : index
    %c0_77 = arith.constant 0 : index
    %104 = vector.load %arg8[%c17, %c0_77] : memref<27x512xbf16, #tpu.memory_space<vmem>>, vector<1x512xbf16>
    %105 = vector.broadcast %104 : vector<1x512xbf16> to vector<4x512xbf16>
    %106 = arith.mulf %103, %105 : vector<4x512xbf16>
    %c68 = arith.constant 68 : index
    %c0_78 = arith.constant 0 : index
    %107 = vector.load %arg11[%c68, %c0_78] : memref<216x512xbf16, #tpu.memory_space<vmem>>, vector<4x512xbf16>
    tpu.vector_store %arg11[%c68, %c0_78], %106 {strides = array<i32>} : memref<216x512xbf16, #tpu.memory_space<vmem>>, vector<4x512xbf16>,
    %c0_79 = arith.constant 0 : index
    %c0_80 = arith.constant 0 : index
    %c183 = arith.constant 183 : index
    %108 = vector.load %arg1[%c0_79, %c0_80, %c183] : memref<1x4x768xbf16, #tpu.memory_space<vmem>>, vector<1x4x512xbf16>
    %109 = vector.shape_cast %108 : vector<1x4x512xbf16> to vector<4x512xbf16>
    %c18 = arith.constant 18 : index
    %c0_81 = arith.constant 0 : index
    %110 = vector.load %arg8[%c18, %c0_81] : memref<27x512xbf16, #tpu.memory_space<vmem>>, vector<1x512xbf16>
    %111 = vector.broadcast %110 : vector<1x512xbf16> to vector<4x512xbf16>
    %112 = arith.mulf %109, %111 : vector<4x512xbf16>
    %c72_82 = arith.constant 72 : index
    %c0_83 = arith.constant 0 : index
    %113 = vector.load %arg11[%c72_82, %c0_83] : memref<216x512xbf16, #tpu.memory_space<vmem>>, vector<4x512xbf16>
    tpu.vector_store %arg11[%c72_82, %c0_83], %112 {strides = array<i32>} : memref<216x512xbf16, #tpu.memory_space<vmem>>, vector<4x512xbf16>,
    %c0_84 = arith.constant 0 : index
    %c0_85 = arith.constant 0 : index
    %c184 = arith.constant 184 : index
    %114 = vector.load %arg1[%c0_84, %c0_85, %c184] : memref<1x4x768xbf16, #tpu.memory_space<vmem>>, vector<1x4x512xbf16>
    %115 = vector.shape_cast %114 : vector<1x4x512xbf16> to vector<4x512xbf16>
    %c19 = arith.constant 19 : index
    %c0_86 = arith.constant 0 : index
    %116 = vector.load %arg8[%c19, %c0_86] : memref<27x512xbf16, #tpu.memory_space<vmem>>, vector<1x512xbf16>
    %117 = vector.broadcast %116 : vector<1x512xbf16> to vector<4x512xbf16>
    %118 = arith.mulf %115, %117 : vector<4x512xbf16>
    %c76 = arith.constant 76 : index
    %c0_87 = arith.constant 0 : index
    %119 = vector.load %arg11[%c76, %c0_87] : memref<216x512xbf16, #tpu.memory_space<vmem>>, vector<4x512xbf16>
    tpu.vector_store %arg11[%c76, %c0_87], %118 {strides = array<i32>} : memref<216x512xbf16, #tpu.memory_space<vmem>>, vector<4x512xbf16>,
    %c0_88 = arith.constant 0 : index
    %c0_89 = arith.constant 0 : index
    %c185 = arith.constant 185 : index
    %120 = vector.load %arg1[%c0_88, %c0_89, %c185] : memref<1x4x768xbf16, #tpu.memory_space<vmem>>, vector<1x4x512xbf16>
    %121 = vector.shape_cast %120 : vector<1x4x512xbf16> to vector<4x512xbf16>
    %c20_90 = arith.constant 20 : index
    %c0_91 = arith.constant 0 : index
    %122 = vector.load %arg8[%c20_90, %c0_91] : memref<27x512xbf16, #tpu.memory_space<vmem>>, vector<1x512xbf16>
    %123 = vector.broadcast %122 : vector<1x512xbf16> to vector<4x512xbf16>
    %124 = arith.mulf %121, %123 : vector<4x512xbf16>
    %c80 = arith.constant 80 : index
    %c0_92 = arith.constant 0 : index
    %125 = vector.load %arg11[%c80, %c0_92] : memref<216x512xbf16, #tpu.memory_space<vmem>>, vector<4x512xbf16>
    tpu.vector_store %arg11[%c80, %c0_92], %124 {strides = array<i32>} : memref<216x512xbf16, #tpu.memory_space<vmem>>, vector<4x512xbf16>,
    %c0_93 = arith.constant 0 : index
    %c0_94 = arith.constant 0 : index
    %c191 = arith.constant 191 : index
    %126 = vector.load %arg1[%c0_93, %c0_94, %c191] : memref<1x4x768xbf16, #tpu.memory_space<vmem>>, vector<1x4x512xbf16>
    %127 = vector.shape_cast %126 : vector<1x4x512xbf16> to vector<4x512xbf16>
    %c21 = arith.constant 21 : index
    %c0_95 = arith.constant 0 : index
    %128 = vector.load %arg8[%c21, %c0_95] : memref<27x512xbf16, #tpu.memory_space<vmem>>, vector<1x512xbf16>
    %129 = vector.broadcast %128 : vector<1x512xbf16> to vector<4x512xbf16>
    %130 = arith.mulf %127, %129 : vector<4x512xbf16>
    %c84 = arith.constant 84 : index
    %c0_96 = arith.constant 0 : index
    %131 = vector.load %arg11[%c84, %c0_96] : memref<216x512xbf16, #tpu.memory_space<vmem>>, vector<4x512xbf16>
    tpu.vector_store %arg11[%c84, %c0_96], %130 {strides = array<i32>} : memref<216x512xbf16, #tpu.memory_space<vmem>>, vector<4x512xbf16>,
    %c0_97 = arith.constant 0 : index
    %c0_98 = arith.constant 0 : index
    %c192 = arith.constant 192 : index
    %132 = vector.load %arg1[%c0_97, %c0_98, %c192] : memref<1x4x768xbf16, #tpu.memory_space<vmem>>, vector<1x4x512xbf16>
    %133 = vector.shape_cast %132 : vector<1x4x512xbf16> to vector<4x512xbf16>
    %c22 = arith.constant 22 : index
    %c0_99 = arith.constant 0 : index
    %134 = vector.load %arg8[%c22, %c0_99] : memref<27x512xbf16, #tpu.memory_space<vmem>>, vector<1x512xbf16>
    %135 = vector.broadcast %134 : vector<1x512xbf16> to vector<4x512xbf16>
    %136 = arith.mulf %133, %135 : vector<4x512xbf16>
    %c88 = arith.constant 88 : index
    %c0_100 = arith.constant 0 : index
    %137 = vector.load %arg11[%c88, %c0_100] : memref<216x512xbf16, #tpu.memory_space<vmem>>, vector<4x512xbf16>
    tpu.vector_store %arg11[%c88, %c0_100], %136 {strides = array<i32>} : memref<216x512xbf16, #tpu.memory_space<vmem>>, vector<4x512xbf16>,
    %c0_101 = arith.constant 0 : index
    %c0_102 = arith.constant 0 : index
    %c193 = arith.constant 193 : index
    %138 = vector.load %arg1[%c0_101, %c0_102, %c193] : memref<1x4x768xbf16, #tpu.memory_space<vmem>>, vector<1x4x512xbf16>
    %139 = vector.shape_cast %138 : vector<1x4x512xbf16> to vector<4x512xbf16>
    %c23 = arith.constant 23 : index
    %c0_103 = arith.constant 0 : index
    %140 = vector.load %arg8[%c23, %c0_103] : memref<27x512xbf16, #tpu.memory_space<vmem>>, vector<1x512xbf16>
    %141 = vector.broadcast %140 : vector<1x512xbf16> to vector<4x512xbf16>
    %142 = arith.mulf %139, %141 : vector<4x512xbf16>
    %c92 = arith.constant 92 : index
    %c0_104 = arith.constant 0 : index
    %143 = vector.load %arg11[%c92, %c0_104] : memref<216x512xbf16, #tpu.memory_space<vmem>>, vector<4x512xbf16>
    tpu.vector_store %arg11[%c92, %c0_104], %142 {strides = array<i32>} : memref<216x512xbf16, #tpu.memory_space<vmem>>, vector<4x512xbf16>,
    %c0_105 = arith.constant 0 : index
    %c0_106 = arith.constant 0 : index
    %c199 = arith.constant 199 : index
    %144 = vector.load %arg1[%c0_105, %c0_106, %c199] : memref<1x4x768xbf16, #tpu.memory_space<vmem>>, vector<1x4x512xbf16>
    %145 = vector.shape_cast %144 : vector<1x4x512xbf16> to vector<4x512xbf16>
    %c24_107 = arith.constant 24 : index
    %c0_108 = arith.constant 0 : index
    %146 = vector.load %arg8[%c24_107, %c0_108] : memref<27x512xbf16, #tpu.memory_space<vmem>>, vector<1x512xbf16>
    %147 = vector.broadcast %146 : vector<1x512xbf16> to vector<4x512xbf16>
    %148 = arith.mulf %145, %147 : vector<4x512xbf16>
    %c96 = arith.constant 96 : index
    %c0_109 = arith.constant 0 : index
    %149 = vector.load %arg11[%c96, %c0_109] : memref<216x512xbf16, #tpu.memory_space<vmem>>, vector<4x512xbf16>
    tpu.vector_store %arg11[%c96, %c0_109], %148 {strides = array<i32>} : memref<216x512xbf16, #tpu.memory_space<vmem>>, vector<4x512xbf16>,
    %c0_110 = arith.constant 0 : index
    %c0_111 = arith.constant 0 : index
    %c200 = arith.constant 200 : index
    %150 = vector.load %arg1[%c0_110, %c0_111, %c200] : memref<1x4x768xbf16, #tpu.memory_space<vmem>>, vector<1x4x512xbf16>
    %151 = vector.shape_cast %150 : vector<1x4x512xbf16> to vector<4x512xbf16>
    %c25 = arith.constant 25 : index
    %c0_112 = arith.constant 0 : index
    %152 = vector.load %arg8[%c25, %c0_112] : memref<27x512xbf16, #tpu.memory_space<vmem>>, vector<1x512xbf16>
    %153 = vector.broadcast %152 : vector<1x512xbf16> to vector<4x512xbf16>
    %154 = arith.mulf %151, %153 : vector<4x512xbf16>
    %c100 = arith.constant 100 : index
    %c0_113 = arith.constant 0 : index
    %155 = vector.load %arg11[%c100, %c0_113] : memref<216x512xbf16, #tpu.memory_space<vmem>>, vector<4x512xbf16>
    tpu.vector_store %arg11[%c100, %c0_113], %154 {strides = array<i32>} : memref<216x512xbf16, #tpu.memory_space<vmem>>, vector<4x512xbf16>,
    %c0_114 = arith.constant 0 : index
    %c0_115 = arith.constant 0 : index
    %c201 = arith.constant 201 : index
    %156 = vector.load %arg1[%c0_114, %c0_115, %c201] : memref<1x4x768xbf16, #tpu.memory_space<vmem>>, vector<1x4x512xbf16>
    %157 = vector.shape_cast %156 : vector<1x4x512xbf16> to vector<4x512xbf16>
    %c26 = arith.constant 26 : index
    %c0_116 = arith.constant 0 : index
    %158 = vector.load %arg8[%c26, %c0_116] : memref<27x512xbf16, #tpu.memory_space<vmem>>, vector<1x512xbf16>
    %159 = vector.broadcast %158 : vector<1x512xbf16> to vector<4x512xbf16>
    %160 = arith.mulf %157, %159 : vector<4x512xbf16>
    %c104 = arith.constant 104 : index
    %c0_117 = arith.constant 0 : index
    %161 = vector.load %arg11[%c104, %c0_117] : memref<216x512xbf16, #tpu.memory_space<vmem>>, vector<4x512xbf16>
    tpu.vector_store %arg11[%c104, %c0_117], %160 {strides = array<i32>} : memref<216x512xbf16, #tpu.memory_space<vmem>>, vector<4x512xbf16>,
    %c0_118 = arith.constant 0 : index
    %c0_119 = arith.constant 0 : index
    %162 = vector.load %arg2[%c0_118, %c0_119] : memref<8x108xbf16, #tpu.memory_space<vmem>>, vector<8x108xbf16>
    %c0_120 = arith.constant 0 : index
    %c0_121 = arith.constant 0 : index
    %163 = vector.load %arg11[%c0_120, %c0_121] : memref<216x512xbf16, #tpu.memory_space<vmem>>, vector<108x512xbf16>
    %cst = arith.constant dense<0.000000e+00> : vector<8x512xf32>
    %164 = tpu.matmul %162, %163, %cst {dimension_numbers = #tpu.dot_dimension_numbers<[1], [0], [0], [1], [0, 0, 1, 1], [], []>} : vector<8x108xbf16>, vector<108x512xbf16>, vector<8x512xf32> -> vector<8x512xf32>
    %c0_122 = arith.constant 0 : index
    %c0_123 = arith.constant 0 : index
    %165 = vector.load %arg3[%c0_122, %c0_123] : memref<8x1xf32, #tpu.memory_space<vmem>>, vector<8x1xf32>
    %166 = vector.broadcast %165 : vector<8x1xf32> to vector<8x512xf32>
    %167 = arith.mulf %164, %166 : vector<8x512xf32>
    %c0_124 = arith.constant 0 : index
    %c0_125 = arith.constant 0 : index
    %168 = vector.load %arg4[%c0_124, %c0_125] : memref<8x1xf32, #tpu.memory_space<vmem>>, vector<8x1xf32>
    %169 = vector.broadcast %168 : vector<8x1xf32> to vector<8x512xf32>
    %170 = arith.addf %167, %169 : vector<8x512xf32>
    %cst_126 = arith.constant 0.000000e+00 : f32
    %171 = vector.broadcast %cst_126 : f32 to vector<8x512xf32>
    %172 = arith.maximumf %170, %171 : vector<8x512xf32>
    %cst_127 = arith.constant 0.000000e+00 : bf16
    %173 = vector.broadcast %cst_127 : bf16 to vector<8x128xbf16>
    %c0_128 = arith.constant 0 : index
    %c0_129 = arith.constant 0 : index
    %174 = vector.load %arg10[%c0_128, %c0_129] : memref<8x768xbf16, #tpu.memory_space<vmem>>, vector<8x128xbf16>
    tpu.vector_store %arg10[%c0_128, %c0_129], %173 {strides = array<i32>} : memref<8x768xbf16, #tpu.memory_space<vmem>>, vector<8x128xbf16>,
    %cst_130 = arith.constant 0.000000e+00 : bf16
    %175 = vector.broadcast %cst_130 : bf16 to vector<8x128xbf16>
    %c0_131 = arith.constant 0 : index
    %c640 = arith.constant 640 : index
    %176 = vector.load %arg10[%c0_131, %c640] : memref<8x768xbf16, #tpu.memory_space<vmem>>, vector<8x128xbf16>
    tpu.vector_store %arg10[%c0_131, %c640], %175 {strides = array<i32>} : memref<8x768xbf16, #tpu.memory_space<vmem>>, vector<8x128xbf16>,
    %177 = arith.truncf %172 : vector<8x512xf32> to vector<8x512xbf16>
    %c0_132 = arith.constant 0 : index
    %c128_133 = arith.constant 128 : index
    %178 = vector.load %arg10[%c0_132, %c128_133] : memref<8x768xbf16, #tpu.memory_space<vmem>>, vector<8x512xbf16>
    tpu.vector_store %arg10[%c0_132, %c128_133], %177 {strides = array<i32>} : memref<8x768xbf16, #tpu.memory_space<vmem>>, vector<8x512xbf16>,
    %c0_134 = arith.constant 0 : index
    %c55_135 = arith.constant 55 : index
    %179 = vector.load %arg10[%c0_134, %c55_135] : memref<8x768xbf16, #tpu.memory_space<vmem>>, vector<8x512xbf16>
    %c0_136 = arith.constant 0 : index
    %c0_137 = arith.constant 0 : index
    %180 = vector.load %arg8[%c0_136, %c0_137] : memref<27x512xbf16, #tpu.memory_space<vmem>>, vector<1x512xbf16>
    %181 = vector.broadcast %180 : vector<1x512xbf16> to vector<8x512xbf16>
    %182 = arith.mulf %179, %181 : vector<8x512xbf16>
    %c0_138 = arith.constant 0 : index
    %c0_139 = arith.constant 0 : index
    %183 = vector.load %arg11[%c0_138, %c0_139] : memref<216x512xbf16, #tpu.memory_space<vmem>>, vector<8x512xbf16>
    tpu.vector_store %arg11[%c0_138, %c0_139], %182 {strides = array<i32>} : memref<216x512xbf16, #tpu.memory_space<vmem>>, vector<8x512xbf16>,
    %c0_140 = arith.constant 0 : index
    %c56_141 = arith.constant 56 : index
    %184 = vector.load %arg10[%c0_140, %c56_141] : memref<8x768xbf16, #tpu.memory_space<vmem>>, vector<8x512xbf16>
    %c1_142 = arith.constant 1 : index
    %c0_143 = arith.constant 0 : index
    %185 = vector.load %arg8[%c1_142, %c0_143] : memref<27x512xbf16, #tpu.memory_space<vmem>>, vector<1x512xbf16>
    %186 = vector.broadcast %185 : vector<1x512xbf16> to vector<8x512xbf16>
    %187 = arith.mulf %184, %186 : vector<8x512xbf16>
    %c8_144 = arith.constant 8 : index
    %c0_145 = arith.constant 0 : index
    %188 = vector.load %arg11[%c8_144, %c0_145] : memref<216x512xbf16, #tpu.memory_space<vmem>>, vector<8x512xbf16>
    tpu.vector_store %arg11[%c8_144, %c0_145], %187 {strides = array<i32>} : memref<216x512xbf16, #tpu.memory_space<vmem>>, vector<8x512xbf16>,
    %c0_146 = arith.constant 0 : index
    %c57_147 = arith.constant 57 : index
    %189 = vector.load %arg10[%c0_146, %c57_147] : memref<8x768xbf16, #tpu.memory_space<vmem>>, vector<8x512xbf16>
    %c2_148 = arith.constant 2 : index
    %c0_149 = arith.constant 0 : index
    %190 = vector.load %arg8[%c2_148, %c0_149] : memref<27x512xbf16, #tpu.memory_space<vmem>>, vector<1x512xbf16>
    %191 = vector.broadcast %190 : vector<1x512xbf16> to vector<8x512xbf16>
    %192 = arith.mulf %189, %191 : vector<8x512xbf16>
    %c16_150 = arith.constant 16 : index
    %c0_151 = arith.constant 0 : index
    %193 = vector.load %arg11[%c16_150, %c0_151] : memref<216x512xbf16, #tpu.memory_space<vmem>>, vector<8x512xbf16>
    tpu.vector_store %arg11[%c16_150, %c0_151], %192 {strides = array<i32>} : memref<216x512xbf16, #tpu.memory_space<vmem>>, vector<8x512xbf16>,
    %c0_152 = arith.constant 0 : index
    %c63_153 = arith.constant 63 : index
    %194 = vector.load %arg10[%c0_152, %c63_153] : memref<8x768xbf16, #tpu.memory_space<vmem>>, vector<8x512xbf16>
    %c3_154 = arith.constant 3 : index
    %c0_155 = arith.constant 0 : index
    %195 = vector.load %arg8[%c3_154, %c0_155] : memref<27x512xbf16, #tpu.memory_space<vmem>>, vector<1x512xbf16>
    %196 = vector.broadcast %195 : vector<1x512xbf16> to vector<8x512xbf16>
    %197 = arith.mulf %194, %196 : vector<8x512xbf16>
    %c24_156 = arith.constant 24 : index
    %c0_157 = arith.constant 0 : index
    %198 = vector.load %arg11[%c24_156, %c0_157] : memref<216x512xbf16, #tpu.memory_space<vmem>>, vector<8x512xbf16>
    tpu.vector_store %arg11[%c24_156, %c0_157], %197 {strides = array<i32>} : memref<216x512xbf16, #tpu.memory_space<vmem>>, vector<8x512xbf16>,
    %c0_158 = arith.constant 0 : index
    %c64_159 = arith.constant 64 : index
    %199 = vector.load %arg10[%c0_158, %c64_159] : memref<8x768xbf16, #tpu.memory_space<vmem>>, vector<8x512xbf16>
    %c4_160 = arith.constant 4 : index
    %c0_161 = arith.constant 0 : index
    %200 = vector.load %arg8[%c4_160, %c0_161] : memref<27x512xbf16, #tpu.memory_space<vmem>>, vector<1x512xbf16>
    %201 = vector.broadcast %200 : vector<1x512xbf16> to vector<8x512xbf16>
    %202 = arith.mulf %199, %201 : vector<8x512xbf16>
    %c32_162 = arith.constant 32 : index
    %c0_163 = arith.constant 0 : index
    %203 = vector.load %arg11[%c32_162, %c0_163] : memref<216x512xbf16, #tpu.memory_space<vmem>>, vector<8x512xbf16>
    tpu.vector_store %arg11[%c32_162, %c0_163], %202 {strides = array<i32>} : memref<216x512xbf16, #tpu.memory_space<vmem>>, vector<8x512xbf16>,
    %c0_164 = arith.constant 0 : index
    %c65_165 = arith.constant 65 : index
    %204 = vector.load %arg10[%c0_164, %c65_165] : memref<8x768xbf16, #tpu.memory_space<vmem>>, vector<8x512xbf16>
    %c5_166 = arith.constant 5 : index
    %c0_167 = arith.constant 0 : index
    %205 = vector.load %arg8[%c5_166, %c0_167] : memref<27x512xbf16, #tpu.memory_space<vmem>>, vector<1x512xbf16>
    %206 = vector.broadcast %205 : vector<1x512xbf16> to vector<8x512xbf16>
    %207 = arith.mulf %204, %206 : vector<8x512xbf16>
    %c40_168 = arith.constant 40 : index
    %c0_169 = arith.constant 0 : index
    %208 = vector.load %arg11[%c40_168, %c0_169] : memref<216x512xbf16, #tpu.memory_space<vmem>>, vector<8x512xbf16>
    tpu.vector_store %arg11[%c40_168, %c0_169], %207 {strides = array<i32>} : memref<216x512xbf16, #tpu.memory_space<vmem>>, vector<8x512xbf16>,
    %c0_170 = arith.constant 0 : index
    %c71_171 = arith.constant 71 : index
    %209 = vector.load %arg10[%c0_170, %c71_171] : memref<8x768xbf16, #tpu.memory_space<vmem>>, vector<8x512xbf16>
    %c6_172 = arith.constant 6 : index
    %c0_173 = arith.constant 0 : index
    %210 = vector.load %arg8[%c6_172, %c0_173] : memref<27x512xbf16, #tpu.memory_space<vmem>>, vector<1x512xbf16>
    %211 = vector.broadcast %210 : vector<1x512xbf16> to vector<8x512xbf16>
    %212 = arith.mulf %209, %211 : vector<8x512xbf16>
    %c48_174 = arith.constant 48 : index
    %c0_175 = arith.constant 0 : index
    %213 = vector.load %arg11[%c48_174, %c0_175] : memref<216x512xbf16, #tpu.memory_space<vmem>>, vector<8x512xbf16>
    tpu.vector_store %arg11[%c48_174, %c0_175], %212 {strides = array<i32>} : memref<216x512xbf16, #tpu.memory_space<vmem>>, vector<8x512xbf16>,
    %c0_176 = arith.constant 0 : index
    %c72_177 = arith.constant 72 : index
    %214 = vector.load %arg10[%c0_176, %c72_177] : memref<8x768xbf16, #tpu.memory_space<vmem>>, vector<8x512xbf16>
    %c7_178 = arith.constant 7 : index
    %c0_179 = arith.constant 0 : index
    %215 = vector.load %arg8[%c7_178, %c0_179] : memref<27x512xbf16, #tpu.memory_space<vmem>>, vector<1x512xbf16>
    %216 = vector.broadcast %215 : vector<1x512xbf16> to vector<8x512xbf16>
    %217 = arith.mulf %214, %216 : vector<8x512xbf16>
    %c56_180 = arith.constant 56 : index
    %c0_181 = arith.constant 0 : index
    %218 = vector.load %arg11[%c56_180, %c0_181] : memref<216x512xbf16, #tpu.memory_space<vmem>>, vector<8x512xbf16>
    tpu.vector_store %arg11[%c56_180, %c0_181], %217 {strides = array<i32>} : memref<216x512xbf16, #tpu.memory_space<vmem>>, vector<8x512xbf16>,
    %c0_182 = arith.constant 0 : index
    %c73_183 = arith.constant 73 : index
    %219 = vector.load %arg10[%c0_182, %c73_183] : memref<8x768xbf16, #tpu.memory_space<vmem>>, vector<8x512xbf16>
    %c8_184 = arith.constant 8 : index
    %c0_185 = arith.constant 0 : index
    %220 = vector.load %arg8[%c8_184, %c0_185] : memref<27x512xbf16, #tpu.memory_space<vmem>>, vector<1x512xbf16>
    %221 = vector.broadcast %220 : vector<1x512xbf16> to vector<8x512xbf16>
    %222 = arith.mulf %219, %221 : vector<8x512xbf16>
    %c64_186 = arith.constant 64 : index
    %c0_187 = arith.constant 0 : index
    %223 = vector.load %arg11[%c64_186, %c0_187] : memref<216x512xbf16, #tpu.memory_space<vmem>>, vector<8x512xbf16>
    tpu.vector_store %arg11[%c64_186, %c0_187], %222 {strides = array<i32>} : memref<216x512xbf16, #tpu.memory_space<vmem>>, vector<8x512xbf16>,
    %c0_188 = arith.constant 0 : index
    %c119_189 = arith.constant 119 : index
    %224 = vector.load %arg10[%c0_188, %c119_189] : memref<8x768xbf16, #tpu.memory_space<vmem>>, vector<8x512xbf16>
    %c9_190 = arith.constant 9 : index
    %c0_191 = arith.constant 0 : index
    %225 = vector.load %arg8[%c9_190, %c0_191] : memref<27x512xbf16, #tpu.memory_space<vmem>>, vector<1x512xbf16>
    %226 = vector.broadcast %225 : vector<1x512xbf16> to vector<8x512xbf16>
    %227 = arith.mulf %224, %226 : vector<8x512xbf16>
    %c72_192 = arith.constant 72 : index
    %c0_193 = arith.constant 0 : index
    %228 = vector.load %arg11[%c72_192, %c0_193] : memref<216x512xbf16, #tpu.memory_space<vmem>>, vector<8x512xbf16>
    tpu.vector_store %arg11[%c72_192, %c0_193], %227 {strides = array<i32>} : memref<216x512xbf16, #tpu.memory_space<vmem>>, vector<8x512xbf16>,
    %c0_194 = arith.constant 0 : index
    %c120_195 = arith.constant 120 : index
    %229 = vector.load %arg10[%c0_194, %c120_195] : memref<8x768xbf16, #tpu.memory_space<vmem>>, vector<8x512xbf16>
    %c10_196 = arith.constant 10 : index
    %c0_197 = arith.constant 0 : index
    %230 = vector.load %arg8[%c10_196, %c0_197] : memref<27x512xbf16, #tpu.memory_space<vmem>>, vector<1x512xbf16>
    %231 = vector.broadcast %230 : vector<1x512xbf16> to vector<8x512xbf16>
    %232 = arith.mulf %229, %231 : vector<8x512xbf16>
    %c80_198 = arith.constant 80 : index
    %c0_199 = arith.constant 0 : index
    %233 = vector.load %arg11[%c80_198, %c0_199] : memref<216x512xbf16, #tpu.memory_space<vmem>>, vector<8x512xbf16>
    tpu.vector_store %arg11[%c80_198, %c0_199], %232 {strides = array<i32>} : memref<216x512xbf16, #tpu.memory_space<vmem>>, vector<8x512xbf16>,
    %c0_200 = arith.constant 0 : index
    %c121_201 = arith.constant 121 : index
    %234 = vector.load %arg10[%c0_200, %c121_201] : memref<8x768xbf16, #tpu.memory_space<vmem>>, vector<8x512xbf16>
    %c11_202 = arith.constant 11 : index
    %c0_203 = arith.constant 0 : index
    %235 = vector.load %arg8[%c11_202, %c0_203] : memref<27x512xbf16, #tpu.memory_space<vmem>>, vector<1x512xbf16>
    %236 = vector.broadcast %235 : vector<1x512xbf16> to vector<8x512xbf16>
    %237 = arith.mulf %234, %236 : vector<8x512xbf16>
    %c88_204 = arith.constant 88 : index
    %c0_205 = arith.constant 0 : index
    %238 = vector.load %arg11[%c88_204, %c0_205] : memref<216x512xbf16, #tpu.memory_space<vmem>>, vector<8x512xbf16>
    tpu.vector_store %arg11[%c88_204, %c0_205], %237 {strides = array<i32>} : memref<216x512xbf16, #tpu.memory_space<vmem>>, vector<8x512xbf16>,
    %c0_206 = arith.constant 0 : index
    %c127_207 = arith.constant 127 : index
    %239 = vector.load %arg10[%c0_206, %c127_207] : memref<8x768xbf16, #tpu.memory_space<vmem>>, vector<8x512xbf16>
    %c12_208 = arith.constant 12 : index
    %c0_209 = arith.constant 0 : index
    %240 = vector.load %arg8[%c12_208, %c0_209] : memref<27x512xbf16, #tpu.memory_space<vmem>>, vector<1x512xbf16>
    %241 = vector.broadcast %240 : vector<1x512xbf16> to vector<8x512xbf16>
    %242 = arith.mulf %239, %241 : vector<8x512xbf16>
    %c96_210 = arith.constant 96 : index
    %c0_211 = arith.constant 0 : index
    %243 = vector.load %arg11[%c96_210, %c0_211] : memref<216x512xbf16, #tpu.memory_space<vmem>>, vector<8x512xbf16>
    tpu.vector_store %arg11[%c96_210, %c0_211], %242 {strides = array<i32>} : memref<216x512xbf16, #tpu.memory_space<vmem>>, vector<8x512xbf16>,
    %c0_212 = arith.constant 0 : index
    %c128_213 = arith.constant 128 : index
    %244 = vector.load %arg10[%c0_212, %c128_213] : memref<8x768xbf16, #tpu.memory_space<vmem>>, vector<8x512xbf16>
    %c13_214 = arith.constant 13 : index
    %c0_215 = arith.constant 0 : index
    %245 = vector.load %arg8[%c13_214, %c0_215] : memref<27x512xbf16, #tpu.memory_space<vmem>>, vector<1x512xbf16>
    %246 = vector.broadcast %245 : vector<1x512xbf16> to vector<8x512xbf16>
    %247 = arith.mulf %244, %246 : vector<8x512xbf16>
    %c104_216 = arith.constant 104 : index
    %c0_217 = arith.constant 0 : index
    %248 = vector.load %arg11[%c104_216, %c0_217] : memref<216x512xbf16, #tpu.memory_space<vmem>>, vector<8x512xbf16>
    tpu.vector_store %arg11[%c104_216, %c0_217], %247 {strides = array<i32>} : memref<216x512xbf16, #tpu.memory_space<vmem>>, vector<8x512xbf16>,
    %c0_218 = arith.constant 0 : index
    %c129_219 = arith.constant 129 : index
    %249 = vector.load %arg10[%c0_218, %c129_219] : memref<8x768xbf16, #tpu.memory_space<vmem>>, vector<8x512xbf16>
    %c14_220 = arith.constant 14 : index
    %c0_221 = arith.constant 0 : index
    %250 = vector.load %arg8[%c14_220, %c0_221] : memref<27x512xbf16, #tpu.memory_space<vmem>>, vector<1x512xbf16>
    %251 = vector.broadcast %250 : vector<1x512xbf16> to vector<8x512xbf16>
    %252 = arith.mulf %249, %251 : vector<8x512xbf16>
    %c112 = arith.constant 112 : index
    %c0_222 = arith.constant 0 : index
    %253 = vector.load %arg11[%c112, %c0_222] : memref<216x512xbf16, #tpu.memory_space<vmem>>, vector<8x512xbf16>
    tpu.vector_store %arg11[%c112, %c0_222], %252 {strides = array<i32>} : memref<216x512xbf16, #tpu.memory_space<vmem>>, vector<8x512xbf16>,
    %c0_223 = arith.constant 0 : index
    %c135_224 = arith.constant 135 : index
    %254 = vector.load %arg10[%c0_223, %c135_224] : memref<8x768xbf16, #tpu.memory_space<vmem>>, vector<8x512xbf16>
    %c15_225 = arith.constant 15 : index
    %c0_226 = arith.constant 0 : index
    %255 = vector.load %arg8[%c15_225, %c0_226] : memref<27x512xbf16, #tpu.memory_space<vmem>>, vector<1x512xbf16>
    %256 = vector.broadcast %255 : vector<1x512xbf16> to vector<8x512xbf16>
    %257 = arith.mulf %254, %256 : vector<8x512xbf16>
    %c120_227 = arith.constant 120 : index
    %c0_228 = arith.constant 0 : index
    %258 = vector.load %arg11[%c120_227, %c0_228] : memref<216x512xbf16, #tpu.memory_space<vmem>>, vector<8x512xbf16>
    tpu.vector_store %arg11[%c120_227, %c0_228], %257 {strides = array<i32>} : memref<216x512xbf16, #tpu.memory_space<vmem>>, vector<8x512xbf16>,
    %c0_229 = arith.constant 0 : index
    %c136_230 = arith.constant 136 : index
    %259 = vector.load %arg10[%c0_229, %c136_230] : memref<8x768xbf16, #tpu.memory_space<vmem>>, vector<8x512xbf16>
    %c16_231 = arith.constant 16 : index
    %c0_232 = arith.constant 0 : index
    %260 = vector.load %arg8[%c16_231, %c0_232] : memref<27x512xbf16, #tpu.memory_space<vmem>>, vector<1x512xbf16>
    %261 = vector.broadcast %260 : vector<1x512xbf16> to vector<8x512xbf16>
    %262 = arith.mulf %259, %261 : vector<8x512xbf16>
    %c128_233 = arith.constant 128 : index
    %c0_234 = arith.constant 0 : index
    %263 = vector.load %arg11[%c128_233, %c0_234] : memref<216x512xbf16, #tpu.memory_space<vmem>>, vector<8x512xbf16>
    tpu.vector_store %arg11[%c128_233, %c0_234], %262 {strides = array<i32>} : memref<216x512xbf16, #tpu.memory_space<vmem>>, vector<8x512xbf16>,
    %c0_235 = arith.constant 0 : index
    %c137_236 = arith.constant 137 : index
    %264 = vector.load %arg10[%c0_235, %c137_236] : memref<8x768xbf16, #tpu.memory_space<vmem>>, vector<8x512xbf16>
    %c17_237 = arith.constant 17 : index
    %c0_238 = arith.constant 0 : index
    %265 = vector.load %arg8[%c17_237, %c0_238] : memref<27x512xbf16, #tpu.memory_space<vmem>>, vector<1x512xbf16>
    %266 = vector.broadcast %265 : vector<1x512xbf16> to vector<8x512xbf16>
    %267 = arith.mulf %264, %266 : vector<8x512xbf16>
    %c136_239 = arith.constant 136 : index
    %c0_240 = arith.constant 0 : index
    %268 = vector.load %arg11[%c136_239, %c0_240] : memref<216x512xbf16, #tpu.memory_space<vmem>>, vector<8x512xbf16>
    tpu.vector_store %arg11[%c136_239, %c0_240], %267 {strides = array<i32>} : memref<216x512xbf16, #tpu.memory_space<vmem>>, vector<8x512xbf16>,
    %c0_241 = arith.constant 0 : index
    %c183_242 = arith.constant 183 : index
    %269 = vector.load %arg10[%c0_241, %c183_242] : memref<8x768xbf16, #tpu.memory_space<vmem>>, vector<8x512xbf16>
    %c18_243 = arith.constant 18 : index
    %c0_244 = arith.constant 0 : index
    %270 = vector.load %arg8[%c18_243, %c0_244] : memref<27x512xbf16, #tpu.memory_space<vmem>>, vector<1x512xbf16>
    %271 = vector.broadcast %270 : vector<1x512xbf16> to vector<8x512xbf16>
    %272 = arith.mulf %269, %271 : vector<8x512xbf16>
    %c144 = arith.constant 144 : index
    %c0_245 = arith.constant 0 : index
    %273 = vector.load %arg11[%c144, %c0_245] : memref<216x512xbf16, #tpu.memory_space<vmem>>, vector<8x512xbf16>
    tpu.vector_store %arg11[%c144, %c0_245], %272 {strides = array<i32>} : memref<216x512xbf16, #tpu.memory_space<vmem>>, vector<8x512xbf16>,
    %c0_246 = arith.constant 0 : index
    %c184_247 = arith.constant 184 : index
    %274 = vector.load %arg10[%c0_246, %c184_247] : memref<8x768xbf16, #tpu.memory_space<vmem>>, vector<8x512xbf16>
    %c19_248 = arith.constant 19 : index
    %c0_249 = arith.constant 0 : index
    %275 = vector.load %arg8[%c19_248, %c0_249] : memref<27x512xbf16, #tpu.memory_space<vmem>>, vector<1x512xbf16>
    %276 = vector.broadcast %275 : vector<1x512xbf16> to vector<8x512xbf16>
    %277 = arith.mulf %274, %276 : vector<8x512xbf16>
    %c152 = arith.constant 152 : index
    %c0_250 = arith.constant 0 : index
    %278 = vector.load %arg11[%c152, %c0_250] : memref<216x512xbf16, #tpu.memory_space<vmem>>, vector<8x512xbf16>
    tpu.vector_store %arg11[%c152, %c0_250], %277 {strides = array<i32>} : memref<216x512xbf16, #tpu.memory_space<vmem>>, vector<8x512xbf16>,
    %c0_251 = arith.constant 0 : index
    %c185_252 = arith.constant 185 : index
    %279 = vector.load %arg10[%c0_251, %c185_252] : memref<8x768xbf16, #tpu.memory_space<vmem>>, vector<8x512xbf16>
    %c20_253 = arith.constant 20 : index
    %c0_254 = arith.constant 0 : index
    %280 = vector.load %arg8[%c20_253, %c0_254] : memref<27x512xbf16, #tpu.memory_space<vmem>>, vector<1x512xbf16>
    %281 = vector.broadcast %280 : vector<1x512xbf16> to vector<8x512xbf16>
    %282 = arith.mulf %279, %281 : vector<8x512xbf16>
    %c160 = arith.constant 160 : index
    %c0_255 = arith.constant 0 : index
    %283 = vector.load %arg11[%c160, %c0_255] : memref<216x512xbf16, #tpu.memory_space<vmem>>, vector<8x512xbf16>
    tpu.vector_store %arg11[%c160, %c0_255], %282 {strides = array<i32>} : memref<216x512xbf16, #tpu.memory_space<vmem>>, vector<8x512xbf16>,
    %c0_256 = arith.constant 0 : index
    %c191_257 = arith.constant 191 : index
    %284 = vector.load %arg10[%c0_256, %c191_257] : memref<8x768xbf16, #tpu.memory_space<vmem>>, vector<8x512xbf16>
    %c21_258 = arith.constant 21 : index
    %c0_259 = arith.constant 0 : index
    %285 = vector.load %arg8[%c21_258, %c0_259] : memref<27x512xbf16, #tpu.memory_space<vmem>>, vector<1x512xbf16>
    %286 = vector.broadcast %285 : vector<1x512xbf16> to vector<8x512xbf16>
    %287 = arith.mulf %284, %286 : vector<8x512xbf16>
    %c168 = arith.constant 168 : index
    %c0_260 = arith.constant 0 : index
    %288 = vector.load %arg11[%c168, %c0_260] : memref<216x512xbf16, #tpu.memory_space<vmem>>, vector<8x512xbf16>
    tpu.vector_store %arg11[%c168, %c0_260], %287 {strides = array<i32>} : memref<216x512xbf16, #tpu.memory_space<vmem>>, vector<8x512xbf16>,
    %c0_261 = arith.constant 0 : index
    %c192_262 = arith.constant 192 : index
    %289 = vector.load %arg10[%c0_261, %c192_262] : memref<8x768xbf16, #tpu.memory_space<vmem>>, vector<8x512xbf16>
    %c22_263 = arith.constant 22 : index
    %c0_264 = arith.constant 0 : index
    %290 = vector.load %arg8[%c22_263, %c0_264] : memref<27x512xbf16, #tpu.memory_space<vmem>>, vector<1x512xbf16>
    %291 = vector.broadcast %290 : vector<1x512xbf16> to vector<8x512xbf16>
    %292 = arith.mulf %289, %291 : vector<8x512xbf16>
    %c176 = arith.constant 176 : index
    %c0_265 = arith.constant 0 : index
    %293 = vector.load %arg11[%c176, %c0_265] : memref<216x512xbf16, #tpu.memory_space<vmem>>, vector<8x512xbf16>
    tpu.vector_store %arg11[%c176, %c0_265], %292 {strides = array<i32>} : memref<216x512xbf16, #tpu.memory_space<vmem>>, vector<8x512xbf16>,
    %c0_266 = arith.constant 0 : index
    %c193_267 = arith.constant 193 : index
    %294 = vector.load %arg10[%c0_266, %c193_267] : memref<8x768xbf16, #tpu.memory_space<vmem>>, vector<8x512xbf16>
    %c23_268 = arith.constant 23 : index
    %c0_269 = arith.constant 0 : index
    %295 = vector.load %arg8[%c23_268, %c0_269] : memref<27x512xbf16, #tpu.memory_space<vmem>>, vector<1x512xbf16>
    %296 = vector.broadcast %295 : vector<1x512xbf16> to vector<8x512xbf16>
    %297 = arith.mulf %294, %296 : vector<8x512xbf16>
    %c184_270 = arith.constant 184 : index
    %c0_271 = arith.constant 0 : index
    %298 = vector.load %arg11[%c184_270, %c0_271] : memref<216x512xbf16, #tpu.memory_space<vmem>>, vector<8x512xbf16>
    tpu.vector_store %arg11[%c184_270, %c0_271], %297 {strides = array<i32>} : memref<216x512xbf16, #tpu.memory_space<vmem>>, vector<8x512xbf16>,
    %c0_272 = arith.constant 0 : index
    %c199_273 = arith.constant 199 : index
    %299 = vector.load %arg10[%c0_272, %c199_273] : memref<8x768xbf16, #tpu.memory_space<vmem>>, vector<8x512xbf16>
    %c24_274 = arith.constant 24 : index
    %c0_275 = arith.constant 0 : index
    %300 = vector.load %arg8[%c24_274, %c0_275] : memref<27x512xbf16, #tpu.memory_space<vmem>>, vector<1x512xbf16>
    %301 = vector.broadcast %300 : vector<1x512xbf16> to vector<8x512xbf16>
    %302 = arith.mulf %299, %301 : vector<8x512xbf16>
    %c192_276 = arith.constant 192 : index
    %c0_277 = arith.constant 0 : index
    %303 = vector.load %arg11[%c192_276, %c0_277] : memref<216x512xbf16, #tpu.memory_space<vmem>>, vector<8x512xbf16>
    tpu.vector_store %arg11[%c192_276, %c0_277], %302 {strides = array<i32>} : memref<216x512xbf16, #tpu.memory_space<vmem>>, vector<8x512xbf16>,
    %c0_278 = arith.constant 0 : index
    %c200_279 = arith.constant 200 : index
    %304 = vector.load %arg10[%c0_278, %c200_279] : memref<8x768xbf16, #tpu.memory_space<vmem>>, vector<8x512xbf16>
    %c25_280 = arith.constant 25 : index
    %c0_281 = arith.constant 0 : index
    %305 = vector.load %arg8[%c25_280, %c0_281] : memref<27x512xbf16, #tpu.memory_space<vmem>>, vector<1x512xbf16>
    %306 = vector.broadcast %305 : vector<1x512xbf16> to vector<8x512xbf16>
    %307 = arith.mulf %304, %306 : vector<8x512xbf16>
    %c200_282 = arith.constant 200 : index
    %c0_283 = arith.constant 0 : index
    %308 = vector.load %arg11[%c200_282, %c0_283] : memref<216x512xbf16, #tpu.memory_space<vmem>>, vector<8x512xbf16>
    tpu.vector_store %arg11[%c200_282, %c0_283], %307 {strides = array<i32>} : memref<216x512xbf16, #tpu.memory_space<vmem>>, vector<8x512xbf16>,
    %c0_284 = arith.constant 0 : index
    %c201_285 = arith.constant 201 : index
    %309 = vector.load %arg10[%c0_284, %c201_285] : memref<8x768xbf16, #tpu.memory_space<vmem>>, vector<8x512xbf16>
    %c26_286 = arith.constant 26 : index
    %c0_287 = arith.constant 0 : index
    %310 = vector.load %arg8[%c26_286, %c0_287] : memref<27x512xbf16, #tpu.memory_space<vmem>>, vector<1x512xbf16>
    %311 = vector.broadcast %310 : vector<1x512xbf16> to vector<8x512xbf16>
    %312 = arith.mulf %309, %311 : vector<8x512xbf16>
    %c208 = arith.constant 208 : index
    %c0_288 = arith.constant 0 : index
    %313 = vector.load %arg11[%c208, %c0_288] : memref<216x512xbf16, #tpu.memory_space<vmem>>, vector<8x512xbf16>
    tpu.vector_store %arg11[%c208, %c0_288], %312 {strides = array<i32>} : memref<216x512xbf16, #tpu.memory_space<vmem>>, vector<8x512xbf16>,
    %c0_289 = arith.constant 0 : index
    %c0_290 = arith.constant 0 : index
    %314 = vector.load %arg5[%c0_289, %c0_290] : memref<8x216xbf16, #tpu.memory_space<vmem>>, vector<8x216xbf16>
    %c0_291 = arith.constant 0 : index
    %c0_292 = arith.constant 0 : index
    %315 = vector.load %arg11[%c0_291, %c0_292] : memref<216x512xbf16, #tpu.memory_space<vmem>>, vector<216x512xbf16>
    %cst_293 = arith.constant dense<0.000000e+00> : vector<8x512xf32>
    %316 = tpu.matmul %314, %315, %cst_293 {dimension_numbers = #tpu.dot_dimension_numbers<[1], [0], [0], [1], [0, 0, 1, 1], [], []>} : vector<8x216xbf16>, vector<216x512xbf16>, vector<8x512xf32> -> vector<8x512xf32>
    %c0_294 = arith.constant 0 : index
    %c0_295 = arith.constant 0 : index
    %317 = vector.load %arg6[%c0_294, %c0_295] : memref<8x1xf32, #tpu.memory_space<vmem>>, vector<8x1xf32>
    %318 = vector.broadcast %317 : vector<8x1xf32> to vector<8x512xf32>
    %319 = arith.mulf %316, %318 : vector<8x512xf32>
    %c0_296 = arith.constant 0 : index
    %c0_297 = arith.constant 0 : index
    %320 = vector.load %arg7[%c0_296, %c0_297] : memref<8x1xf32, #tpu.memory_space<vmem>>, vector<8x1xf32>
    %321 = vector.broadcast %320 : vector<8x1xf32> to vector<8x512xf32>
    %322 = arith.addf %319, %321 : vector<8x512xf32>
    %cst_298 = arith.constant 0.000000e+00 : f32
    %323 = vector.broadcast %cst_298 : f32 to vector<8x512xf32>
    %324 = arith.maximumf %322, %323 : vector<8x512xf32>
    %325 = arith.addf %324, %172 : vector<8x512xf32>
    %c0_299 = arith.constant 0 : index
    %c0_300 = arith.constant 0 : index
    %c0_301 = arith.constant 0 : index
    %326 = vector.load %arg9[%c0_299, %c0_300, %c0_301] : memref<1x8x512xf32, #tpu.memory_space<vmem>>, vector<1x8x512xf32>
    %327 = vector.shape_cast %326 : vector<1x8x512xf32> to vector<8x512xf32>
    %328 = vector.shape_cast %325 : vector<8x512xf32> to vector<1x8x512xf32>
    tpu.vector_store %arg9[%c0_299, %c0_300, %c0_301], %328 {strides = array<i32>} : memref<1x8x512xf32, #tpu.memory_space<vmem>>, vector<1x8x512xf32>,
    return
  }
  func.func @transform_0(%arg0: i32) -> (i32, i32, i32) {
    %c0_i32 = arith.constant 0 : i32
    %c0_i32_0 = arith.constant 0 : i32
    %c0_i32_1 = arith.constant 0 : i32
    return %arg0, %c0_i32, %c0_i32_0 : i32, i32, i32
  }
  func.func @transform_1(%arg0: i32) -> (i32, i32) {
    %c0_i32 = arith.constant 0 : i32
    %c0_i32_0 = arith.constant 0 : i32
    %c0_i32_1 = arith.constant 0 : i32
    return %c0_i32, %c0_i32_0 : i32, i32
  }
  func.func @transform_2(%arg0: i32) -> (i32, i32) {
    %c0_i32 = arith.constant 0 : i32
    %c0_i32_0 = arith.constant 0 : i32
    %c0_i32_1 = arith.constant 0 : i32
    return %c0_i32, %c0_i32_0 : i32, i32
  }
  func.func @transform_3(%arg0: i32) -> (i32, i32) {
    %c0_i32 = arith.constant 0 : i32
    %c0_i32_0 = arith.constant 0 : i32
    %c0_i32_1 = arith.constant 0 : i32
    return %c0_i32, %c0_i32_0 : i32, i32
  }
  func.func @transform_4(%arg0: i32) -> (i32, i32) {
    %c0_i32 = arith.constant 0 : i32
    %c0_i32_0 = arith.constant 0 : i32
    %c0_i32_1 = arith.constant 0 : i32
    return %c0_i32, %c0_i32_0 : i32, i32
  }
  func.func @transform_5(%arg0: i32) -> (i32, i32) {
    %c0_i32 = arith.constant 0 : i32
    %c0_i32_0 = arith.constant 0 : i32
    %c0_i32_1 = arith.constant 0 : i32
    return %c0_i32, %c0_i32_0 : i32, i32
  }
  func.func @transform_6(%arg0: i32) -> (i32, i32) {
    %c0_i32 = arith.constant 0 : i32
    %c0_i32_0 = arith.constant 0 : i32
    %c0_i32_1 = arith.constant 0 : i32
    return %c0_i32, %c0_i32_0 : i32, i32
  }
  func.func @transform_7(%arg0: i32) -> (i32, i32) {
    %c0_i32 = arith.constant 0 : i32
    %c0_i32_0 = arith.constant 0 : i32
    %c0_i32_1 = arith.constant 0 : i32
    return %c0_i32, %c0_i32_0 : i32, i32
  }
  func.func @transform_8(%arg0: i32) -> (i32, i32, i32) {
    %c0_i32 = arith.constant 0 : i32
    %c0_i32_0 = arith.constant 0 : i32
    %c0_i32_1 = arith.constant 0 : i32
    return %arg0, %c0_i32, %c0_i32_0 : i32, i32, i32
  }
}

</mosaic_0001>

<llo_original>
// kernel: down_forward.1
$region0: #{down_forward.1}
  #allocation0 [shape = 'u32[]', space=smem, size = 0x4, offset = 0x4, fixed_abs, tag = 'smem constant byte address 0x4 - core index']
  #allocation1 [shape = 'u32[144,128]{1,0:T(1,128)}', space=vmem, size = 0x12000, scoped, tag = 'internal scratch']
  #allocation2 [shape = 'bf16[8,768]{1,0:T(8,128)(2,1)}', space=vmem, size = 0x3000, scoped, tag = 'scratch operand']
  #allocation3 [shape = 'bf16[216,512]{1,0:T(8,128)(2,1)}', space=vmem, size = 0x36000, scoped, tag = 'scratch operand']
  %s0 = inlined_call_operand.vmem [shape: bf16[2,4,768], index: 0, kind: input, shape index: {}]
  %s1 = inlined_call_operand.vmem [shape: bf16[8,108], index: 1, kind: input, shape index: {}]
  %s2 = inlined_call_operand.vmem [shape: f32[8,1], index: 2, kind: input, shape index: {}]
  %s3 = inlined_call_operand.vmem [shape: f32[8,1], index: 3, kind: input, shape index: {}]
  %s4 = inlined_call_operand.vmem [shape: bf16[8,216], index: 4, kind: input, shape index: {}]
  %s5 = inlined_call_operand.vmem [shape: f32[8,1], index: 5, kind: input, shape index: {}]
  %s6 = inlined_call_operand.vmem [shape: f32[8,1], index: 6, kind: input, shape index: {}]
  %s7 = inlined_call_operand.vmem [shape: bf16[27,512], index: 7, kind: input, shape index: {}]
  %s8 = inlined_call_operand.vmem [shape: f32[2,8,512], index: 8, kind: output, shape index: {}]
  %s9 = sld [smem:[#allocation0]]
  $region65: #{down_forward.1} parent=0
    _
  %s11 = ssub.s32 1, %s9
  %s12 = scalar_select 0, %s11, %s9
  loop: start=0, step=1, limit=4
  $region2: #{down_forward.1} parent=0 // loop_pre_header
    _
  $region3: #{down_forward.1} parent=0 // loop_header
    %s14 = sphi 0, %s18
    %p15 = scmp.ge.s32.totalorder %s14, 4
    %s24 = sphi 0, %s26
    %s27 = sphi 0, %s24
    %s28 = sphi 0, %s27
    %s44 = sphi 0, %s28
    %s48 = sphi 0, %s48
    %s50 = sphi 0, %s48
    %s51 = sphi 0, %s50
    %s65 = sphi 0, %s51
    %s69 = sphi 0, %s69
    %s71 = sphi 0, %s69
    %s72 = sphi 0, %s71
    %s86 = sphi 0, %s72
    %s90 = sphi 0, %s90
    %s92 = sphi 0, %s90
    %s93 = sphi 0, %s92
    %s107 = sphi 0, %s93
    %s111 = sphi 0, %s111
    %s113 = sphi 0, %s111
    %s114 = sphi 0, %s113
    %s128 = sphi 0, %s114
    %s132 = sphi 0, %s132
    %s134 = sphi 0, %s132
    %s135 = sphi 0, %s134
    %s149 = sphi 0, %s135
    %s153 = sphi 0, %s153
    %s155 = sphi 0, %s153
    %s156 = sphi 0, %s155
    %s170 = sphi 0, %s156
    %s174 = sphi 0, %s174
    %s176 = sphi 0, %s174
    %s177 = sphi 0, %s176
    %s191 = sphi 0, %s177
    %s197 = sphi 0, %s199
    %s200 = sphi 0, %s197
    %s201 = sphi 0, %s200
    %s217 = sphi 0, %s201
  $region4: #{down_forward.1} parent=0 // loop_header_branch
    %17 = sbr.rel (%p15) target = $region8
  $region5: #{down_forward.1} parent=0 // loop_body
    %s19 = ssub.s32 %s14, 1
    %s20 = ssub.s32 %s14, 2
    %s21 = sadd.s32 %s14, 1
    %s22 = ssub.s32 %s14, %s21
    %p23 = scmp.eq.s32.totalorder %s22, 0
    %s25 = sadd.s32 %s24, 1
    %s26 = scalar_select %p23, %s24, %s25
    %p29 = pneg %p23
    %p30 = scmp.eq.s32.totalorder %s14, 1
    %p31 = por %p29, %p30
    %p32 = scmp.ne.s32.totalorder %s24, %s27
    %p33 = scmp.eq.s32.totalorder %s14, 0
    %p34 = por %p32, %p33
    %p35 = scmp.ne.s32.totalorder %s24, %s27
    %p36 = scmp.eq.s32.totalorder %s19, 1
    %p37 = por %p35, %p36
    %p38 = scmp.ne.s32.totalorder %s27, %s28
    %p39 = scmp.eq.s32.totalorder %s19, 0
    %p40 = por %p38, %p39
    %p41 = scmp.ne.s32.totalorder %s27, %s28
    %p42 = scmp.eq.s32.totalorder %s20, 1
    %p43 = por %p41, %p42
    %p45 = scmp.ne.s32.totalorder %s28, %s44
    %p46 = scmp.eq.s32.totalorder %s20, 0
    %p47 = por %p45, %p46
    %s49 = sadd.s32 %s48, 1
    %p52 = scmp.eq.s32.totalorder %s14, 1
    %p53 = scmp.ne.s32.totalorder %s48, %s50
    %p54 = scmp.eq.s32.totalorder %s14, 0
    %p55 = por %p53, %p54
    %p56 = scmp.ne.s32.totalorder %s48, %s50
    %p57 = scmp.eq.s32.totalorder %s19, 1
    %p58 = por %p56, %p57
    %p59 = scmp.ne.s32.totalorder %s50, %s51
    %p60 = scmp.eq.s32.totalorder %s19, 0
    %p61 = por %p59, %p60
    %p62 = scmp.ne.s32.totalorder %s50, %s51
    %p63 = scmp.eq.s32.totalorder %s20, 1
    %p64 = por %p62, %p63
    %p66 = scmp.ne.s32.totalorder %s51, %s65
    %p67 = scmp.eq.s32.totalorder %s20, 0
    %p68 = por %p66, %p67
    %s70 = sadd.s32 %s69, 1
    %p73 = scmp.eq.s32.totalorder %s14, 1
    %p74 = scmp.ne.s32.totalorder %s69, %s71
    %p75 = scmp.eq.s32.totalorder %s14, 0
    %p76 = por %p74, %p75
    %p77 = scmp.ne.s32.totalorder %s69, %s71
    %p78 = scmp.eq.s32.totalorder %s19, 1
    %p79 = por %p77, %p78
    %p80 = scmp.ne.s32.totalorder %s71, %s72
    %p81 = scmp.eq.s32.totalorder %s19, 0
    %p82 = por %p80, %p81
    %p83 = scmp.ne.s32.totalorder %s71, %s72
    %p84 = scmp.eq.s32.totalorder %s20, 1
    %p85 = por %p83, %p84
    %p87 = scmp.ne.s32.totalorder %s72, %s86
    %p88 = scmp.eq.s32.totalorder %s20, 0
    %p89 = por %p87, %p88
    %s91 = sadd.s32 %s90, 1
    %p94 = scmp.eq.s32.totalorder %s14, 1
    %p95 = scmp.ne.s32.totalorder %s90, %s92
    %p96 = scmp.eq.s32.totalorder %s14, 0
    %p97 = por %p95, %p96
    %p98 = scmp.ne.s32.totalorder %s90, %s92
    %p99 = scmp.eq.s32.totalorder %s19, 1
    %p100 = por %p98, %p99
    %p101 = scmp.ne.s32.totalorder %s92, %s93
    %p102 = scmp.eq.s32.totalorder %s19, 0
    %p103 = por %p101, %p102
    %p104 = scmp.ne.s32.totalorder %s92, %s93
    %p105 = scmp.eq.s32.totalorder %s20, 1
    %p106 = por %p104, %p105
    %p108 = scmp.ne.s32.totalorder %s93, %s107
    %p109 = scmp.eq.s32.totalorder %s20, 0
    %p110 = por %p108, %p109
    %s112 = sadd.s32 %s111, 1
    %p115 = scmp.eq.s32.totalorder %s14, 1
    %p116 = scmp.ne.s32.totalorder %s111, %s113
    %p117 = scmp.eq.s32.totalorder %s14, 0
    %p118 = por %p116, %p117
    %p119 = scmp.ne.s32.totalorder %s111, %s113
    %p120 = scmp.eq.s32.totalorder %s19, 1
    %p121 = por %p119, %p120
    %p122 = scmp.ne.s32.totalorder %s113, %s114
    %p123 = scmp.eq.s32.totalorder %s19, 0
    %p124 = por %p122, %p123
    %p125 = scmp.ne.s32.totalorder %s113, %s114
    %p126 = scmp.eq.s32.totalorder %s20, 1
    %p127 = por %p125, %p126
    %p129 = scmp.ne.s32.totalorder %s114, %s128
    %p130 = scmp.eq.s32.totalorder %s20, 0
    %p131 = por %p129, %p130
    %s133 = sadd.s32 %s132, 1
    %p136 = scmp.eq.s32.totalorder %s14, 1
    %p137 = scmp.ne.s32.totalorder %s132, %s134
    %p138 = scmp.eq.s32.totalorder %s14, 0
    %p139 = por %p137, %p138
    %p140 = scmp.ne.s32.totalorder %s132, %s134
    %p141 = scmp.eq.s32.totalorder %s19, 1
    %p142 = por %p140, %p141
    %p143 = scmp.ne.s32.totalorder %s134, %s135
    %p144 = scmp.eq.s32.totalorder %s19, 0
    %p145 = por %p143, %p144
    %p146 = scmp.ne.s32.totalorder %s134, %s135
    %p147 = scmp.eq.s32.totalorder %s20, 1
    %p148 = por %p146, %p147
    %p150 = scmp.ne.s32.totalorder %s135, %s149
    %p151 = scmp.eq.s32.totalorder %s20, 0
    %p152 = por %p150, %p151
    %s154 = sadd.s32 %s153, 1
    %p157 = scmp.eq.s32.totalorder %s14, 1
    %p158 = scmp.ne.s32.totalorder %s153, %s155
    %p159 = scmp.eq.s32.totalorder %s14, 0
    %p160 = por %p158, %p159
    %p161 = scmp.ne.s32.totalorder %s153, %s155
    %p162 = scmp.eq.s32.totalorder %s19, 1
    %p163 = por %p161, %p162
    %p164 = scmp.ne.s32.totalorder %s155, %s156
    %p165 = scmp.eq.s32.totalorder %s19, 0
    %p166 = por %p164, %p165
    %p167 = scmp.ne.s32.totalorder %s155, %s156
    %p168 = scmp.eq.s32.totalorder %s20, 1
    %p169 = por %p167, %p168
    %p171 = scmp.ne.s32.totalorder %s156, %s170
    %p172 = scmp.eq.s32.totalorder %s20, 0
    %p173 = por %p171, %p172
    %s175 = sadd.s32 %s174, 1
    %p178 = scmp.eq.s32.totalorder %s14, 1
    %p179 = scmp.ne.s32.totalorder %s174, %s176
    %p180 = scmp.eq.s32.totalorder %s14, 0
    %p181 = por %p179, %p180
    %p182 = scmp.ne.s32.totalorder %s174, %s176
    %p183 = scmp.eq.s32.totalorder %s19, 1
    %p184 = por %p182, %p183
    %p185 = scmp.ne.s32.totalorder %s176, %s177
    %p186 = scmp.eq.s32.totalorder %s19, 0
    %p187 = por %p185, %p186
    %p188 = scmp.ne.s32.totalorder %s176, %s177
    %p189 = scmp.eq.s32.totalorder %s20, 1
    %p190 = por %p188, %p189
    %p192 = scmp.ne.s32.totalorder %s177, %s191
    %p193 = scmp.eq.s32.totalorder %s20, 0
    %p194 = por %p192, %p193
    %s195 = ssub.s32 %s14, %s21
    %p196 = scmp.eq.s32.totalorder %s195, 0
    %s198 = sadd.s32 %s197, 1
    %s199 = scalar_select %p196, %s197, %s198
    %p202 = pneg %p196
    %p203 = scmp.eq.s32.totalorder %s14, 1
    %p204 = por %p202, %p203
    %p205 = scmp.ne.s32.totalorder %s197, %s200
    %p206 = scmp.eq.s32.totalorder %s14, 0
    %p207 = por %p205, %p206
    %p208 = scmp.ne.s32.totalorder %s197, %s200
    %p209 = scmp.eq.s32.totalorder %s19, 1
    %p210 = por %p208, %p209
    %p211 = scmp.ne.s32.totalorder %s200, %s201
    %p212 = scmp.eq.s32.totalorder %s19, 0
    %p213 = por %p211, %p212
    %p214 = scmp.ne.s32.totalorder %s200, %s201
    %p215 = scmp.eq.s32.totalorder %s20, 1
    %p216 = por %p214, %p215
    %p218 = scmp.ne.s32.totalorder %s201, %s217
    %p219 = scmp.eq.s32.totalorder %s20, 0
    %p220 = por %p218, %p219
    %p221 = scmp.le.s32.totalorder 1, %s14
    %p222 = scmp.lt.s32.totalorder %s14, 3
    %p223 = pnand %p221, %p222
    %p224 = pneg %p223
    // Predicated region
    $region9: #{down_forward.1} parent=5 // pred_check
      _
    $region10: #{down_forward.1} parent=5 // pred_check_branch
      %226 = sbr.rel (%p223) target = $region12
    $region11: #{down_forward.1} parent=5 // pred_region
      %s227 = ssub.s32 %s14, 1
      // Predicated region
      $region13: #{down_forward.1} parent=11 // pred_check
        %p228 = pneg %p61
      $region14: #{down_forward.1} parent=11 // pred_check_branch
        %230 = sbr.rel (%p228) target = $region16
      $region15: #{down_forward.1} parent=11 // pred_region
        _
      $region16: #{down_forward.1} parent=11 // pred_fallthru
        _
      // Predicated region
      $region17: #{down_forward.1} parent=11 // pred_check
        %p231 = pneg %p82
      $region18: #{down_forward.1} parent=11 // pred_check_branch
        %233 = sbr.rel (%p231) target = $region20
      $region19: #{down_forward.1} parent=11 // pred_region
        _
      $region20: #{down_forward.1} parent=11 // pred_fallthru
        _
      // Predicated region
      $region21: #{down_forward.1} parent=11 // pred_check
        %p234 = pneg %p103
      $region22: #{down_forward.1} parent=11 // pred_check_branch
        %236 = sbr.rel (%p234) target = $region24
      $region23: #{down_forward.1} parent=11 // pred_region
        _
      $region24: #{down_forward.1} parent=11 // pred_fallthru
        _
      // Predicated region
      $region25: #{down_forward.1} parent=11 // pred_check
        %p237 = pneg %p124
      $region26: #{down_forward.1} parent=11 // pred_check_branch
        %239 = sbr.rel (%p237) target = $region28
      $region27: #{down_forward.1} parent=11 // pred_region
        _
      $region28: #{down_forward.1} parent=11 // pred_fallthru
        _
      // Predicated region
      $region29: #{down_forward.1} parent=11 // pred_check
        %p240 = pneg %p145
      $region30: #{down_forward.1} parent=11 // pred_check_branch
        %242 = sbr.rel (%p240) target = $region32
      $region31: #{down_forward.1} parent=11 // pred_region
        _
      $region32: #{down_forward.1} parent=11 // pred_fallthru
        _
      // Predicated region
      $region33: #{down_forward.1} parent=11 // pred_check
        %p243 = pneg %p166
      $region34: #{down_forward.1} parent=11 // pred_check_branch
        %245 = sbr.rel (%p243) target = $region36
      $region35: #{down_forward.1} parent=11 // pred_region
        _
      $region36: #{down_forward.1} parent=11 // pred_fallthru
        _
      // Predicated region
      $region37: #{down_forward.1} parent=11 // pred_check
        %p246 = pneg %p187
      $region38: #{down_forward.1} parent=11 // pred_check_branch
        %248 = sbr.rel (%p246) target = $region40
      $region39: #{down_forward.1} parent=11 // pred_region
        _
      $region40: #{down_forward.1} parent=11 // pred_fallthru
        _
    $region12: #{down_forward.1} parent=5 // pred_fallthru
      _
    %p249 = scmp.lt.s32.totalorder %s14, 2
    // Predicated region
    $region41: #{down_forward.1} parent=5 // pred_check
      %p250 = pneg %p249
    $region42: #{down_forward.1} parent=5 // pred_check_branch
      %252 = sbr.rel (%p250) target = $region44
    $region43: #{down_forward.1} parent=5 // pred_region
      // Predicated region
      $region45: #{down_forward.1} parent=43 // pred_check
        %p253 = pneg %p34
      $region46: #{down_forward.1} parent=43 // pred_check_branch
        %255 = sbr.rel (%p253) target = $region48
      $region47: #{down_forward.1} parent=43 // pred_region
        %p256 = scmp.lt.s32.totalorder %s14, 1
        %s257 = scalar_select %p256, %s14, 1
        %s258 = smul.addr %s257, 6
        %s259 = smul.addr %s258, 2
        %s260 = scalar_lea.vmem %s0, %s259
      $region48: #{down_forward.1} parent=43 // pred_fallthru
        _
    $region44: #{down_forward.1} parent=5 // pred_fallthru
      _
    %p261 = scmp.le.s32.totalorder 1, %s14
    %p262 = scmp.lt.s32.totalorder %s14, 3
    %p263 = pnand %p261, %p262
    %p264 = pneg %p263
    // Predicated region
    $region49: #{down_forward.1} parent=5 // pred_check
      _
    $region50: #{down_forward.1} parent=5 // pred_check_branch
      %266 = sbr.rel (%p263) target = $region52
    $region51: #{down_forward.1} parent=5 // pred_region
      %s267 = ssub.s32 %s14, 1
      %p268 = scmp.lt.s32.totalorder %s19, 1
      %s269 = scalar_select %p268, %s19, 1
      %s270 = smul.addr %s269, 6
      %s271 = smul.addr %s270, 2
      %s272 = scalar_lea.vmem %s0, %s271
      %p273 = pneg %p40
      %p274 = pneg %p37
      %p275 = pneg %p61
      %p276 = pneg %p58
      %p277 = pneg %p82
      %p278 = pneg %p79
      %p279 = pneg %p103
      %p280 = pneg %p100
      %p281 = pneg %p124
      %p282 = pneg %p121
      %p283 = pneg %p145
      %p284 = pneg %p142
      %p285 = pneg %p166
      %p286 = pneg %p163
      %p287 = pneg %p187
      %p288 = pneg %p184
      %p289 = pneg %p213
      %p290 = pneg %p210
      %p291 = scmp.lt.s32.totalorder %s19, 1
      %s292 = scalar_select %p291, %s19, 1
      %s293 = smul.addr %s292, 4
      %s294 = smul.addr %s293, 8
      %s295 = scalar_lea.vmem %s8, %s294
      %p296 = scmp.lt.s32.totalorder %s19, 1
      %s297 = scalar_select %p296, %s19, 1
      %s298 = smul.addr %s297, 6
      %s299 = smul.addr %s298, 2
      %s300 = scalar_lea.vmem %s0, %s299
      %p301 = scmp.lt.s32.totalorder %s19, 1
      %s302 = scalar_select %p301, %s19, 1
      %s303 = smul.addr %s302, 4
      %s304 = smul.addr %s303, 8
      %s305 = scalar_lea.vmem %s8, %s304
      %v307 = vld [vmem:[%s300] sm:$0xff]
      %v308 = vld [vmem:[%s300 + $0x8] sm:$0x3]
      %v309 = vld [vmem:[%s7] sm:$0x11]
      %v310 = vld [vmem:[%s7 + $0x8] sm:$0x11]
      %v313 = vunpack.c.l.b16 %v309
      %v314 = vunpack.c.h.b16 %v309
      %v315 = vunpack.c.l.b16 %v310
      %v316 = vunpack.c.h.b16 %v310
      %v317 = vpack.c.b16 %v313, %v313
      %v318 = vpack.c.b16 %v314, %v314
      %v319 = vpack.c.b16 %v315, %v315
      %v320 = vpack.c.b16 %v316, %v316
      %v322 = vpack.i.b16 %v317, %v317
      %v324 = vlaneseq
      %v325 = vshrl.u32 %v324, 7
      %v326 = vsub.s32 0, %v325
      %v327 = vrot.slane %v322, %v326
      %v329 = vpack.i.b16 %v318, %v318
      %v331 = vlaneseq
      %v332 = vshrl.u32 %v331, 7
      %v333 = vsub.s32 0, %v332
      %v334 = vrot.slane %v329, %v333
      %v336 = vpack.i.b16 %v319, %v319
      %v338 = vlaneseq
      %v339 = vshrl.u32 %v338, 7
      %v340 = vsub.s32 0, %v339
      %v341 = vrot.slane %v336, %v340
      %v343 = vpack.i.b16 %v320, %v320
      %v345 = vlaneseq
      %v346 = vshrl.u32 %v345, 7
      %v347 = vsub.s32 0, %v346
      %v348 = vrot.slane %v343, %v347
      %v353 = vcombine.low %v327, %v334
      %v354 = vcombine.low %v341, %v348
      %v356 = vunpack.c.l.s4 1983009808
      %v357 = vunpack.c.0.s8 %v356
      %v358 = vlaneseq
      %v359 = vshrl.u32 %v358, 7
      %v360 = vsub.s32 %v357, %v359
      %v361 = vrot.slane %v353, %v360
      %v363 = vunpack.c.l.s4 1983009808
      %v364 = vunpack.c.0.s8 %v363
      %v365 = vlaneseq
      %v366 = vshrl.u32 %v365, 7
      %v367 = vsub.s32 %v364, %v366
      %v368 = vrot.slane %v354, %v367
      %v369 = vcombine.low %v361, %v368
      %370 = vrot.lane.b32.xlu0 %v369, 55
      %v371 = vpop.permute.xlu0 %370
      %v372 = vrot.slane %v371, 6
      %vm373 = vcmask 449536
      %v374 = vsel %vm373, %v372, %v371
      %v377 = vmul.bf16 %v307, %v374
      %v378 = vmul.bf16 %v308, %v372
      %v381 = vcombine.high %v377, %v377
      %v383 = vunpack.c.l.s4 1983009808
      %v384 = vunpack.c.0.s8 %v383
      %v385 = vlaneseq
      %v386 = vshrl.u32 %v385, 7
      %v387 = vsub.s32 %v384, %v386
      %v388 = vrot.slane %v377, %v387
      %v390 = vunpack.c.l.s4 1983009808
      %v391 = vunpack.c.0.s8 %v390
      %v392 = vlaneseq
      %v393 = vshrl.u32 %v392, 7
      %v394 = vsub.s32 %v391, %v393
      %v395 = vrot.slane %v381, %v394
      %v397 = vunpack.c.l.s4 1983009808
      %v398 = vunpack.c.0.s8 %v397
      %v399 = vlaneseq
      %v400 = vshrl.u32 %v399, 7
      %v401 = vsub.s32 %v398, %v400
      %v402 = vrot.slane %v378, %v401
      %403 = vrot.lane.b32.xlu0 %v388, 73
      %v404 = vpop.permute.xlu0 %403
      %405 = vrot.lane.b32.xlu0 %v395, 73
      %v406 = vpop.permute.xlu0 %405
      %407 = vrot.lane.b32.xlu0 %v402, 73
      %v408 = vpop.permute.xlu0 %407
      %v409 = vrot.slane %v404, 4
      %v410 = vrot.slane %v406, 4
      %v411 = vrot.slane %v408, 4
      %vm412 = vcmask 1043456
      %v413 = vsel %vm412, %v409, %v410
      %vm414 = vcmask 596992
      %v415 = vsel %vm414, %v404, %v413
      %v416 = vsel %vm412, %v410, %v411
      %v417 = vsel %vm414, %v406, %v416
      %420 = vst [vmem:[#allocation3] sm:$0x33] %v415
      %421 = vst [vmem:[#allocation3 + $0x8] sm:$0x33] %v417
      %v422 = vld [vmem:[%s300] sm:$0xff]
      %v423 = vld [vmem:[%s300 + $0x8] sm:$0x3]
      %v424 = vld [vmem:[%s7] sm:$0x11]
      %v425 = vld [vmem:[%s7 + $0x8] sm:$0x11]
      %v428 = vunpack.c.l.b16 %v424
      %v429 = vunpack.c.h.b16 %v424
      %v430 = vunpack.c.l.b16 %v425
      %v431 = vunpack.c.h.b16 %v425
      %v432 = vpack.c.b16 %v428, %v428
      %v433 = vpack.c.b16 %v429, %v429
      %v434 = vpack.c.b16 %v430, %v430
      %v435 = vpack.c.b16 %v431, %v431
      %v437 = vshrl.u32 %v432, 16
      %v438 = vpack.i.b16 %v437, %v437
      %v440 = vlaneseq
      %v441 = vshrl.u32 %v440, 7
      %v442 = vsub.s32 0, %v441
      %v443 = vrot.slane %v438, %v442
      %v445 = vshrl.u32 %v433, 16
      %v446 = vpack.i.b16 %v445, %v445
      %v448 = vlaneseq
      %v449 = vshrl.u32 %v448, 7
      %v450 = vsub.s32 0, %v449
      %v451 = vrot.slane %v446, %v450
      %v453 = vshrl.u32 %v434, 16
      %v454 = vpack.i.b16 %v453, %v453
      %v456 = vlaneseq
      %v457 = vshrl.u32 %v456, 7
      %v458 = vsub.s32 0, %v457
      %v459 = vrot.slane %v454, %v458
      %v461 = vshrl.u32 %v435, 16
      %v462 = vpack.i.b16 %v461, %v461
      %v464 = vlaneseq
      %v465 = vshrl.u32 %v464, 7
      %v466 = vsub.s32 0, %v465
      %v467 = vrot.slane %v462, %v466
      %v472 = vcombine.low %v443, %v451
      %v473 = vcombine.low %v459, %v467
      %v475 = vunpack.c.l.s4 1983009808
      %v476 = vunpack.c.0.s8 %v475
      %v477 = vlaneseq
      %v478 = vshrl.u32 %v477, 7
      %v479 = vsub.s32 %v476, %v478
      %v480 = vrot.slane %v472, %v479
      %v482 = vunpack.c.l.s4 1983009808
      %v483 = vunpack.c.0.s8 %v482
      %v484 = vlaneseq
      %v485 = vshrl.u32 %v484, 7
      %v486 = vsub.s32 %v483, %v485
      %v487 = vrot.slane %v473, %v486
      %v488 = vcombine.low %v480, %v487
      %489 = vrot.lane.b32.xlu0 %v488, 56
      %v490 = vpop.permute.xlu0 %489
      %v491 = vrot.slane %v490, 6
      %vm492 = vcmask 457728
      %v493 = vsel %vm492, %v491, %v490
      %v496 = vmul.bf16 %v422, %v493
      %v497 = vmul.bf16 %v423, %v491
      %v500 = vcombine.low %v496, %v496
      %v502 = vunpack.c.l.s4 1983009808
      %v503 = vunpack.c.0.s8 %v502
      %v504 = vlaneseq
      %v505 = vshrl.u32 %v504, 7
      %v506 = vsub.s32 %v503, %v505
      %v507 = vrot.slane %v500, %v506
      %v509 = vunpack.c.l.s4 1983009808
      %v510 = vunpack.c.0.s8 %v509
      %v511 = vlaneseq
      %v512 = vshrl.u32 %v511, 7
      %v513 = vsub.s32 %v510, %v512
      %v514 = vrot.slane %v496, %v513
      %v515 = vcombine.low %v497, %v497
      %v517 = vunpack.c.l.s4 1983009808
      %v518 = vunpack.c.0.s8 %v517
      %v519 = vlaneseq
      %v520 = vshrl.u32 %v519, 7
      %v521 = vsub.s32 %v518, %v520
      %v522 = vrot.slane %v515, %v521
      %523 = vrot.lane.b32.xlu0 %v507, 72
      %v524 = vpop.permute.xlu0 %523
      %525 = vrot.lane.b32.xlu0 %v514, 72
      %v526 = vpop.permute.xlu0 %525
      %527 = vrot.lane.b32.xlu0 %v522, 72
      %v528 = vpop.permute.xlu0 %527
      %v529 = vrot.slane %v524, 4
      %v530 = vrot.slane %v526, 4
      %v531 = vrot.slane %v528, 4
      %v532 = vsel %vm412, %v529, %v530
      %vm533 = vcmask 588800
      %v534 = vsel %vm533, %v524, %v532
      %v535 = vsel %vm412, %v530, %v531
      %v536 = vsel %vm533, %v526, %v535
      %539 = vst [vmem:[#allocation3] sm:$0xcc] %v534
      %540 = vst [vmem:[#allocation3 + $0x8] sm:$0xcc] %v536
      %v541 = vld [vmem:[%s300] sm:$0xff]
      %v542 = vld [vmem:[%s300 + $0x8] sm:$0x3]
      %v543 = vld [vmem:[%s7] sm:$0x22]
      %v544 = vld [vmem:[%s7 + $0x8] sm:$0x22]
      %v547 = vunpack.c.l.b16 %v543
      %v548 = vunpack.c.h.b16 %v543
      %v549 = vunpack.c.l.b16 %v544
      %v550 = vunpack.c.h.b16 %v544
      %v551 = vpack.c.b16 %v547, %v547
      %v552 = vpack.c.b16 %v548, %v548
      %v553 = vpack.c.b16 %v549, %v549
      %v554 = vpack.c.b16 %v550, %v550
      %v556 = vpack.i.b16 %v551, %v551
      %v558 = vlaneseq
      %v559 = vshrl.u32 %v558, 7
      %v560 = vsub.s32 1, %v559
      %v561 = vrot.slane %v556, %v560
      %v563 = vpack.i.b16 %v552, %v552
      %v565 = vlaneseq
      %v566 = vshrl.u32 %v565, 7
      %v567 = vsub.s32 1, %v566
      %v568 = vrot.slane %v563, %v567
      %v570 = vpack.i.b16 %v553, %v553
      %v572 = vlaneseq
      %v573 = vshrl.u32 %v572, 7
      %v574 = vsub.s32 1, %v573
      %v575 = vrot.slane %v570, %v574
      %v577 = vpack.i.b16 %v554, %v554
      %v579 = vlaneseq
      %v580 = vshrl.u32 %v579, 7
      %v581 = vsub.s32 1, %v580
      %v582 = vrot.slane %v577, %v581
      %v587 = vcombine.low %v561, %v568
      %v588 = vcombine.low %v575, %v582
      %v590 = vunpack.c.l.s4 1983009808
      %v591 = vunpack.c.0.s8 %v590
      %v592 = vlaneseq
      %v593 = vshrl.u32 %v592, 7
      %v594 = vsub.s32 %v591, %v593
      %v595 = vrot.slane %v587, %v594
      %v597 = vunpack.c.l.s4 1983009808
      %v598 = vunpack.c.0.s8 %v597
      %v599 = vlaneseq
      %v600 = vshrl.u32 %v599, 7
      %v601 = vsub.s32 %v598, %v600
      %v602 = vrot.slane %v588, %v601
      %v603 = vcombine.low %v595, %v602
      %604 = vrot.lane.b32.xlu0 %v603, 57
      %v605 = vpop.permute.xlu0 %604
      %v606 = vrot.slane %v605, 6
      %vm607 = vcmask 465920
      %v608 = vsel %vm607, %v606, %v605
      %v611 = vmul.bf16 %v541, %v608
      %v612 = vmul.bf16 %v542, %v606
      %v615 = vcombine.high %v611, %v611
      %v617 = vunpack.c.l.s4 1983009808
      %v618 = vunpack.c.0.s8 %v617
      %v619 = vlaneseq
      %v620 = vshrl.u32 %v619, 7
      %v621 = vsub.s32 %v618, %v620
      %v622 = vrot.slane %v611, %v621
      %v624 = vunpack.c.l.s4 1983009808
      %v625 = vunpack.c.0.s8 %v624
      %v626 = vlaneseq
      %v627 = vshrl.u32 %v626, 7
      %v628 = vsub.s32 %v625, %v627
      %v629 = vrot.slane %v615, %v628
      %v631 = vunpack.c.l.s4 1983009808
      %v632 = vunpack.c.0.s8 %v631
      %v633 = vlaneseq
      %v634 = vshrl.u32 %v633, 7
      %v635 = vsub.s32 %v632, %v634
      %v636 = vrot.slane %v612, %v635
      %637 = vrot.lane.b32.xlu0 %v622, 71
      %v638 = vpop.permute.xlu0 %637
      %639 = vrot.lane.b32.xlu0 %v629, 71
      %v640 = vpop.permute.xlu0 %639
      %641 = vrot.lane.b32.xlu0 %v636, 71
      %v642 = vpop.permute.xlu0 %641
      %v643 = vrot.slane %v638, 4
      %v644 = vrot.slane %v640, 4
      %v645 = vrot.slane %v642, 4
      %v646 = vsel %vm412, %v643, %v644
      %vm647 = vcmask 580608
      %v648 = vsel %vm647, %v638, %v646
      %v649 = vsel %vm412, %v644, %v645
      %v650 = vsel %vm647, %v640, %v649
      %653 = vst [vmem:[#allocation3 + $0x10] sm:$0x33] %v648
      %654 = vst [vmem:[#allocation3 + $0x18] sm:$0x33] %v650
      %v655 = vld [vmem:[%s300] sm:$0xff]
      %v656 = vld [vmem:[%s300 + $0x8] sm:$0x3]
      %v657 = vld [vmem:[%s7] sm:$0x22]
      %v658 = vld [vmem:[%s7 + $0x8] sm:$0x22]
      %v661 = vunpack.c.l.b16 %v657
      %v662 = vunpack.c.h.b16 %v657
      %v663 = vunpack.c.l.b16 %v658
      %v664 = vunpack.c.h.b16 %v658
      %v665 = vpack.c.b16 %v661, %v661
      %v666 = vpack.c.b16 %v662, %v662
      %v667 = vpack.c.b16 %v663, %v663
      %v668 = vpack.c.b16 %v664, %v664
      %v670 = vshrl.u32 %v665, 16
      %v671 = vpack.i.b16 %v670, %v670
      %v673 = vlaneseq
      %v674 = vshrl.u32 %v673, 7
      %v675 = vsub.s32 1, %v674
      %v676 = vrot.slane %v671, %v675
      %v678 = vshrl.u32 %v666, 16
      %v679 = vpack.i.b16 %v678, %v678
      %v681 = vlaneseq
      %v682 = vshrl.u32 %v681, 7
      %v683 = vsub.s32 1, %v682
      %v684 = vrot.slane %v679, %v683
      %v686 = vshrl.u32 %v667, 16
      %v687 = vpack.i.b16 %v686, %v686
      %v689 = vlaneseq
      %v690 = vshrl.u32 %v689, 7
      %v691 = vsub.s32 1, %v690
      %v692 = vrot.slane %v687, %v691
      %v694 = vshrl.u32 %v668, 16
      %v695 = vpack.i.b16 %v694, %v694
      %v697 = vlaneseq
      %v698 = vshrl.u32 %v697, 7
      %v699 = vsub.s32 1, %v698
      %v700 = vrot.slane %v695, %v699
      %v705 = vcombine.low %v676, %v684
      %v706 = vcombine.low %v692, %v700
      %v708 = vunpack.c.l.s4 1983009808
      %v709 = vunpack.c.0.s8 %v708
      %v710 = vlaneseq
      %v711 = vshrl.u32 %v710, 7
      %v712 = vsub.s32 %v709, %v711
      %v713 = vrot.slane %v705, %v712
      %v715 = vunpack.c.l.s4 1983009808
      %v716 = vunpack.c.0.s8 %v715
      %v717 = vlaneseq
      %v718 = vshrl.u32 %v717, 7
      %v719 = vsub.s32 %v716, %v718
      %v720 = vrot.slane %v706, %v719
      %v721 = vcombine.low %v713, %v720
      %722 = vrot.lane.b32.xlu0 %v721, 63
      %v723 = vpop.permute.xlu0 %722
      %v724 = vrot.slane %v723, 6
      %vm725 = vcmask 515072
      %v726 = vsel %vm725, %v724, %v723
      %v729 = vmul.bf16 %v655, %v726
      %v730 = vmul.bf16 %v656, %v724
      %v733 = vcombine.low %v729, %v729
      %v735 = vunpack.c.l.s4 1983009808
      %v736 = vunpack.c.0.s8 %v735
      %v737 = vlaneseq
      %v738 = vshrl.u32 %v737, 7
      %v739 = vsub.s32 %v736, %v738
      %v740 = vrot.slane %v733, %v739
      %v742 = vunpack.c.l.s4 1983009808
      %v743 = vunpack.c.0.s8 %v742
      %v744 = vlaneseq
      %v745 = vshrl.u32 %v744, 7
      %v746 = vsub.s32 %v743, %v745
      %v747 = vrot.slane %v729, %v746
      %v748 = vcombine.low %v730, %v730
      %v750 = vunpack.c.l.s4 1983009808
      %v751 = vunpack.c.0.s8 %v750
      %v752 = vlaneseq
      %v753 = vshrl.u32 %v752, 7
      %v754 = vsub.s32 %v751, %v753
      %v755 = vrot.slane %v748, %v754
      %756 = vrot.lane.b32.xlu0 %v740, 65
      %v757 = vpop.permute.xlu0 %756
      %758 = vrot.lane.b32.xlu0 %v747, 65
      %v759 = vpop.permute.xlu0 %758
      %760 = vrot.lane.b32.xlu0 %v755, 65
      %v761 = vpop.permute.xlu0 %760
      %v762 = vrot.slane %v757, 4
      %v763 = vrot.slane %v759, 4
      %v764 = vrot.slane %v761, 4
      %v765 = vsel %vm412, %v762, %v763
      %vm766 = vcmask 531456
      %v767 = vsel %vm766, %v757, %v765
      %v768 = vsel %vm412, %v763, %v764
      %v769 = vsel %vm766, %v759, %v768
      %772 = vst [vmem:[#allocation3 + $0x10] sm:$0xcc] %v767
      %773 = vst [vmem:[#allocation3 + $0x18] sm:$0xcc] %v769
      %v774 = vld [vmem:[%s300] sm:$0xff]
      %v775 = vld [vmem:[%s300 + $0x8] sm:$0x3]
      %v776 = vld [vmem:[%s7] sm:$0x44]
      %v777 = vld [vmem:[%s7 + $0x8] sm:$0x44]
      %v780 = vunpack.c.l.b16 %v776
      %v781 = vunpack.c.h.b16 %v776
      %v782 = vunpack.c.l.b16 %v777
      %v783 = vunpack.c.h.b16 %v777
      %v784 = vpack.c.b16 %v780, %v780
      %v785 = vpack.c.b16 %v781, %v781
      %v786 = vpack.c.b16 %v782, %v782
      %v787 = vpack.c.b16 %v783, %v783
      %v789 = vpack.i.b16 %v784, %v784
      %v791 = vlaneseq
      %v792 = vshrl.u32 %v791, 7
      %v793 = vsub.s32 2, %v792
      %v794 = vrot.slane %v789, %v793
      %v796 = vpack.i.b16 %v785, %v785
      %v798 = vlaneseq
      %v799 = vshrl.u32 %v798, 7
      %v800 = vsub.s32 2, %v799
      %v801 = vrot.slane %v796, %v800
      %v803 = vpack.i.b16 %v786, %v786
      %v805 = vlaneseq
      %v806 = vshrl.u32 %v805, 7
      %v807 = vsub.s32 2, %v806
      %v808 = vrot.slane %v803, %v807
      %v810 = vpack.i.b16 %v787, %v787
      %v812 = vlaneseq
      %v813 = vshrl.u32 %v812, 7
      %v814 = vsub.s32 2, %v813
      %v815 = vrot.slane %v810, %v814
      %v820 = vcombine.low %v794, %v801
      %v821 = vcombine.low %v808, %v815
      %v823 = vunpack.c.l.s4 1983009808
      %v824 = vunpack.c.0.s8 %v823
      %v825 = vlaneseq
      %v826 = vshrl.u32 %v825, 7
      %v827 = vsub.s32 %v824, %v826
      %v828 = vrot.slane %v820, %v827
      %v830 = vunpack.c.l.s4 1983009808
      %v831 = vunpack.c.0.s8 %v830
      %v832 = vlaneseq
      %v833 = vshrl.u32 %v832, 7
      %v834 = vsub.s32 %v831, %v833
      %v835 = vrot.slane %v821, %v834
      %v836 = vcombine.low %v828, %v835
      %837 = vrot.lane.b32.xlu0 %v836, 64
      %v838 = vpop.permute.xlu0 %837
      %v839 = vrot.slane %v838, 6
      %vm840 = vcmask 523264
      %v841 = vsel %vm840, %v839, %v838
      %v844 = vmul.bf16 %v774, %v841
      %v845 = vmul.bf16 %v775, %v839
      %v848 = vcombine.high %v844, %v844
      %v850 = vunpack.c.l.s4 1983009808
      %v851 = vunpack.c.0.s8 %v850
      %v852 = vlaneseq
      %v853 = vshrl.u32 %v852, 7
      %v854 = vsub.s32 %v851, %v853
      %v855 = vrot.slane %v844, %v854
      %v857 = vunpack.c.l.s4 1983009808
      %v858 = vunpack.c.0.s8 %v857
      %v859 = vlaneseq
      %v860 = vshrl.u32 %v859, 7
      %v861 = vsub.s32 %v858, %v860
      %v862 = vrot.slane %v848, %v861
      %v864 = vunpack.c.l.s4 1983009808
      %v865 = vunpack.c.0.s8 %v864
      %v866 = vlaneseq
      %v867 = vshrl.u32 %v866, 7
      %v868 = vsub.s32 %v865, %v867
      %v869 = vrot.slane %v845, %v868
      %870 = vrot.lane.b32.xlu0 %v855, 64
      %v871 = vpop.permute.xlu0 %870
      %872 = vrot.lane.b32.xlu0 %v862, 64
      %v873 = vpop.permute.xlu0 %872
      %874 = vrot.lane.b32.xlu0 %v869, 64
      %v875 = vpop.permute.xlu0 %874
      %v876 = vrot.slane %v871, 4
      %v877 = vrot.slane %v873, 4
      %v878 = vrot.slane %v875, 4
      %v879 = vsel %vm412, %v876, %v877
      %v880 = vsel %vm840, %v871, %v879
      %v881 = vsel %vm412, %v877, %v878
      %v882 = vsel %vm840, %v873, %v881
      %885 = vst [vmem:[#allocation3 + $0x20] sm:$0x33] %v880
      %886 = vst [vmem:[#allocation3 + $0x28] sm:$0x33] %v882
      %v887 = vld [vmem:[%s300] sm:$0xff]
      %v888 = vld [vmem:[%s300 + $0x8] sm:$0x3]
      %v889 = vld [vmem:[%s7] sm:$0x44]
      %v890 = vld [vmem:[%s7 + $0x8] sm:$0x44]
      %v893 = vunpack.c.l.b16 %v889
      %v894 = vunpack.c.h.b16 %v889
      %v895 = vunpack.c.l.b16 %v890
      %v896 = vunpack.c.h.b16 %v890
      %v897 = vpack.c.b16 %v893, %v893
      %v898 = vpack.c.b16 %v894, %v894
      %v899 = vpack.c.b16 %v895, %v895
      %v900 = vpack.c.b16 %v896, %v896
      %v902 = vshrl.u32 %v897, 16
      %v903 = vpack.i.b16 %v902, %v902
      %v905 = vlaneseq
      %v906 = vshrl.u32 %v905, 7
      %v907 = vsub.s32 2, %v906
      %v908 = vrot.slane %v903, %v907
      %v910 = vshrl.u32 %v898, 16
      %v911 = vpack.i.b16 %v910, %v910
      %v913 = vlaneseq
      %v914 = vshrl.u32 %v913, 7
      %v915 = vsub.s32 2, %v914
      %v916 = vrot.slane %v911, %v915
      %v918 = vshrl.u32 %v899, 16
      %v919 = vpack.i.b16 %v918, %v918
      %v921 = vlaneseq
      %v922 = vshrl.u32 %v921, 7
      %v923 = vsub.s32 2, %v922
      %v924 = vrot.slane %v919, %v923
      %v926 = vshrl.u32 %v900, 16
      %v927 = vpack.i.b16 %v926, %v926
      %v929 = vlaneseq
      %v930 = vshrl.u32 %v929, 7
      %v931 = vsub.s32 2, %v930
      %v932 = vrot.slane %v927, %v931
      %v937 = vcombine.low %v908, %v916
      %v938 = vcombine.low %v924, %v932
      %v940 = vunpack.c.l.s4 1983009808
      %v941 = vunpack.c.0.s8 %v940
      %v942 = vlaneseq
      %v943 = vshrl.u32 %v942, 7
      %v944 = vsub.s32 %v941, %v943
      %v945 = vrot.slane %v937, %v944
      %v947 = vunpack.c.l.s4 1983009808
      %v948 = vunpack.c.0.s8 %v947
      %v949 = vlaneseq
      %v950 = vshrl.u32 %v949, 7
      %v951 = vsub.s32 %v948, %v950
      %v952 = vrot.slane %v938, %v951
      %v953 = vcombine.low %v945, %v952
      %954 = vrot.lane.b32.xlu0 %v953, 65
      %v955 = vpop.permute.xlu0 %954
      %v956 = vrot.slane %v955, 6
      %v957 = vsel %vm766, %v956, %v955
      %v960 = vmul.bf16 %v887, %v957
      %v961 = vmul.bf16 %v888, %v956
      %v964 = vcombine.low %v960, %v960
      %v966 = vunpack.c.l.s4 1983009808
      %v967 = vunpack.c.0.s8 %v966
      %v968 = vlaneseq
      %v969 = vshrl.u32 %v968, 7
      %v970 = vsub.s32 %v967, %v969
      %v971 = vrot.slane %v964, %v970
      %v973 = vunpack.c.l.s4 1983009808
      %v974 = vunpack.c.0.s8 %v973
      %v975 = vlaneseq
      %v976 = vshrl.u32 %v975, 7
      %v977 = vsub.s32 %v974, %v976
      %v978 = vrot.slane %v960, %v977
      %v979 = vcombine.low %v961, %v961
      %v981 = vunpack.c.l.s4 1983009808
      %v982 = vunpack.c.0.s8 %v981
      %v983 = vlaneseq
      %v984 = vshrl.u32 %v983, 7
      %v985 = vsub.s32 %v982, %v984
      %v986 = vrot.slane %v979, %v985
      %987 = vrot.lane.b32.xlu0 %v971, 63
      %v988 = vpop.permute.xlu0 %987
      %989 = vrot.lane.b32.xlu0 %v978, 63
      %v990 = vpop.permute.xlu0 %989
      %991 = vrot.lane.b32.xlu0 %v986, 63
      %v992 = vpop.permute.xlu0 %991
      %v993 = vrot.slane %v988, 4
      %v994 = vrot.slane %v990, 4
      %v995 = vrot.slane %v992, 4
      %v996 = vsel %vm412, %v993, %v994
      %v997 = vsel %vm725, %v988, %v996
      %v998 = vsel %vm412, %v994, %v995
      %v999 = vsel %vm725, %v990, %v998
      %1002 = vst [vmem:[#allocation3 + $0x20] sm:$0xcc] %v997
      %1003 = vst [vmem:[#allocation3 + $0x28] sm:$0xcc] %v999
      %v1004 = vld [vmem:[%s300] sm:$0xff]
      %v1005 = vld [vmem:[%s300 + $0x8] sm:$0x3]
      %v1006 = vld [vmem:[%s7] sm:$0x88]
      %v1007 = vld [vmem:[%s7 + $0x8] sm:$0x88]
      %v1010 = vunpack.c.l.b16 %v1006
      %v1011 = vunpack.c.h.b16 %v1006
      %v1012 = vunpack.c.l.b16 %v1007
      %v1013 = vunpack.c.h.b16 %v1007
      %v1014 = vpack.c.b16 %v1010, %v1010
      %v1015 = vpack.c.b16 %v1011, %v1011
      %v1016 = vpack.c.b16 %v1012, %v1012
      %v1017 = vpack.c.b16 %v1013, %v1013
      %v1019 = vpack.i.b16 %v1014, %v1014
      %v1021 = vlaneseq
      %v1022 = vshrl.u32 %v1021, 7
      %v1023 = vsub.s32 3, %v1022
      %v1024 = vrot.slane %v1019, %v1023
      %v1026 = vpack.i.b16 %v1015, %v1015
      %v1028 = vlaneseq
      %v1029 = vshrl.u32 %v1028, 7
      %v1030 = vsub.s32 3, %v1029
      %v1031 = vrot.slane %v1026, %v1030
      %v1033 = vpack.i.b16 %v1016, %v1016
      %v1035 = vlaneseq
      %v1036 = vshrl.u32 %v1035, 7
      %v1037 = vsub.s32 3, %v1036
      %v1038 = vrot.slane %v1033, %v1037
      %v1040 = vpack.i.b16 %v1017, %v1017
      %v1042 = vlaneseq
      %v1043 = vshrl.u32 %v1042, 7
      %v1044 = vsub.s32 3, %v1043
      %v1045 = vrot.slane %v1040, %v1044
      %v1050 = vcombine.low %v1024, %v1031
      %v1051 = vcombine.low %v1038, %v1045
      %v1053 = vunpack.c.l.s4 1983009808
      %v1054 = vunpack.c.0.s8 %v1053
      %v1055 = vlaneseq
      %v1056 = vshrl.u32 %v1055, 7
      %v1057 = vsub.s32 %v1054, %v1056
      %v1058 = vrot.slane %v1050, %v1057
      %v1060 = vunpack.c.l.s4 1983009808
      %v1061 = vunpack.c.0.s8 %v1060
      %v1062 = vlaneseq
      %v1063 = vshrl.u32 %v1062, 7
      %v1064 = vsub.s32 %v1061, %v1063
      %v1065 = vrot.slane %v1051, %v1064
      %v1066 = vcombine.low %v1058, %v1065
      %1067 = vrot.lane.b32.xlu0 %v1066, 71
      %v1068 = vpop.permute.xlu0 %1067
      %v1069 = vrot.slane %v1068, 6
      %v1070 = vsel %vm647, %v1069, %v1068
      %v1073 = vmul.bf16 %v1004, %v1070
      %v1074 = vmul.bf16 %v1005, %v1069
      %v1077 = vcombine.high %v1073, %v1073
      %v1079 = vunpack.c.l.s4 1983009808
      %v1080 = vunpack.c.0.s8 %v1079
      %v1081 = vlaneseq
      %v1082 = vshrl.u32 %v1081, 7
      %v1083 = vsub.s32 %v1080, %v1082
      %v1084 = vrot.slane %v1073, %v1083
      %v1086 = vunpack.c.l.s4 1983009808
      %v1087 = vunpack.c.0.s8 %v1086
      %v1088 = vlaneseq
      %v1089 = vshrl.u32 %v1088, 7
      %v1090 = vsub.s32 %v1087, %v1089
      %v1091 = vrot.slane %v1077, %v1090
      %v1093 = vunpack.c.l.s4 1983009808
      %v1094 = vunpack.c.0.s8 %v1093
      %v1095 = vlaneseq
      %v1096 = vshrl.u32 %v1095, 7
      %v1097 = vsub.s32 %v1094, %v1096
      %v1098 = vrot.slane %v1074, %v1097
      %1099 = vrot.lane.b32.xlu0 %v1084, 57
      %v1100 = vpop.permute.xlu0 %1099
      %1101 = vrot.lane.b32.xlu0 %v1091, 57
      %v1102 = vpop.permute.xlu0 %1101
      %1103 = vrot.lane.b32.xlu0 %v1098, 57
      %v1104 = vpop.permute.xlu0 %1103
      %v1105 = vrot.slane %v1100, 4
      %v1106 = vrot.slane %v1102, 4
      %v1107 = vrot.slane %v1104, 4
      %v1108 = vsel %vm412, %v1105, %v1106
      %v1109 = vsel %vm607, %v1100, %v1108
      %v1110 = vsel %vm412, %v1106, %v1107
      %v1111 = vsel %vm607, %v1102, %v1110
      %1114 = vst [vmem:[#allocation3 + $0x30] sm:$0x33] %v1109
      %1115 = vst [vmem:[#allocation3 + $0x38] sm:$0x33] %v1111
      %v1116 = vld [vmem:[%s300] sm:$0xff]
      %v1117 = vld [vmem:[%s300 + $0x8] sm:$0x3]
      %v1118 = vld [vmem:[%s7] sm:$0x88]
      %v1119 = vld [vmem:[%s7 + $0x8] sm:$0x88]
      %v1122 = vunpack.c.l.b16 %v1118
      %v1123 = vunpack.c.h.b16 %v1118
      %v1124 = vunpack.c.l.b16 %v1119
      %v1125 = vunpack.c.h.b16 %v1119
      %v1126 = vpack.c.b16 %v1122, %v1122
      %v1127 = vpack.c.b16 %v1123, %v1123
      %v1128 = vpack.c.b16 %v1124, %v1124
      %v1129 = vpack.c.b16 %v1125, %v1125
      %v1131 = vshrl.u32 %v1126, 16
      %v1132 = vpack.i.b16 %v1131, %v1131
      %v1134 = vlaneseq
      %v1135 = vshrl.u32 %v1134, 7
      %v1136 = vsub.s32 3, %v1135
      %v1137 = vrot.slane %v1132, %v1136
      %v1139 = vshrl.u32 %v1127, 16
      %v1140 = vpack.i.b16 %v1139, %v1139
      %v1142 = vlaneseq
      %v1143 = vshrl.u32 %v1142, 7
      %v1144 = vsub.s32 3, %v1143
      %v1145 = vrot.slane %v1140, %v1144
      %v1147 = vshrl.u32 %v1128, 16
      %v1148 = vpack.i.b16 %v1147, %v1147
      %v1150 = vlaneseq
      %v1151 = vshrl.u32 %v1150, 7
      %v1152 = vsub.s32 3, %v1151
      %v1153 = vrot.slane %v1148, %v1152
      %v1155 = vshrl.u32 %v1129, 16
      %v1156 = vpack.i.b16 %v1155, %v1155
      %v1158 = vlaneseq
      %v1159 = vshrl.u32 %v1158, 7
      %v1160 = vsub.s32 3, %v1159
      %v1161 = vrot.slane %v1156, %v1160
      %v1166 = vcombine.low %v1137, %v1145
      %v1167 = vcombine.low %v1153, %v1161
      %v1169 = vunpack.c.l.s4 1983009808
      %v1170 = vunpack.c.0.s8 %v1169
      %v1171 = vlaneseq
      %v1172 = vshrl.u32 %v1171, 7
      %v1173 = vsub.s32 %v1170, %v1172
      %v1174 = vrot.slane %v1166, %v1173
      %v1176 = vunpack.c.l.s4 1983009808
      %v1177 = vunpack.c.0.s8 %v1176
      %v1178 = vlaneseq
      %v1179 = vshrl.u32 %v1178, 7
      %v1180 = vsub.s32 %v1177, %v1179
      %v1181 = vrot.slane %v1167, %v1180
      %v1182 = vcombine.low %v1174, %v1181
      %1183 = vrot.lane.b32.xlu0 %v1182, 72
      %v1184 = vpop.permute.xlu0 %1183
      %v1185 = vrot.slane %v1184, 6
      %v1186 = vsel %vm533, %v1185, %v1184
      %v1189 = vmul.bf16 %v1116, %v1186
      %v1190 = vmul.bf16 %v1117, %v1185
      %v1193 = vcombine.low %v1189, %v1189
      %v1195 = vunpack.c.l.s4 1983009808
      %v1196 = vunpack.c.0.s8 %v1195
      %v1197 = vlaneseq
      %v1198 = vshrl.u32 %v1197, 7
      %v1199 = vsub.s32 %v1196, %v1198
      %v1200 = vrot.slane %v1193, %v1199
      %v1202 = vunpack.c.l.s4 1983009808
      %v1203 = vunpack.c.0.s8 %v1202
      %v1204 = vlaneseq
      %v1205 = vshrl.u32 %v1204, 7
      %v1206 = vsub.s32 %v1203, %v1205
      %v1207 = vrot.slane %v1189, %v1206
      %v1208 = vcombine.low %v1190, %v1190
      %v1210 = vunpack.c.l.s4 1983009808
      %v1211 = vunpack.c.0.s8 %v1210
      %v1212 = vlaneseq
      %v1213 = vshrl.u32 %v1212, 7
      %v1214 = vsub.s32 %v1211, %v1213
      %v1215 = vrot.slane %v1208, %v1214
      %1216 = vrot.lane.b32.xlu0 %v1200, 56
      %v1217 = vpop.permute.xlu0 %1216
      %1218 = vrot.lane.b32.xlu0 %v1207, 56
      %v1219 = vpop.permute.xlu0 %1218
      %1220 = vrot.lane.b32.xlu0 %v1215, 56
      %v1221 = vpop.permute.xlu0 %1220
      %v1222 = vrot.slane %v1217, 4
      %v1223 = vrot.slane %v1219, 4
      %v1224 = vrot.slane %v1221, 4
      %v1225 = vsel %vm412, %v1222, %v1223
      %v1226 = vsel %vm492, %v1217, %v1225
      %v1227 = vsel %vm412, %v1223, %v1224
      %v1228 = vsel %vm492, %v1219, %v1227
      %1231 = vst [vmem:[#allocation3 + $0x30] sm:$0xcc] %v1226
      %1232 = vst [vmem:[#allocation3 + $0x38] sm:$0xcc] %v1228
      %v1233 = vld [vmem:[%s300] sm:$0xff]
      %v1234 = vld [vmem:[%s300 + $0x8] sm:$0x3]
      %v1235 = vld [vmem:[%s7 + $0x10] sm:$0x11]
      %v1236 = vld [vmem:[%s7 + $0x18] sm:$0x11]
      %v1239 = vunpack.c.l.b16 %v1235
      %v1240 = vunpack.c.h.b16 %v1235
      %v1241 = vunpack.c.l.b16 %v1236
      %v1242 = vunpack.c.h.b16 %v1236
      %v1243 = vpack.c.b16 %v1239, %v1239
      %v1244 = vpack.c.b16 %v1240, %v1240
      %v1245 = vpack.c.b16 %v1241, %v1241
      %v1246 = vpack.c.b16 %v1242, %v1242
      %v1248 = vpack.i.b16 %v1243, %v1243
      %v1250 = vlaneseq
      %v1251 = vshrl.u32 %v1250, 7
      %v1252 = vsub.s32 0, %v1251
      %v1253 = vrot.slane %v1248, %v1252
      %v1255 = vpack.i.b16 %v1244, %v1244
      %v1257 = vlaneseq
      %v1258 = vshrl.u32 %v1257, 7
      %v1259 = vsub.s32 0, %v1258
      %v1260 = vrot.slane %v1255, %v1259
      %v1262 = vpack.i.b16 %v1245, %v1245
      %v1264 = vlaneseq
      %v1265 = vshrl.u32 %v1264, 7
      %v1266 = vsub.s32 0, %v1265
      %v1267 = vrot.slane %v1262, %v1266
      %v1269 = vpack.i.b16 %v1246, %v1246
      %v1271 = vlaneseq
      %v1272 = vshrl.u32 %v1271, 7
      %v1273 = vsub.s32 0, %v1272
      %v1274 = vrot.slane %v1269, %v1273
      %v1279 = vcombine.low %v1253, %v1260
      %v1280 = vcombine.low %v1267, %v1274
      %v1282 = vunpack.c.l.s4 1983009808
      %v1283 = vunpack.c.0.s8 %v1282
      %v1284 = vlaneseq
      %v1285 = vshrl.u32 %v1284, 7
      %v1286 = vsub.s32 %v1283, %v1285
      %v1287 = vrot.slane %v1279, %v1286
      %v1289 = vunpack.c.l.s4 1983009808
      %v1290 = vunpack.c.0.s8 %v1289
      %v1291 = vlaneseq
      %v1292 = vshrl.u32 %v1291, 7
      %v1293 = vsub.s32 %v1290, %v1292
      %v1294 = vrot.slane %v1280, %v1293
      %v1295 = vcombine.low %v1287, %v1294
      %1296 = vrot.lane.b32.xlu0 %v1295, 73
      %v1297 = vpop.permute.xlu0 %1296
      %v1298 = vrot.slane %v1297, 6
      %v1299 = vsel %vm414, %v1298, %v1297
      %v1302 = vmul.bf16 %v1233, %v1299
      %v1303 = vmul.bf16 %v1234, %v1298
      %v1306 = vcombine.high %v1302, %v1302
      %v1308 = vunpack.c.l.s4 1983009808
      %v1309 = vunpack.c.0.s8 %v1308
      %v1310 = vlaneseq
      %v1311 = vshrl.u32 %v1310, 7
      %v1312 = vsub.s32 %v1309, %v1311
      %v1313 = vrot.slane %v1302, %v1312
      %v1315 = vunpack.c.l.s4 1983009808
      %v1316 = vunpack.c.0.s8 %v1315
      %v1317 = vlaneseq
      %v1318 = vshrl.u32 %v1317, 7
      %v1319 = vsub.s32 %v1316, %v1318
      %v1320 = vrot.slane %v1306, %v1319
      %v1322 = vunpack.c.l.s4 1983009808
      %v1323 = vunpack.c.0.s8 %v1322
      %v1324 = vlaneseq
      %v1325 = vshrl.u32 %v1324, 7
      %v1326 = vsub.s32 %v1323, %v1325
      %v1327 = vrot.slane %v1303, %v1326
      %1328 = vrot.lane.b32.xlu0 %v1313, 55
      %v1329 = vpop.permute.xlu0 %1328
      %1330 = vrot.lane.b32.xlu0 %v1320, 55
      %v1331 = vpop.permute.xlu0 %1330
      %1332 = vrot.lane.b32.xlu0 %v1327, 55
      %v1333 = vpop.permute.xlu0 %1332
      %v1334 = vrot.slane %v1329, 4
      %v1335 = vrot.slane %v1331, 4
      %v1336 = vrot.slane %v1333, 4
      %v1337 = vsel %vm412, %v1334, %v1335
      %v1338 = vsel %vm373, %v1329, %v1337
      %v1339 = vsel %vm412, %v1335, %v1336
      %v1340 = vsel %vm373, %v1331, %v1339
      %1343 = vst [vmem:[#allocation3 + $0x40] sm:$0x33] %v1338
      %1344 = vst [vmem:[#allocation3 + $0x48] sm:$0x33] %v1340
      %v1345 = vld [vmem:[%s300] sm:$0xff]
      %v1346 = vld [vmem:[%s300 + $0x8] sm:$0x3]
      %v1347 = vld [vmem:[%s7 + $0x10] sm:$0x11]
      %v1348 = vld [vmem:[%s7 + $0x18] sm:$0x11]
      %v1351 = vunpack.c.l.b16 %v1347
      %v1352 = vunpack.c.h.b16 %v1347
      %v1353 = vunpack.c.l.b16 %v1348
      %v1354 = vunpack.c.h.b16 %v1348
      %v1355 = vpack.c.b16 %v1351, %v1351
      %v1356 = vpack.c.b16 %v1352, %v1352
      %v1357 = vpack.c.b16 %v1353, %v1353
      %v1358 = vpack.c.b16 %v1354, %v1354
      %v1360 = vshrl.u32 %v1355, 16
      %v1361 = vpack.i.b16 %v1360, %v1360
      %v1363 = vlaneseq
      %v1364 = vshrl.u32 %v1363, 7
      %v1365 = vsub.s32 0, %v1364
      %v1366 = vrot.slane %v1361, %v1365
      %v1368 = vshrl.u32 %v1356, 16
      %v1369 = vpack.i.b16 %v1368, %v1368
      %v1371 = vlaneseq
      %v1372 = vshrl.u32 %v1371, 7
      %v1373 = vsub.s32 0, %v1372
      %v1374 = vrot.slane %v1369, %v1373
      %v1376 = vshrl.u32 %v1357, 16
      %v1377 = vpack.i.b16 %v1376, %v1376
      %v1379 = vlaneseq
      %v1380 = vshrl.u32 %v1379, 7
      %v1381 = vsub.s32 0, %v1380
      %v1382 = vrot.slane %v1377, %v1381
      %v1384 = vshrl.u32 %v1358, 16
      %v1385 = vpack.i.b16 %v1384, %v1384
      %v1387 = vlaneseq
      %v1388 = vshrl.u32 %v1387, 7
      %v1389 = vsub.s32 0, %v1388
      %v1390 = vrot.slane %v1385, %v1389
      %v1395 = vcombine.low %v1366, %v1374
      %v1396 = vcombine.low %v1382, %v1390
      %v1398 = vunpack.c.l.s4 1983009808
      %v1399 = vunpack.c.0.s8 %v1398
      %v1400 = vlaneseq
      %v1401 = vshrl.u32 %v1400, 7
      %v1402 = vsub.s32 %v1399, %v1401
      %v1403 = vrot.slane %v1395, %v1402
      %v1405 = vunpack.c.l.s4 1983009808
      %v1406 = vunpack.c.0.s8 %v1405
      %v1407 = vlaneseq
      %v1408 = vshrl.u32 %v1407, 7
      %v1409 = vsub.s32 %v1406, %v1408
      %v1410 = vrot.slane %v1396, %v1409
      %v1411 = vcombine.low %v1403, %v1410
      %1412 = vrot.lane.b32.xlu0 %v1411, 119
      %v1413 = vpop.permute.xlu0 %1412
      %v1414 = vrot.slane %v1413, 6
      %vm1415 = vcmask 973824
      %v1416 = vsel %vm1415, %v1414, %v1413
      %v1419 = vmul.bf16 %v1345, %v1416
      %v1420 = vmul.bf16 %v1346, %v1414
      %v1423 = vcombine.low %v1419, %v1419
      %v1425 = vunpack.c.l.s4 1983009808
      %v1426 = vunpack.c.0.s8 %v1425
      %v1427 = vlaneseq
      %v1428 = vshrl.u32 %v1427, 7
      %v1429 = vsub.s32 %v1426, %v1428
      %v1430 = vrot.slane %v1423, %v1429
      %v1432 = vunpack.c.l.s4 1983009808
      %v1433 = vunpack.c.0.s8 %v1432
      %v1434 = vlaneseq
      %v1435 = vshrl.u32 %v1434, 7
      %v1436 = vsub.s32 %v1433, %v1435
      %v1437 = vrot.slane %v1419, %v1436
      %v1438 = vcombine.low %v1420, %v1420
      %v1440 = vunpack.c.l.s4 1983009808
      %v1441 = vunpack.c.0.s8 %v1440
      %v1442 = vlaneseq
      %v1443 = vshrl.u32 %v1442, 7
      %v1444 = vsub.s32 %v1441, %v1443
      %v1445 = vrot.slane %v1438, %v1444
      %1446 = vrot.lane.b32.xlu0 %v1430, 9
      %v1447 = vpop.permute.xlu0 %1446
      %1448 = vrot.lane.b32.xlu0 %v1437, 9
      %v1449 = vpop.permute.xlu0 %1448
      %1450 = vrot.lane.b32.xlu0 %v1445, 9
      %v1451 = vpop.permute.xlu0 %1450
      %v1452 = vrot.slane %v1447, 4
      %v1453 = vrot.slane %v1449, 4
      %v1454 = vrot.slane %v1451, 4
      %v1455 = vsel %vm412, %v1452, %v1453
      %vm1456 = vcmask 72704
      %v1457 = vsel %vm1456, %v1447, %v1455
      %v1458 = vsel %vm412, %v1453, %v1454
      %v1459 = vsel %vm1456, %v1449, %v1458
      %1462 = vst [vmem:[#allocation3 + $0x40] sm:$0xcc] %v1457
      %1463 = vst [vmem:[#allocation3 + $0x48] sm:$0xcc] %v1459
      %v1464 = vld [vmem:[%s300] sm:$0xff]
      %v1465 = vld [vmem:[%s300 + $0x8] sm:$0x3]
      %v1466 = vld [vmem:[%s7 + $0x10] sm:$0x22]
      %v1467 = vld [vmem:[%s7 + $0x18] sm:$0x22]
      %v1470 = vunpack.c.l.b16 %v1466
      %v1471 = vunpack.c.h.b16 %v1466
      %v1472 = vunpack.c.l.b16 %v1467
      %v1473 = vunpack.c.h.b16 %v1467
      %v1474 = vpack.c.b16 %v1470, %v1470
      %v1475 = vpack.c.b16 %v1471, %v1471
      %v1476 = vpack.c.b16 %v1472, %v1472
      %v1477 = vpack.c.b16 %v1473, %v1473
      %v1479 = vpack.i.b16 %v1474, %v1474
      %v1481 = vlaneseq
      %v1482 = vshrl.u32 %v1481, 7
      %v1483 = vsub.s32 1, %v1482
      %v1484 = vrot.slane %v1479, %v1483
      %v1486 = vpack.i.b16 %v1475, %v1475
      %v1488 = vlaneseq
      %v1489 = vshrl.u32 %v1488, 7
      %v1490 = vsub.s32 1, %v1489
      %v1491 = vrot.slane %v1486, %v1490
      %v1493 = vpack.i.b16 %v1476, %v1476
      %v1495 = vlaneseq
      %v1496 = vshrl.u32 %v1495, 7
      %v1497 = vsub.s32 1, %v1496
      %v1498 = vrot.slane %v1493, %v1497
      %v1500 = vpack.i.b16 %v1477, %v1477
      %v1502 = vlaneseq
      %v1503 = vshrl.u32 %v1502, 7
      %v1504 = vsub.s32 1, %v1503
      %v1505 = vrot.slane %v1500, %v1504
      %v1510 = vcombine.low %v1484, %v1491
      %v1511 = vcombine.low %v1498, %v1505
      %v1513 = vunpack.c.l.s4 1983009808
      %v1514 = vunpack.c.0.s8 %v1513
      %v1515 = vlaneseq
      %v1516 = vshrl.u32 %v1515, 7
      %v1517 = vsub.s32 %v1514, %v1516
      %v1518 = vrot.slane %v1510, %v1517
      %v1520 = vunpack.c.l.s4 1983009808
      %v1521 = vunpack.c.0.s8 %v1520
      %v1522 = vlaneseq
      %v1523 = vshrl.u32 %v1522, 7
      %v1524 = vsub.s32 %v1521, %v1523
      %v1525 = vrot.slane %v1511, %v1524
      %v1526 = vcombine.low %v1518, %v1525
      %1527 = vrot.lane.b32.xlu0 %v1526, 120
      %v1528 = vpop.permute.xlu0 %1527
      %v1529 = vrot.slane %v1528, 6
      %vm1530 = vcmask 982016
      %v1531 = vsel %vm1530, %v1529, %v1528
      %v1534 = vmul.bf16 %v1464, %v1531
      %v1535 = vmul.bf16 %v1465, %v1529
      %v1538 = vcombine.high %v1534, %v1534
      %v1540 = vunpack.c.l.s4 1983009808
      %v1541 = vunpack.c.0.s8 %v1540
      %v1542 = vlaneseq
      %v1543 = vshrl.u32 %v1542, 7
      %v1544 = vsub.s32 %v1541, %v1543
      %v1545 = vrot.slane %v1534, %v1544
      %v1547 = vunpack.c.l.s4 1983009808
      %v1548 = vunpack.c.0.s8 %v1547
      %v1549 = vlaneseq
      %v1550 = vshrl.u32 %v1549, 7
      %v1551 = vsub.s32 %v1548, %v1550
      %v1552 = vrot.slane %v1538, %v1551
      %v1554 = vunpack.c.l.s4 1983009808
      %v1555 = vunpack.c.0.s8 %v1554
      %v1556 = vlaneseq
      %v1557 = vshrl.u32 %v1556, 7
      %v1558 = vsub.s32 %v1555, %v1557
      %v1559 = vrot.slane %v1535, %v1558
      %1560 = vrot.lane.b32.xlu0 %v1545, 8
      %v1561 = vpop.permute.xlu0 %1560
      %1562 = vrot.lane.b32.xlu0 %v1552, 8
      %v1563 = vpop.permute.xlu0 %1562
      %1564 = vrot.lane.b32.xlu0 %v1559, 8
      %v1565 = vpop.permute.xlu0 %1564
      %v1566 = vrot.slane %v1561, 4
      %v1567 = vrot.slane %v1563, 4
      %v1568 = vrot.slane %v1565, 4
      %v1569 = vsel %vm412, %v1566, %v1567
      %vm1570 = vcmask 64512
      %v1571 = vsel %vm1570, %v1561, %v1569
      %v1572 = vsel %vm412, %v1567, %v1568
      %v1573 = vsel %vm1570, %v1563, %v1572
      %1576 = vst [vmem:[#allocation3 + $0x50] sm:$0x33] %v1571
      %1577 = vst [vmem:[#allocation3 + $0x58] sm:$0x33] %v1573
      %v1578 = vld [vmem:[%s300] sm:$0xff]
      %v1579 = vld [vmem:[%s300 + $0x8] sm:$0x3]
      %v1580 = vld [vmem:[%s7 + $0x10] sm:$0x22]
      %v1581 = vld [vmem:[%s7 + $0x18] sm:$0x22]
      %v1584 = vunpack.c.l.b16 %v1580
      %v1585 = vunpack.c.h.b16 %v1580
      %v1586 = vunpack.c.l.b16 %v1581
      %v1587 = vunpack.c.h.b16 %v1581
      %v1588 = vpack.c.b16 %v1584, %v1584
      %v1589 = vpack.c.b16 %v1585, %v1585
      %v1590 = vpack.c.b16 %v1586, %v1586
      %v1591 = vpack.c.b16 %v1587, %v1587
      %v1593 = vshrl.u32 %v1588, 16
      %v1594 = vpack.i.b16 %v1593, %v1593
      %v1596 = vlaneseq
      %v1597 = vshrl.u32 %v1596, 7
      %v1598 = vsub.s32 1, %v1597
      %v1599 = vrot.slane %v1594, %v1598
      %v1601 = vshrl.u32 %v1589, 16
      %v1602 = vpack.i.b16 %v1601, %v1601
      %v1604 = vlaneseq
      %v1605 = vshrl.u32 %v1604, 7
      %v1606 = vsub.s32 1, %v1605
      %v1607 = vrot.slane %v1602, %v1606
      %v1609 = vshrl.u32 %v1590, 16
      %v1610 = vpack.i.b16 %v1609, %v1609
      %v1612 = vlaneseq
      %v1613 = vshrl.u32 %v1612, 7
      %v1614 = vsub.s32 1, %v1613
      %v1615 = vrot.slane %v1610, %v1614
      %v1617 = vshrl.u32 %v1591, 16
      %v1618 = vpack.i.b16 %v1617, %v1617
      %v1620 = vlaneseq
      %v1621 = vshrl.u32 %v1620, 7
      %v1622 = vsub.s32 1, %v1621
      %v1623 = vrot.slane %v1618, %v1622
      %v1628 = vcombine.low %v1599, %v1607
      %v1629 = vcombine.low %v1615, %v1623
      %v1631 = vunpack.c.l.s4 1983009808
      %v1632 = vunpack.c.0.s8 %v1631
      %v1633 = vlaneseq
      %v1634 = vshrl.u32 %v1633, 7
      %v1635 = vsub.s32 %v1632, %v1634
      %v1636 = vrot.slane %v1628, %v1635
      %v1638 = vunpack.c.l.s4 1983009808
      %v1639 = vunpack.c.0.s8 %v1638
      %v1640 = vlaneseq
      %v1641 = vshrl.u32 %v1640, 7
      %v1642 = vsub.s32 %v1639, %v1641
      %v1643 = vrot.slane %v1629, %v1642
      %v1644 = vcombine.low %v1636, %v1643
      %1645 = vrot.lane.b32.xlu0 %v1644, 121
      %v1646 = vpop.permute.xlu0 %1645
      %v1647 = vrot.slane %v1646, 6
      %vm1648 = vcmask 990208
      %v1649 = vsel %vm1648, %v1647, %v1646
      %v1652 = vmul.bf16 %v1578, %v1649
      %v1653 = vmul.bf16 %v1579, %v1647
      %v1656 = vcombine.low %v1652, %v1652
      %v1658 = vunpack.c.l.s4 1983009808
      %v1659 = vunpack.c.0.s8 %v1658
      %v1660 = vlaneseq
      %v1661 = vshrl.u32 %v1660, 7
      %v1662 = vsub.s32 %v1659, %v1661
      %v1663 = vrot.slane %v1656, %v1662
      %v1665 = vunpack.c.l.s4 1983009808
      %v1666 = vunpack.c.0.s8 %v1665
      %v1667 = vlaneseq
      %v1668 = vshrl.u32 %v1667, 7
      %v1669 = vsub.s32 %v1666, %v1668
      %v1670 = vrot.slane %v1652, %v1669
      %v1671 = vcombine.low %v1653, %v1653
      %v1673 = vunpack.c.l.s4 1983009808
      %v1674 = vunpack.c.0.s8 %v1673
      %v1675 = vlaneseq
      %v1676 = vshrl.u32 %v1675, 7
      %v1677 = vsub.s32 %v1674, %v1676
      %v1678 = vrot.slane %v1671, %v1677
      %1679 = vrot.lane.b32.xlu0 %v1663, 7
      %v1680 = vpop.permute.xlu0 %1679
      %1681 = vrot.lane.b32.xlu0 %v1670, 7
      %v1682 = vpop.permute.xlu0 %1681
      %1683 = vrot.lane.b32.xlu0 %v1678, 7
      %v1684 = vpop.permute.xlu0 %1683
      %v1685 = vrot.slane %v1680, 4
      %v1686 = vrot.slane %v1682, 4
      %v1687 = vrot.slane %v1684, 4
      %v1688 = vsel %vm412, %v1685, %v1686
      %vm1689 = vcmask 56320
      %v1690 = vsel %vm1689, %v1680, %v1688
      %v1691 = vsel %vm412, %v1686, %v1687
      %v1692 = vsel %vm1689, %v1682, %v1691
      %1695 = vst [vmem:[#allocation3 + $0x50] sm:$0xcc] %v1690
      %1696 = vst [vmem:[#allocation3 + $0x58] sm:$0xcc] %v1692
      %v1697 = vld [vmem:[%s300] sm:$0xff]
      %v1698 = vld [vmem:[%s300 + $0x8] sm:$0x3]
      %v1699 = vld [vmem:[%s7 + $0x10] sm:$0x44]
      %v1700 = vld [vmem:[%s7 + $0x18] sm:$0x44]
      %v1703 = vunpack.c.l.b16 %v1699
      %v1704 = vunpack.c.h.b16 %v1699
      %v1705 = vunpack.c.l.b16 %v1700
      %v1706 = vunpack.c.h.b16 %v1700
      %v1707 = vpack.c.b16 %v1703, %v1703
      %v1708 = vpack.c.b16 %v1704, %v1704
      %v1709 = vpack.c.b16 %v1705, %v1705
      %v1710 = vpack.c.b16 %v1706, %v1706
      %v1712 = vpack.i.b16 %v1707, %v1707
      %v1714 = vlaneseq
      %v1715 = vshrl.u32 %v1714, 7
      %v1716 = vsub.s32 2, %v1715
      %v1717 = vrot.slane %v1712, %v1716
      %v1719 = vpack.i.b16 %v1708, %v1708
      %v1721 = vlaneseq
      %v1722 = vshrl.u32 %v1721, 7
      %v1723 = vsub.s32 2, %v1722
      %v1724 = vrot.slane %v1719, %v1723
      %v1726 = vpack.i.b16 %v1709, %v1709
      %v1728 = vlaneseq
      %v1729 = vshrl.u32 %v1728, 7
      %v1730 = vsub.s32 2, %v1729
      %v1731 = vrot.slane %v1726, %v1730
      %v1733 = vpack.i.b16 %v1710, %v1710
      %v1735 = vlaneseq
      %v1736 = vshrl.u32 %v1735, 7
      %v1737 = vsub.s32 2, %v1736
      %v1738 = vrot.slane %v1733, %v1737
      %v1743 = vcombine.low %v1717, %v1724
      %v1744 = vcombine.low %v1731, %v1738
      %v1746 = vunpack.c.l.s4 1983009808
      %v1747 = vunpack.c.0.s8 %v1746
      %v1748 = vlaneseq
      %v1749 = vshrl.u32 %v1748, 7
      %v1750 = vsub.s32 %v1747, %v1749
      %v1751 = vrot.slane %v1743, %v1750
      %v1753 = vunpack.c.l.s4 1983009808
      %v1754 = vunpack.c.0.s8 %v1753
      %v1755 = vlaneseq
      %v1756 = vshrl.u32 %v1755, 7
      %v1757 = vsub.s32 %v1754, %v1756
      %v1758 = vrot.slane %v1744, %v1757
      %v1759 = vcombine.low %v1751, %v1758
      %1760 = vrot.lane.b32.xlu0 %v1759, 127
      %v1761 = vpop.permute.xlu0 %1760
      %v1762 = vrot.slane %v1761, 6
      %vm1763 = vcmask 1039360
      %v1764 = vsel %vm1763, %v1762, %v1761
      %v1767 = vmul.bf16 %v1697, %v1764
      %v1768 = vmul.bf16 %v1698, %v1762
      %v1771 = vcombine.high %v1767, %v1767
      %v1773 = vunpack.c.l.s4 1983009808
      %v1774 = vunpack.c.0.s8 %v1773
      %v1775 = vlaneseq
      %v1776 = vshrl.u32 %v1775, 7
      %v1777 = vsub.s32 %v1774, %v1776
      %v1778 = vrot.slane %v1767, %v1777
      %v1780 = vunpack.c.l.s4 1983009808
      %v1781 = vunpack.c.0.s8 %v1780
      %v1782 = vlaneseq
      %v1783 = vshrl.u32 %v1782, 7
      %v1784 = vsub.s32 %v1781, %v1783
      %v1785 = vrot.slane %v1771, %v1784
      %v1787 = vunpack.c.l.s4 1983009808
      %v1788 = vunpack.c.0.s8 %v1787
      %v1789 = vlaneseq
      %v1790 = vshrl.u32 %v1789, 7
      %v1791 = vsub.s32 %v1788, %v1790
      %v1792 = vrot.slane %v1768, %v1791
      %1793 = vrot.lane.b32.xlu0 %v1778, 1
      %v1794 = vpop.permute.xlu0 %1793
      %1795 = vrot.lane.b32.xlu0 %v1785, 1
      %v1796 = vpop.permute.xlu0 %1795
      %1797 = vrot.lane.b32.xlu0 %v1792, 1
      %v1798 = vpop.permute.xlu0 %1797
      %v1799 = vrot.slane %v1794, 4
      %v1800 = vrot.slane %v1796, 4
      %v1801 = vrot.slane %v1798, 4
      %v1802 = vsel %vm412, %v1799, %v1800
      %vm1803 = vcmask 7168
      %v1804 = vsel %vm1803, %v1794, %v1802
      %v1805 = vsel %vm412, %v1800, %v1801
      %v1806 = vsel %vm1803, %v1796, %v1805
      %1809 = vst [vmem:[#allocation3 + $0x60] sm:$0x33] %v1804
      %1810 = vst [vmem:[#allocation3 + $0x68] sm:$0x33] %v1806
      %v1811 = vld [vmem:[%s300 + $0x2] sm:$0xff]
      %v1812 = vld [vmem:[%s7 + $0x10] sm:$0x44]
      %v1813 = vld [vmem:[%s7 + $0x18] sm:$0x44]
      %v1816 = vunpack.c.l.b16 %v1812
      %v1817 = vunpack.c.h.b16 %v1812
      %v1818 = vunpack.c.l.b16 %v1813
      %v1819 = vunpack.c.h.b16 %v1813
      %v1820 = vpack.c.b16 %v1816, %v1816
      %v1821 = vpack.c.b16 %v1817, %v1817
      %v1822 = vpack.c.b16 %v1818, %v1818
      %v1823 = vpack.c.b16 %v1819, %v1819
      %v1825 = vshrl.u32 %v1820, 16
      %v1826 = vpack.i.b16 %v1825, %v1825
      %v1828 = vlaneseq
      %v1829 = vshrl.u32 %v1828, 7
      %v1830 = vsub.s32 2, %v1829
      %v1831 = vrot.slane %v1826, %v1830
      %v1833 = vshrl.u32 %v1821, 16
      %v1834 = vpack.i.b16 %v1833, %v1833
      %v1836 = vlaneseq
      %v1837 = vshrl.u32 %v1836, 7
      %v1838 = vsub.s32 2, %v1837
      %v1839 = vrot.slane %v1834, %v1838
      %v1841 = vshrl.u32 %v1822, 16
      %v1842 = vpack.i.b16 %v1841, %v1841
      %v1844 = vlaneseq
      %v1845 = vshrl.u32 %v1844, 7
      %v1846 = vsub.s32 2, %v1845
      %v1847 = vrot.slane %v1842, %v1846
      %v1849 = vshrl.u32 %v1823, 16
      %v1850 = vpack.i.b16 %v1849, %v1849
      %v1852 = vlaneseq
      %v1853 = vshrl.u32 %v1852, 7
      %v1854 = vsub.s32 2, %v1853
      %v1855 = vrot.slane %v1850, %v1854
      %v1860 = vcombine.low %v1831, %v1839
      %v1861 = vcombine.low %v1847, %v1855
      %v1863 = vunpack.c.l.s4 1983009808
      %v1864 = vunpack.c.0.s8 %v1863
      %v1865 = vlaneseq
      %v1866 = vshrl.u32 %v1865, 7
      %v1867 = vsub.s32 %v1864, %v1866
      %v1868 = vrot.slane %v1860, %v1867
      %v1870 = vunpack.c.l.s4 1983009808
      %v1871 = vunpack.c.0.s8 %v1870
      %v1872 = vlaneseq
      %v1873 = vshrl.u32 %v1872, 7
      %v1874 = vsub.s32 %v1871, %v1873
      %v1875 = vrot.slane %v1861, %v1874
      %v1876 = vcombine.low %v1868, %v1875
      %v1878 = vmul.bf16 %v1811, %v1876
      %v1880 = vcombine.low %v1878, %v1878
      %v1882 = vunpack.c.l.s4 1983009808
      %v1883 = vunpack.c.0.s8 %v1882
      %v1884 = vlaneseq
      %v1885 = vshrl.u32 %v1884, 7
      %v1886 = vsub.s32 %v1883, %v1885
      %v1887 = vrot.slane %v1880, %v1886
      %v1889 = vunpack.c.l.s4 1983009808
      %v1890 = vunpack.c.0.s8 %v1889
      %v1891 = vlaneseq
      %v1892 = vshrl.u32 %v1891, 7
      %v1893 = vsub.s32 %v1890, %v1892
      %v1894 = vrot.slane %v1878, %v1893
      %1897 = vst [vmem:[#allocation3 + $0x60] sm:$0xcc] %v1887
      %1898 = vst [vmem:[#allocation3 + $0x68] sm:$0xcc] %v1894
      %v1899 = vld [vmem:[%s300 + $0x2] sm:$0xff]
      %v1900 = vld [vmem:[%s300 + $0xa] sm:$0x3]
      %v1901 = vld [vmem:[%s7 + $0x10] sm:$0x88]
      %v1902 = vld [vmem:[%s7 + $0x18] sm:$0x88]
      %v1905 = vunpack.c.l.b16 %v1901
      %v1906 = vunpack.c.h.b16 %v1901
      %v1907 = vunpack.c.l.b16 %v1902
      %v1908 = vunpack.c.h.b16 %v1902
      %v1909 = vpack.c.b16 %v1905, %v1905
      %v1910 = vpack.c.b16 %v1906, %v1906
      %v1911 = vpack.c.b16 %v1907, %v1907
      %v1912 = vpack.c.b16 %v1908, %v1908
      %v1914 = vpack.i.b16 %v1909, %v1909
      %v1916 = vlaneseq
      %v1917 = vshrl.u32 %v1916, 7
      %v1918 = vsub.s32 3, %v1917
      %v1919 = vrot.slane %v1914, %v1918
      %v1921 = vpack.i.b16 %v1910, %v1910
      %v1923 = vlaneseq
      %v1924 = vshrl.u32 %v1923, 7
      %v1925 = vsub.s32 3, %v1924
      %v1926 = vrot.slane %v1921, %v1925
      %v1928 = vpack.i.b16 %v1911, %v1911
      %v1930 = vlaneseq
      %v1931 = vshrl.u32 %v1930, 7
      %v1932 = vsub.s32 3, %v1931
      %v1933 = vrot.slane %v1928, %v1932
      %v1935 = vpack.i.b16 %v1912, %v1912
      %v1937 = vlaneseq
      %v1938 = vshrl.u32 %v1937, 7
      %v1939 = vsub.s32 3, %v1938
      %v1940 = vrot.slane %v1935, %v1939
      %v1945 = vcombine.low %v1919, %v1926
      %v1946 = vcombine.low %v1933, %v1940
      %v1948 = vunpack.c.l.s4 1983009808
      %v1949 = vunpack.c.0.s8 %v1948
      %v1950 = vlaneseq
      %v1951 = vshrl.u32 %v1950, 7
      %v1952 = vsub.s32 %v1949, %v1951
      %v1953 = vrot.slane %v1945, %v1952
      %v1955 = vunpack.c.l.s4 1983009808
      %v1956 = vunpack.c.0.s8 %v1955
      %v1957 = vlaneseq
      %v1958 = vshrl.u32 %v1957, 7
      %v1959 = vsub.s32 %v1956, %v1958
      %v1960 = vrot.slane %v1946, %v1959
      %v1961 = vcombine.low %v1953, %v1960
      %1962 = vrot.lane.b32.xlu0 %v1961, 1
      %v1963 = vpop.permute.xlu0 %1962
      %v1964 = vrot.slane %v1963, 6
      %v1965 = vsel %vm1803, %v1964, %v1963
      %v1968 = vmul.bf16 %v1899, %v1965
      %v1969 = vmul.bf16 %v1900, %v1964
      %v1972 = vcombine.high %v1968, %v1968
      %v1974 = vunpack.c.l.s4 1983009808
      %v1975 = vunpack.c.0.s8 %v1974
      %v1976 = vlaneseq
      %v1977 = vshrl.u32 %v1976, 7
      %v1978 = vsub.s32 %v1975, %v1977
      %v1979 = vrot.slane %v1968, %v1978
      %v1981 = vunpack.c.l.s4 1983009808
      %v1982 = vunpack.c.0.s8 %v1981
      %v1983 = vlaneseq
      %v1984 = vshrl.u32 %v1983, 7
      %v1985 = vsub.s32 %v1982, %v1984
      %v1986 = vrot.slane %v1972, %v1985
      %v1988 = vunpack.c.l.s4 1983009808
      %v1989 = vunpack.c.0.s8 %v1988
      %v1990 = vlaneseq
      %v1991 = vshrl.u32 %v1990, 7
      %v1992 = vsub.s32 %v1989, %v1991
      %v1993 = vrot.slane %v1969, %v1992
      %1994 = vrot.lane.b32.xlu0 %v1979, 127
      %v1995 = vpop.permute.xlu0 %1994
      %1996 = vrot.lane.b32.xlu0 %v1986, 127
      %v1997 = vpop.permute.xlu0 %1996
      %1998 = vrot.lane.b32.xlu0 %v1993, 127
      %v1999 = vpop.permute.xlu0 %1998
      %v2000 = vrot.slane %v1995, 4
      %v2001 = vrot.slane %v1997, 4
      %v2002 = vrot.slane %v1999, 4
      %v2003 = vsel %vm412, %v2000, %v2001
      %v2004 = vsel %vm1763, %v1995, %v2003
      %v2005 = vsel %vm412, %v2001, %v2002
      %v2006 = vsel %vm1763, %v1997, %v2005
      %2009 = vst [vmem:[#allocation3 + $0x70] sm:$0x33] %v2004
      %2010 = vst [vmem:[#allocation3 + $0x78] sm:$0x33] %v2006
      %v2011 = vld [vmem:[%s300 + $0x2] sm:$0xff]
      %v2012 = vld [vmem:[%s300 + $0xa] sm:$0x3]
      %v2013 = vld [vmem:[%s7 + $0x10] sm:$0x88]
      %v2014 = vld [vmem:[%s7 + $0x18] sm:$0x88]
      %v2017 = vunpack.c.l.b16 %v2013
      %v2018 = vunpack.c.h.b16 %v2013
      %v2019 = vunpack.c.l.b16 %v2014
      %v2020 = vunpack.c.h.b16 %v2014
      %v2021 = vpack.c.b16 %v2017, %v2017
      %v2022 = vpack.c.b16 %v2018, %v2018
      %v2023 = vpack.c.b16 %v2019, %v2019
      %v2024 = vpack.c.b16 %v2020, %v2020
      %v2026 = vshrl.u32 %v2021, 16
      %v2027 = vpack.i.b16 %v2026, %v2026
      %v2029 = vlaneseq
      %v2030 = vshrl.u32 %v2029, 7
      %v2031 = vsub.s32 3, %v2030
      %v2032 = vrot.slane %v2027, %v2031
      %v2034 = vshrl.u32 %v2022, 16
      %v2035 = vpack.i.b16 %v2034, %v2034
      %v2037 = vlaneseq
      %v2038 = vshrl.u32 %v2037, 7
      %v2039 = vsub.s32 3, %v2038
      %v2040 = vrot.slane %v2035, %v2039
      %v2042 = vshrl.u32 %v2023, 16
      %v2043 = vpack.i.b16 %v2042, %v2042
      %v2045 = vlaneseq
      %v2046 = vshrl.u32 %v2045, 7
      %v2047 = vsub.s32 3, %v2046
      %v2048 = vrot.slane %v2043, %v2047
      %v2050 = vshrl.u32 %v2024, 16
      %v2051 = vpack.i.b16 %v2050, %v2050
      %v2053 = vlaneseq
      %v2054 = vshrl.u32 %v2053, 7
      %v2055 = vsub.s32 3, %v2054
      %v2056 = vrot.slane %v2051, %v2055
      %v2061 = vcombine.low %v2032, %v2040
      %v2062 = vcombine.low %v2048, %v2056
      %v2064 = vunpack.c.l.s4 1983009808
      %v2065 = vunpack.c.0.s8 %v2064
      %v2066 = vlaneseq
      %v2067 = vshrl.u32 %v2066, 7
      %v2068 = vsub.s32 %v2065, %v2067
      %v2069 = vrot.slane %v2061, %v2068
      %v2071 = vunpack.c.l.s4 1983009808
      %v2072 = vunpack.c.0.s8 %v2071
      %v2073 = vlaneseq
      %v2074 = vshrl.u32 %v2073, 7
      %v2075 = vsub.s32 %v2072, %v2074
      %v2076 = vrot.slane %v2062, %v2075
      %v2077 = vcombine.low %v2069, %v2076
      %2078 = vrot.lane.b32.xlu0 %v2077, 7
      %v2079 = vpop.permute.xlu0 %2078
      %v2080 = vrot.slane %v2079, 6
      %v2081 = vsel %vm1689, %v2080, %v2079
      %v2084 = vmul.bf16 %v2011, %v2081
      %v2085 = vmul.bf16 %v2012, %v2080
      %v2088 = vcombine.low %v2084, %v2084
      %v2090 = vunpack.c.l.s4 1983009808
      %v2091 = vunpack.c.0.s8 %v2090
      %v2092 = vlaneseq
      %v2093 = vshrl.u32 %v2092, 7
      %v2094 = vsub.s32 %v2091, %v2093
      %v2095 = vrot.slane %v2088, %v2094
      %v2097 = vunpack.c.l.s4 1983009808
      %v2098 = vunpack.c.0.s8 %v2097
      %v2099 = vlaneseq
      %v2100 = vshrl.u32 %v2099, 7
      %v2101 = vsub.s32 %v2098, %v2100
      %v2102 = vrot.slane %v2084, %v2101
      %v2103 = vcombine.low %v2085, %v2085
      %v2105 = vunpack.c.l.s4 1983009808
      %v2106 = vunpack.c.0.s8 %v2105
      %v2107 = vlaneseq
      %v2108 = vshrl.u32 %v2107, 7
      %v2109 = vsub.s32 %v2106, %v2108
      %v2110 = vrot.slane %v2103, %v2109
      %2111 = vrot.lane.b32.xlu0 %v2095, 121
      %v2112 = vpop.permute.xlu0 %2111
      %2113 = vrot.lane.b32.xlu0 %v2102, 121
      %v2114 = vpop.permute.xlu0 %2113
      %2115 = vrot.lane.b32.xlu0 %v2110, 121
      %v2116 = vpop.permute.xlu0 %2115
      %v2117 = vrot.slane %v2112, 4
      %v2118 = vrot.slane %v2114, 4
      %v2119 = vrot.slane %v2116, 4
      %v2120 = vsel %vm412, %v2117, %v2118
      %v2121 = vsel %vm1648, %v2112, %v2120
      %v2122 = vsel %vm412, %v2118, %v2119
      %v2123 = vsel %vm1648, %v2114, %v2122
      %2126 = vst [vmem:[#allocation3 + $0x70] sm:$0xcc] %v2121
      %2127 = vst [vmem:[#allocation3 + $0x78] sm:$0xcc] %v2123
      %v2128 = vld [vmem:[%s300 + $0x2] sm:$0xff]
      %v2129 = vld [vmem:[%s300 + $0xa] sm:$0x3]
      %v2130 = vld [vmem:[%s7 + $0x20] sm:$0x11]
      %v2131 = vld [vmem:[%s7 + $0x28] sm:$0x11]
      %v2134 = vunpack.c.l.b16 %v2130
      %v2135 = vunpack.c.h.b16 %v2130
      %v2136 = vunpack.c.l.b16 %v2131
      %v2137 = vunpack.c.h.b16 %v2131
      %v2138 = vpack.c.b16 %v2134, %v2134
      %v2139 = vpack.c.b16 %v2135, %v2135
      %v2140 = vpack.c.b16 %v2136, %v2136
      %v2141 = vpack.c.b16 %v2137, %v2137
      %v2143 = vpack.i.b16 %v2138, %v2138
      %v2145 = vlaneseq
      %v2146 = vshrl.u32 %v2145, 7
      %v2147 = vsub.s32 0, %v2146
      %v2148 = vrot.slane %v2143, %v2147
      %v2150 = vpack.i.b16 %v2139, %v2139
      %v2152 = vlaneseq
      %v2153 = vshrl.u32 %v2152, 7
      %v2154 = vsub.s32 0, %v2153
      %v2155 = vrot.slane %v2150, %v2154
      %v2157 = vpack.i.b16 %v2140, %v2140
      %v2159 = vlaneseq
      %v2160 = vshrl.u32 %v2159, 7
      %v2161 = vsub.s32 0, %v2160
      %v2162 = vrot.slane %v2157, %v2161
      %v2164 = vpack.i.b16 %v2141, %v2141
      %v2166 = vlaneseq
      %v2167 = vshrl.u32 %v2166, 7
      %v2168 = vsub.s32 0, %v2167
      %v2169 = vrot.slane %v2164, %v2168
      %v2174 = vcombine.low %v2148, %v2155
      %v2175 = vcombine.low %v2162, %v2169
      %v2177 = vunpack.c.l.s4 1983009808
      %v2178 = vunpack.c.0.s8 %v2177
      %v2179 = vlaneseq
      %v2180 = vshrl.u32 %v2179, 7
      %v2181 = vsub.s32 %v2178, %v2180
      %v2182 = vrot.slane %v2174, %v2181
      %v2184 = vunpack.c.l.s4 1983009808
      %v2185 = vunpack.c.0.s8 %v2184
      %v2186 = vlaneseq
      %v2187 = vshrl.u32 %v2186, 7
      %v2188 = vsub.s32 %v2185, %v2187
      %v2189 = vrot.slane %v2175, %v2188
      %v2190 = vcombine.low %v2182, %v2189
      %2191 = vrot.lane.b32.xlu0 %v2190, 8
      %v2192 = vpop.permute.xlu0 %2191
      %v2193 = vrot.slane %v2192, 6
      %v2194 = vsel %vm1570, %v2193, %v2192
      %v2197 = vmul.bf16 %v2128, %v2194
      %v2198 = vmul.bf16 %v2129, %v2193
      %v2201 = vcombine.high %v2197, %v2197
      %v2203 = vunpack.c.l.s4 1983009808
      %v2204 = vunpack.c.0.s8 %v2203
      %v2205 = vlaneseq
      %v2206 = vshrl.u32 %v2205, 7
      %v2207 = vsub.s32 %v2204, %v2206
      %v2208 = vrot.slane %v2197, %v2207
      %v2210 = vunpack.c.l.s4 1983009808
      %v2211 = vunpack.c.0.s8 %v2210
      %v2212 = vlaneseq
      %v2213 = vshrl.u32 %v2212, 7
      %v2214 = vsub.s32 %v2211, %v2213
      %v2215 = vrot.slane %v2201, %v2214
      %v2217 = vunpack.c.l.s4 1983009808
      %v2218 = vunpack.c.0.s8 %v2217
      %v2219 = vlaneseq
      %v2220 = vshrl.u32 %v2219, 7
      %v2221 = vsub.s32 %v2218, %v2220
      %v2222 = vrot.slane %v2198, %v2221
      %2223 = vrot.lane.b32.xlu0 %v2208, 120
      %v2224 = vpop.permute.xlu0 %2223
      %2225 = vrot.lane.b32.xlu0 %v2215, 120
      %v2226 = vpop.permute.xlu0 %2225
      %2227 = vrot.lane.b32.xlu0 %v2222, 120
      %v2228 = vpop.permute.xlu0 %2227
      %v2229 = vrot.slane %v2224, 4
      %v2230 = vrot.slane %v2226, 4
      %v2231 = vrot.slane %v2228, 4
      %v2232 = vsel %vm412, %v2229, %v2230
      %v2233 = vsel %vm1530, %v2224, %v2232
      %v2234 = vsel %vm412, %v2230, %v2231
      %v2235 = vsel %vm1530, %v2226, %v2234
      %2238 = vst [vmem:[#allocation3 + $0x80] sm:$0x33] %v2233
      %2239 = vst [vmem:[#allocation3 + $0x88] sm:$0x33] %v2235
      %v2240 = vld [vmem:[%s300 + $0x2] sm:$0xff]
      %v2241 = vld [vmem:[%s300 + $0xa] sm:$0x3]
      %v2242 = vld [vmem:[%s7 + $0x20] sm:$0x11]
      %v2243 = vld [vmem:[%s7 + $0x28] sm:$0x11]
      %v2246 = vunpack.c.l.b16 %v2242
      %v2247 = vunpack.c.h.b16 %v2242
      %v2248 = vunpack.c.l.b16 %v2243
      %v2249 = vunpack.c.h.b16 %v2243
      %v2250 = vpack.c.b16 %v2246, %v2246
      %v2251 = vpack.c.b16 %v2247, %v2247
      %v2252 = vpack.c.b16 %v2248, %v2248
      %v2253 = vpack.c.b16 %v2249, %v2249
      %v2255 = vshrl.u32 %v2250, 16
      %v2256 = vpack.i.b16 %v2255, %v2255
      %v2258 = vlaneseq
      %v2259 = vshrl.u32 %v2258, 7
      %v2260 = vsub.s32 0, %v2259
      %v2261 = vrot.slane %v2256, %v2260
      %v2263 = vshrl.u32 %v2251, 16
      %v2264 = vpack.i.b16 %v2263, %v2263
      %v2266 = vlaneseq
      %v2267 = vshrl.u32 %v2266, 7
      %v2268 = vsub.s32 0, %v2267
      %v2269 = vrot.slane %v2264, %v2268
      %v2271 = vshrl.u32 %v2252, 16
      %v2272 = vpack.i.b16 %v2271, %v2271
      %v2274 = vlaneseq
      %v2275 = vshrl.u32 %v2274, 7
      %v2276 = vsub.s32 0, %v2275
      %v2277 = vrot.slane %v2272, %v2276
      %v2279 = vshrl.u32 %v2253, 16
      %v2280 = vpack.i.b16 %v2279, %v2279
      %v2282 = vlaneseq
      %v2283 = vshrl.u32 %v2282, 7
      %v2284 = vsub.s32 0, %v2283
      %v2285 = vrot.slane %v2280, %v2284
      %v2290 = vcombine.low %v2261, %v2269
      %v2291 = vcombine.low %v2277, %v2285
      %v2293 = vunpack.c.l.s4 1983009808
      %v2294 = vunpack.c.0.s8 %v2293
      %v2295 = vlaneseq
      %v2296 = vshrl.u32 %v2295, 7
      %v2297 = vsub.s32 %v2294, %v2296
      %v2298 = vrot.slane %v2290, %v2297
      %v2300 = vunpack.c.l.s4 1983009808
      %v2301 = vunpack.c.0.s8 %v2300
      %v2302 = vlaneseq
      %v2303 = vshrl.u32 %v2302, 7
      %v2304 = vsub.s32 %v2301, %v2303
      %v2305 = vrot.slane %v2291, %v2304
      %v2306 = vcombine.low %v2298, %v2305
      %2307 = vrot.lane.b32.xlu0 %v2306, 9
      %v2308 = vpop.permute.xlu0 %2307
      %v2309 = vrot.slane %v2308, 6
      %v2310 = vsel %vm1456, %v2309, %v2308
      %v2313 = vmul.bf16 %v2240, %v2310
      %v2314 = vmul.bf16 %v2241, %v2309
      %v2317 = vcombine.low %v2313, %v2313
      %v2319 = vunpack.c.l.s4 1983009808
      %v2320 = vunpack.c.0.s8 %v2319
      %v2321 = vlaneseq
      %v2322 = vshrl.u32 %v2321, 7
      %v2323 = vsub.s32 %v2320, %v2322
      %v2324 = vrot.slane %v2317, %v2323
      %v2326 = vunpack.c.l.s4 1983009808
      %v2327 = vunpack.c.0.s8 %v2326
      %v2328 = vlaneseq
      %v2329 = vshrl.u32 %v2328, 7
      %v2330 = vsub.s32 %v2327, %v2329
      %v2331 = vrot.slane %v2313, %v2330
      %v2332 = vcombine.low %v2314, %v2314
      %v2334 = vunpack.c.l.s4 1983009808
      %v2335 = vunpack.c.0.s8 %v2334
      %v2336 = vlaneseq
      %v2337 = vshrl.u32 %v2336, 7
      %v2338 = vsub.s32 %v2335, %v2337
      %v2339 = vrot.slane %v2332, %v2338
      %2340 = vrot.lane.b32.xlu0 %v2324, 119
      %v2341 = vpop.permute.xlu0 %2340
      %2342 = vrot.lane.b32.xlu0 %v2331, 119
      %v2343 = vpop.permute.xlu0 %2342
      %2344 = vrot.lane.b32.xlu0 %v2339, 119
      %v2345 = vpop.permute.xlu0 %2344
      %v2346 = vrot.slane %v2341, 4
      %v2347 = vrot.slane %v2343, 4
      %v2348 = vrot.slane %v2345, 4
      %v2349 = vsel %vm412, %v2346, %v2347
      %v2350 = vsel %vm1415, %v2341, %v2349
      %v2351 = vsel %vm412, %v2347, %v2348
      %v2352 = vsel %vm1415, %v2343, %v2351
      %2355 = vst [vmem:[#allocation3 + $0x80] sm:$0xcc] %v2350
      %2356 = vst [vmem:[#allocation3 + $0x88] sm:$0xcc] %v2352
      %v2357 = vld [vmem:[%s300 + $0x2] sm:$0xff]
      %v2358 = vld [vmem:[%s300 + $0xa] sm:$0x3]
      %v2359 = vld [vmem:[%s7 + $0x20] sm:$0x22]
      %v2360 = vld [vmem:[%s7 + $0x28] sm:$0x22]
      %v2363 = vunpack.c.l.b16 %v2359
      %v2364 = vunpack.c.h.b16 %v2359
      %v2365 = vunpack.c.l.b16 %v2360
      %v2366 = vunpack.c.h.b16 %v2360
      %v2367 = vpack.c.b16 %v2363, %v2363
      %v2368 = vpack.c.b16 %v2364, %v2364
      %v2369 = vpack.c.b16 %v2365, %v2365
      %v2370 = vpack.c.b16 %v2366, %v2366
      %v2372 = vpack.i.b16 %v2367, %v2367
      %v2374 = vlaneseq
      %v2375 = vshrl.u32 %v2374, 7
      %v2376 = vsub.s32 1, %v2375
      %v2377 = vrot.slane %v2372, %v2376
      %v2379 = vpack.i.b16 %v2368, %v2368
      %v2381 = vlaneseq
      %v2382 = vshrl.u32 %v2381, 7
      %v2383 = vsub.s32 1, %v2382
      %v2384 = vrot.slane %v2379, %v2383
      %v2386 = vpack.i.b16 %v2369, %v2369
      %v2388 = vlaneseq
      %v2389 = vshrl.u32 %v2388, 7
      %v2390 = vsub.s32 1, %v2389
      %v2391 = vrot.slane %v2386, %v2390
      %v2393 = vpack.i.b16 %v2370, %v2370
      %v2395 = vlaneseq
      %v2396 = vshrl.u32 %v2395, 7
      %v2397 = vsub.s32 1, %v2396
      %v2398 = vrot.slane %v2393, %v2397
      %v2403 = vcombine.low %v2377, %v2384
      %v2404 = vcombine.low %v2391, %v2398
      %v2406 = vunpack.c.l.s4 1983009808
      %v2407 = vunpack.c.0.s8 %v2406
      %v2408 = vlaneseq
      %v2409 = vshrl.u32 %v2408, 7
      %v2410 = vsub.s32 %v2407, %v2409
      %v2411 = vrot.slane %v2403, %v2410
      %v2413 = vunpack.c.l.s4 1983009808
      %v2414 = vunpack.c.0.s8 %v2413
      %v2415 = vlaneseq
      %v2416 = vshrl.u32 %v2415, 7
      %v2417 = vsub.s32 %v2414, %v2416
      %v2418 = vrot.slane %v2404, %v2417
      %v2419 = vcombine.low %v2411, %v2418
      %2420 = vrot.lane.b32.xlu0 %v2419, 55
      %v2421 = vpop.permute.xlu0 %2420
      %v2422 = vrot.slane %v2421, 6
      %v2423 = vsel %vm373, %v2422, %v2421
      %v2426 = vmul.bf16 %v2357, %v2423
      %v2427 = vmul.bf16 %v2358, %v2422
      %v2430 = vcombine.high %v2426, %v2426
      %v2432 = vunpack.c.l.s4 1983009808
      %v2433 = vunpack.c.0.s8 %v2432
      %v2434 = vlaneseq
      %v2435 = vshrl.u32 %v2434, 7
      %v2436 = vsub.s32 %v2433, %v2435
      %v2437 = vrot.slane %v2426, %v2436
      %v2439 = vunpack.c.l.s4 1983009808
      %v2440 = vunpack.c.0.s8 %v2439
      %v2441 = vlaneseq
      %v2442 = vshrl.u32 %v2441, 7
      %v2443 = vsub.s32 %v2440, %v2442
      %v2444 = vrot.slane %v2430, %v2443
      %v2446 = vunpack.c.l.s4 1983009808
      %v2447 = vunpack.c.0.s8 %v2446
      %v2448 = vlaneseq
      %v2449 = vshrl.u32 %v2448, 7
      %v2450 = vsub.s32 %v2447, %v2449
      %v2451 = vrot.slane %v2427, %v2450
      %2452 = vrot.lane.b32.xlu0 %v2437, 73
      %v2453 = vpop.permute.xlu0 %2452
      %2454 = vrot.lane.b32.xlu0 %v2444, 73
      %v2455 = vpop.permute.xlu0 %2454
      %2456 = vrot.lane.b32.xlu0 %v2451, 73
      %v2457 = vpop.permute.xlu0 %2456
      %v2458 = vrot.slane %v2453, 4
      %v2459 = vrot.slane %v2455, 4
      %v2460 = vrot.slane %v2457, 4
      %v2461 = vsel %vm412, %v2458, %v2459
      %v2462 = vsel %vm414, %v2453, %v2461
      %v2463 = vsel %vm412, %v2459, %v2460
      %v2464 = vsel %vm414, %v2455, %v2463
      %2467 = vst [vmem:[#allocation3 + $0x90] sm:$0x33] %v2462
      %2468 = vst [vmem:[#allocation3 + $0x98] sm:$0x33] %v2464
      %v2469 = vld [vmem:[%s300 + $0x2] sm:$0xff]
      %v2470 = vld [vmem:[%s300 + $0xa] sm:$0x3]
      %v2471 = vld [vmem:[%s7 + $0x20] sm:$0x22]
      %v2472 = vld [vmem:[%s7 + $0x28] sm:$0x22]
      %v2475 = vunpack.c.l.b16 %v2471
      %v2476 = vunpack.c.h.b16 %v2471
      %v2477 = vunpack.c.l.b16 %v2472
      %v2478 = vunpack.c.h.b16 %v2472
      %v2479 = vpack.c.b16 %v2475, %v2475
      %v2480 = vpack.c.b16 %v2476, %v2476
      %v2481 = vpack.c.b16 %v2477, %v2477
      %v2482 = vpack.c.b16 %v2478, %v2478
      %v2484 = vshrl.u32 %v2479, 16
      %v2485 = vpack.i.b16 %v2484, %v2484
      %v2487 = vlaneseq
      %v2488 = vshrl.u32 %v2487, 7
      %v2489 = vsub.s32 1, %v2488
      %v2490 = vrot.slane %v2485, %v2489
      %v2492 = vshrl.u32 %v2480, 16
      %v2493 = vpack.i.b16 %v2492, %v2492
      %v2495 = vlaneseq
      %v2496 = vshrl.u32 %v2495, 7
      %v2497 = vsub.s32 1, %v2496
      %v2498 = vrot.slane %v2493, %v2497
      %v2500 = vshrl.u32 %v2481, 16
      %v2501 = vpack.i.b16 %v2500, %v2500
      %v2503 = vlaneseq
      %v2504 = vshrl.u32 %v2503, 7
      %v2505 = vsub.s32 1, %v2504
      %v2506 = vrot.slane %v2501, %v2505
      %v2508 = vshrl.u32 %v2482, 16
      %v2509 = vpack.i.b16 %v2508, %v2508
      %v2511 = vlaneseq
      %v2512 = vshrl.u32 %v2511, 7
      %v2513 = vsub.s32 1, %v2512
      %v2514 = vrot.slane %v2509, %v2513
      %v2519 = vcombine.low %v2490, %v2498
      %v2520 = vcombine.low %v2506, %v2514
      %v2522 = vunpack.c.l.s4 1983009808
      %v2523 = vunpack.c.0.s8 %v2522
      %v2524 = vlaneseq
      %v2525 = vshrl.u32 %v2524, 7
      %v2526 = vsub.s32 %v2523, %v2525
      %v2527 = vrot.slane %v2519, %v2526
      %v2529 = vunpack.c.l.s4 1983009808
      %v2530 = vunpack.c.0.s8 %v2529
      %v2531 = vlaneseq
      %v2532 = vshrl.u32 %v2531, 7
      %v2533 = vsub.s32 %v2530, %v2532
      %v2534 = vrot.slane %v2520, %v2533
      %v2535 = vcombine.low %v2527, %v2534
      %2536 = vrot.lane.b32.xlu0 %v2535, 56
      %v2537 = vpop.permute.xlu0 %2536
      %v2538 = vrot.slane %v2537, 6
      %v2539 = vsel %vm492, %v2538, %v2537
      %v2542 = vmul.bf16 %v2469, %v2539
      %v2543 = vmul.bf16 %v2470, %v2538
      %v2546 = vcombine.low %v2542, %v2542
      %v2548 = vunpack.c.l.s4 1983009808
      %v2549 = vunpack.c.0.s8 %v2548
      %v2550 = vlaneseq
      %v2551 = vshrl.u32 %v2550, 7
      %v2552 = vsub.s32 %v2549, %v2551
      %v2553 = vrot.slane %v2546, %v2552
      %v2555 = vunpack.c.l.s4 1983009808
      %v2556 = vunpack.c.0.s8 %v2555
      %v2557 = vlaneseq
      %v2558 = vshrl.u32 %v2557, 7
      %v2559 = vsub.s32 %v2556, %v2558
      %v2560 = vrot.slane %v2542, %v2559
      %v2561 = vcombine.low %v2543, %v2543
      %v2563 = vunpack.c.l.s4 1983009808
      %v2564 = vunpack.c.0.s8 %v2563
      %v2565 = vlaneseq
      %v2566 = vshrl.u32 %v2565, 7
      %v2567 = vsub.s32 %v2564, %v2566
      %v2568 = vrot.slane %v2561, %v2567
      %2569 = vrot.lane.b32.xlu0 %v2553, 72
      %v2570 = vpop.permute.xlu0 %2569
      %2571 = vrot.lane.b32.xlu0 %v2560, 72
      %v2572 = vpop.permute.xlu0 %2571
      %2573 = vrot.lane.b32.xlu0 %v2568, 72
      %v2574 = vpop.permute.xlu0 %2573
      %v2575 = vrot.slane %v2570, 4
      %v2576 = vrot.slane %v2572, 4
      %v2577 = vrot.slane %v2574, 4
      %v2578 = vsel %vm412, %v2575, %v2576
      %v2579 = vsel %vm533, %v2570, %v2578
      %v2580 = vsel %vm412, %v2576, %v2577
      %v2581 = vsel %vm533, %v2572, %v2580
      %2584 = vst [vmem:[#allocation3 + $0x90] sm:$0xcc] %v2579
      %2585 = vst [vmem:[#allocation3 + $0x98] sm:$0xcc] %v2581
      %v2586 = vld [vmem:[%s300 + $0x2] sm:$0xff]
      %v2587 = vld [vmem:[%s300 + $0xa] sm:$0x3]
      %v2588 = vld [vmem:[%s7 + $0x20] sm:$0x44]
      %v2589 = vld [vmem:[%s7 + $0x28] sm:$0x44]
      %v2592 = vunpack.c.l.b16 %v2588
      %v2593 = vunpack.c.h.b16 %v2588
      %v2594 = vunpack.c.l.b16 %v2589
      %v2595 = vunpack.c.h.b16 %v2589
      %v2596 = vpack.c.b16 %v2592, %v2592
      %v2597 = vpack.c.b16 %v2593, %v2593
      %v2598 = vpack.c.b16 %v2594, %v2594
      %v2599 = vpack.c.b16 %v2595, %v2595
      %v2601 = vpack.i.b16 %v2596, %v2596
      %v2603 = vlaneseq
      %v2604 = vshrl.u32 %v2603, 7
      %v2605 = vsub.s32 2, %v2604
      %v2606 = vrot.slane %v2601, %v2605
      %v2608 = vpack.i.b16 %v2597, %v2597
      %v2610 = vlaneseq
      %v2611 = vshrl.u32 %v2610, 7
      %v2612 = vsub.s32 2, %v2611
      %v2613 = vrot.slane %v2608, %v2612
      %v2615 = vpack.i.b16 %v2598, %v2598
      %v2617 = vlaneseq
      %v2618 = vshrl.u32 %v2617, 7
      %v2619 = vsub.s32 2, %v2618
      %v2620 = vrot.slane %v2615, %v2619
      %v2622 = vpack.i.b16 %v2599, %v2599
      %v2624 = vlaneseq
      %v2625 = vshrl.u32 %v2624, 7
      %v2626 = vsub.s32 2, %v2625
      %v2627 = vrot.slane %v2622, %v2626
      %v2632 = vcombine.low %v2606, %v2613
      %v2633 = vcombine.low %v2620, %v2627
      %v2635 = vunpack.c.l.s4 1983009808
      %v2636 = vunpack.c.0.s8 %v2635
      %v2637 = vlaneseq
      %v2638 = vshrl.u32 %v2637, 7
      %v2639 = vsub.s32 %v2636, %v2638
      %v2640 = vrot.slane %v2632, %v2639
      %v2642 = vunpack.c.l.s4 1983009808
      %v2643 = vunpack.c.0.s8 %v2642
      %v2644 = vlaneseq
      %v2645 = vshrl.u32 %v2644, 7
      %v2646 = vsub.s32 %v2643, %v2645
      %v2647 = vrot.slane %v2633, %v2646
      %v2648 = vcombine.low %v2640, %v2647
      %2649 = vrot.lane.b32.xlu0 %v2648, 57
      %v2650 = vpop.permute.xlu0 %2649
      %v2651 = vrot.slane %v2650, 6
      %v2652 = vsel %vm607, %v2651, %v2650
      %v2655 = vmul.bf16 %v2586, %v2652
      %v2656 = vmul.bf16 %v2587, %v2651
      %v2659 = vcombine.high %v2655, %v2655
      %v2661 = vunpack.c.l.s4 1983009808
      %v2662 = vunpack.c.0.s8 %v2661
      %v2663 = vlaneseq
      %v2664 = vshrl.u32 %v2663, 7
      %v2665 = vsub.s32 %v2662, %v2664
      %v2666 = vrot.slane %v2655, %v2665
      %v2668 = vunpack.c.l.s4 1983009808
      %v2669 = vunpack.c.0.s8 %v2668
      %v2670 = vlaneseq
      %v2671 = vshrl.u32 %v2670, 7
      %v2672 = vsub.s32 %v2669, %v2671
      %v2673 = vrot.slane %v2659, %v2672
      %v2675 = vunpack.c.l.s4 1983009808
      %v2676 = vunpack.c.0.s8 %v2675
      %v2677 = vlaneseq
      %v2678 = vshrl.u32 %v2677, 7
      %v2679 = vsub.s32 %v2676, %v2678
      %v2680 = vrot.slane %v2656, %v2679
      %2681 = vrot.lane.b32.xlu0 %v2666, 71
      %v2682 = vpop.permute.xlu0 %2681
      %2683 = vrot.lane.b32.xlu0 %v2673, 71
      %v2684 = vpop.permute.xlu0 %2683
      %2685 = vrot.lane.b32.xlu0 %v2680, 71
      %v2686 = vpop.permute.xlu0 %2685
      %v2687 = vrot.slane %v2682, 4
      %v2688 = vrot.slane %v2684, 4
      %v2689 = vrot.slane %v2686, 4
      %v2690 = vsel %vm412, %v2687, %v2688
      %v2691 = vsel %vm647, %v2682, %v2690
      %v2692 = vsel %vm412, %v2688, %v2689
      %v2693 = vsel %vm647, %v2684, %v2692
      %2696 = vst [vmem:[#allocation3 + $0xa0] sm:$0x33] %v2691
      %2697 = vst [vmem:[#allocation3 + $0xa8] sm:$0x33] %v2693
      %v2698 = vld [vmem:[%s300 + $0x2] sm:$0xff]
      %v2699 = vld [vmem:[%s300 + $0xa] sm:$0x3]
      %v2700 = vld [vmem:[%s7 + $0x20] sm:$0x44]
      %v2701 = vld [vmem:[%s7 + $0x28] sm:$0x44]
      %v2704 = vunpack.c.l.b16 %v2700
      %v2705 = vunpack.c.h.b16 %v2700
      %v2706 = vunpack.c.l.b16 %v2701
      %v2707 = vunpack.c.h.b16 %v2701
      %v2708 = vpack.c.b16 %v2704, %v2704
      %v2709 = vpack.c.b16 %v2705, %v2705
      %v2710 = vpack.c.b16 %v2706, %v2706
      %v2711 = vpack.c.b16 %v2707, %v2707
      %v2713 = vshrl.u32 %v2708, 16
      %v2714 = vpack.i.b16 %v2713, %v2713
      %v2716 = vlaneseq
      %v2717 = vshrl.u32 %v2716, 7
      %v2718 = vsub.s32 2, %v2717
      %v2719 = vrot.slane %v2714, %v2718
      %v2721 = vshrl.u32 %v2709, 16
      %v2722 = vpack.i.b16 %v2721, %v2721
      %v2724 = vlaneseq
      %v2725 = vshrl.u32 %v2724, 7
      %v2726 = vsub.s32 2, %v2725
      %v2727 = vrot.slane %v2722, %v2726
      %v2729 = vshrl.u32 %v2710, 16
      %v2730 = vpack.i.b16 %v2729, %v2729
      %v2732 = vlaneseq
      %v2733 = vshrl.u32 %v2732, 7
      %v2734 = vsub.s32 2, %v2733
      %v2735 = vrot.slane %v2730, %v2734
      %v2737 = vshrl.u32 %v2711, 16
      %v2738 = vpack.i.b16 %v2737, %v2737
      %v2740 = vlaneseq
      %v2741 = vshrl.u32 %v2740, 7
      %v2742 = vsub.s32 2, %v2741
      %v2743 = vrot.slane %v2738, %v2742
      %v2748 = vcombine.low %v2719, %v2727
      %v2749 = vcombine.low %v2735, %v2743
      %v2751 = vunpack.c.l.s4 1983009808
      %v2752 = vunpack.c.0.s8 %v2751
      %v2753 = vlaneseq
      %v2754 = vshrl.u32 %v2753, 7
      %v2755 = vsub.s32 %v2752, %v2754
      %v2756 = vrot.slane %v2748, %v2755
      %v2758 = vunpack.c.l.s4 1983009808
      %v2759 = vunpack.c.0.s8 %v2758
      %v2760 = vlaneseq
      %v2761 = vshrl.u32 %v2760, 7
      %v2762 = vsub.s32 %v2759, %v2761
      %v2763 = vrot.slane %v2749, %v2762
      %v2764 = vcombine.low %v2756, %v2763
      %2765 = vrot.lane.b32.xlu0 %v2764, 63
      %v2766 = vpop.permute.xlu0 %2765
      %v2767 = vrot.slane %v2766, 6
      %v2768 = vsel %vm725, %v2767, %v2766
      %v2771 = vmul.bf16 %v2698, %v2768
      %v2772 = vmul.bf16 %v2699, %v2767
      %v2775 = vcombine.low %v2771, %v2771
      %v2777 = vunpack.c.l.s4 1983009808
      %v2778 = vunpack.c.0.s8 %v2777
      %v2779 = vlaneseq
      %v2780 = vshrl.u32 %v2779, 7
      %v2781 = vsub.s32 %v2778, %v2780
      %v2782 = vrot.slane %v2775, %v2781
      %v2784 = vunpack.c.l.s4 1983009808
      %v2785 = vunpack.c.0.s8 %v2784
      %v2786 = vlaneseq
      %v2787 = vshrl.u32 %v2786, 7
      %v2788 = vsub.s32 %v2785, %v2787
      %v2789 = vrot.slane %v2771, %v2788
      %v2790 = vcombine.low %v2772, %v2772
      %v2792 = vunpack.c.l.s4 1983009808
      %v2793 = vunpack.c.0.s8 %v2792
      %v2794 = vlaneseq
      %v2795 = vshrl.u32 %v2794, 7
      %v2796 = vsub.s32 %v2793, %v2795
      %v2797 = vrot.slane %v2790, %v2796
      %2798 = vrot.lane.b32.xlu0 %v2782, 65
      %v2799 = vpop.permute.xlu0 %2798
      %2800 = vrot.lane.b32.xlu0 %v2789, 65
      %v2801 = vpop.permute.xlu0 %2800
      %2802 = vrot.lane.b32.xlu0 %v2797, 65
      %v2803 = vpop.permute.xlu0 %2802
      %v2804 = vrot.slane %v2799, 4
      %v2805 = vrot.slane %v2801, 4
      %v2806 = vrot.slane %v2803, 4
      %v2807 = vsel %vm412, %v2804, %v2805
      %v2808 = vsel %vm766, %v2799, %v2807
      %v2809 = vsel %vm412, %v2805, %v2806
      %v2810 = vsel %vm766, %v2801, %v2809
      %2813 = vst [vmem:[#allocation3 + $0xa0] sm:$0xcc] %v2808
      %2814 = vst [vmem:[#allocation3 + $0xa8] sm:$0xcc] %v2810
      %v2815 = vld [vmem:[%s300 + $0x2] sm:$0xff]
      %v2816 = vld [vmem:[%s300 + $0xa] sm:$0x3]
      %v2817 = vld [vmem:[%s7 + $0x20] sm:$0x88]
      %v2818 = vld [vmem:[%s7 + $0x28] sm:$0x88]
      %v2821 = vunpack.c.l.b16 %v2817
      %v2822 = vunpack.c.h.b16 %v2817
      %v2823 = vunpack.c.l.b16 %v2818
      %v2824 = vunpack.c.h.b16 %v2818
      %v2825 = vpack.c.b16 %v2821, %v2821
      %v2826 = vpack.c.b16 %v2822, %v2822
      %v2827 = vpack.c.b16 %v2823, %v2823
      %v2828 = vpack.c.b16 %v2824, %v2824
      %v2830 = vpack.i.b16 %v2825, %v2825
      %v2832 = vlaneseq
      %v2833 = vshrl.u32 %v2832, 7
      %v2834 = vsub.s32 3, %v2833
      %v2835 = vrot.slane %v2830, %v2834
      %v2837 = vpack.i.b16 %v2826, %v2826
      %v2839 = vlaneseq
      %v2840 = vshrl.u32 %v2839, 7
      %v2841 = vsub.s32 3, %v2840
      %v2842 = vrot.slane %v2837, %v2841
      %v2844 = vpack.i.b16 %v2827, %v2827
      %v2846 = vlaneseq
      %v2847 = vshrl.u32 %v2846, 7
      %v2848 = vsub.s32 3, %v2847
      %v2849 = vrot.slane %v2844, %v2848
      %v2851 = vpack.i.b16 %v2828, %v2828
      %v2853 = vlaneseq
      %v2854 = vshrl.u32 %v2853, 7
      %v2855 = vsub.s32 3, %v2854
      %v2856 = vrot.slane %v2851, %v2855
      %v2861 = vcombine.low %v2835, %v2842
      %v2862 = vcombine.low %v2849, %v2856
      %v2864 = vunpack.c.l.s4 1983009808
      %v2865 = vunpack.c.0.s8 %v2864
      %v2866 = vlaneseq
      %v2867 = vshrl.u32 %v2866, 7
      %v2868 = vsub.s32 %v2865, %v2867
      %v2869 = vrot.slane %v2861, %v2868
      %v2871 = vunpack.c.l.s4 1983009808
      %v2872 = vunpack.c.0.s8 %v2871
      %v2873 = vlaneseq
      %v2874 = vshrl.u32 %v2873, 7
      %v2875 = vsub.s32 %v2872, %v2874
      %v2876 = vrot.slane %v2862, %v2875
      %v2877 = vcombine.low %v2869, %v2876
      %2878 = vrot.lane.b32.xlu0 %v2877, 64
      %v2879 = vpop.permute.xlu0 %2878
      %v2880 = vrot.slane %v2879, 6
      %v2881 = vsel %vm840, %v2880, %v2879
      %v2884 = vmul.bf16 %v2815, %v2881
      %v2885 = vmul.bf16 %v2816, %v2880
      %v2888 = vcombine.high %v2884, %v2884
      %v2890 = vunpack.c.l.s4 1983009808
      %v2891 = vunpack.c.0.s8 %v2890
      %v2892 = vlaneseq
      %v2893 = vshrl.u32 %v2892, 7
      %v2894 = vsub.s32 %v2891, %v2893
      %v2895 = vrot.slane %v2884, %v2894
      %v2897 = vunpack.c.l.s4 1983009808
      %v2898 = vunpack.c.0.s8 %v2897
      %v2899 = vlaneseq
      %v2900 = vshrl.u32 %v2899, 7
      %v2901 = vsub.s32 %v2898, %v2900
      %v2902 = vrot.slane %v2888, %v2901
      %v2904 = vunpack.c.l.s4 1983009808
      %v2905 = vunpack.c.0.s8 %v2904
      %v2906 = vlaneseq
      %v2907 = vshrl.u32 %v2906, 7
      %v2908 = vsub.s32 %v2905, %v2907
      %v2909 = vrot.slane %v2885, %v2908
      %2910 = vrot.lane.b32.xlu0 %v2895, 64
      %v2911 = vpop.permute.xlu0 %2910
      %2912 = vrot.lane.b32.xlu0 %v2902, 64
      %v2913 = vpop.permute.xlu0 %2912
      %2914 = vrot.lane.b32.xlu0 %v2909, 64
      %v2915 = vpop.permute.xlu0 %2914
      %v2916 = vrot.slane %v2911, 4
      %v2917 = vrot.slane %v2913, 4
      %v2918 = vrot.slane %v2915, 4
      %v2919 = vsel %vm412, %v2916, %v2917
      %v2920 = vsel %vm840, %v2911, %v2919
      %v2921 = vsel %vm412, %v2917, %v2918
      %v2922 = vsel %vm840, %v2913, %v2921
      %2925 = vst [vmem:[#allocation3 + $0xb0] sm:$0x33] %v2920
      %2926 = vst [vmem:[#allocation3 + $0xb8] sm:$0x33] %v2922
      %v2927 = vld [vmem:[%s300 + $0x2] sm:$0xff]
      %v2928 = vld [vmem:[%s300 + $0xa] sm:$0x3]
      %v2929 = vld [vmem:[%s7 + $0x20] sm:$0x88]
      %v2930 = vld [vmem:[%s7 + $0x28] sm:$0x88]
      %v2933 = vunpack.c.l.b16 %v2929
      %v2934 = vunpack.c.h.b16 %v2929
      %v2935 = vunpack.c.l.b16 %v2930
      %v2936 = vunpack.c.h.b16 %v2930
      %v2937 = vpack.c.b16 %v2933, %v2933
      %v2938 = vpack.c.b16 %v2934, %v2934
      %v2939 = vpack.c.b16 %v2935, %v2935
      %v2940 = vpack.c.b16 %v2936, %v2936
      %v2942 = vshrl.u32 %v2937, 16
      %v2943 = vpack.i.b16 %v2942, %v2942
      %v2945 = vlaneseq
      %v2946 = vshrl.u32 %v2945, 7
      %v2947 = vsub.s32 3, %v2946
      %v2948 = vrot.slane %v2943, %v2947
      %v2950 = vshrl.u32 %v2938, 16
      %v2951 = vpack.i.b16 %v2950, %v2950
      %v2953 = vlaneseq
      %v2954 = vshrl.u32 %v2953, 7
      %v2955 = vsub.s32 3, %v2954
      %v2956 = vrot.slane %v2951, %v2955
      %v2958 = vshrl.u32 %v2939, 16
      %v2959 = vpack.i.b16 %v2958, %v2958
      %v2961 = vlaneseq
      %v2962 = vshrl.u32 %v2961, 7
      %v2963 = vsub.s32 3, %v2962
      %v2964 = vrot.slane %v2959, %v2963
      %v2966 = vshrl.u32 %v2940, 16
      %v2967 = vpack.i.b16 %v2966, %v2966
      %v2969 = vlaneseq
      %v2970 = vshrl.u32 %v2969, 7
      %v2971 = vsub.s32 3, %v2970
      %v2972 = vrot.slane %v2967, %v2971
      %v2977 = vcombine.low %v2948, %v2956
      %v2978 = vcombine.low %v2964, %v2972
      %v2980 = vunpack.c.l.s4 1983009808
      %v2981 = vunpack.c.0.s8 %v2980
      %v2982 = vlaneseq
      %v2983 = vshrl.u32 %v2982, 7
      %v2984 = vsub.s32 %v2981, %v2983
      %v2985 = vrot.slane %v2977, %v2984
      %v2987 = vunpack.c.l.s4 1983009808
      %v2988 = vunpack.c.0.s8 %v2987
      %v2989 = vlaneseq
      %v2990 = vshrl.u32 %v2989, 7
      %v2991 = vsub.s32 %v2988, %v2990
      %v2992 = vrot.slane %v2978, %v2991
      %v2993 = vcombine.low %v2985, %v2992
      %2994 = vrot.lane.b32.xlu0 %v2993, 65
      %v2995 = vpop.permute.xlu0 %2994
      %v2996 = vrot.slane %v2995, 6
      %v2997 = vsel %vm766, %v2996, %v2995
      %v3000 = vmul.bf16 %v2927, %v2997
      %v3001 = vmul.bf16 %v2928, %v2996
      %v3004 = vcombine.low %v3000, %v3000
      %v3006 = vunpack.c.l.s4 1983009808
      %v3007 = vunpack.c.0.s8 %v3006
      %v3008 = vlaneseq
      %v3009 = vshrl.u32 %v3008, 7
      %v3010 = vsub.s32 %v3007, %v3009
      %v3011 = vrot.slane %v3004, %v3010
      %v3013 = vunpack.c.l.s4 1983009808
      %v3014 = vunpack.c.0.s8 %v3013
      %v3015 = vlaneseq
      %v3016 = vshrl.u32 %v3015, 7
      %v3017 = vsub.s32 %v3014, %v3016
      %v3018 = vrot.slane %v3000, %v3017
      %v3019 = vcombine.low %v3001, %v3001
      %v3021 = vunpack.c.l.s4 1983009808
      %v3022 = vunpack.c.0.s8 %v3021
      %v3023 = vlaneseq
      %v3024 = vshrl.u32 %v3023, 7
      %v3025 = vsub.s32 %v3022, %v3024
      %v3026 = vrot.slane %v3019, %v3025
      %3027 = vrot.lane.b32.xlu0 %v3011, 63
      %v3028 = vpop.permute.xlu0 %3027
      %3029 = vrot.lane.b32.xlu0 %v3018, 63
      %v3030 = vpop.permute.xlu0 %3029
      %3031 = vrot.lane.b32.xlu0 %v3026, 63
      %v3032 = vpop.permute.xlu0 %3031
      %v3033 = vrot.slane %v3028, 4
      %v3034 = vrot.slane %v3030, 4
      %v3035 = vrot.slane %v3032, 4
      %v3036 = vsel %vm412, %v3033, %v3034
      %v3037 = vsel %vm725, %v3028, %v3036
      %v3038 = vsel %vm412, %v3034, %v3035
      %v3039 = vsel %vm725, %v3030, %v3038
      %3042 = vst [vmem:[#allocation3 + $0xb0] sm:$0xcc] %v3037
      %3043 = vst [vmem:[#allocation3 + $0xb8] sm:$0xcc] %v3039
      %v3044 = vld [vmem:[%s300 + $0x2] sm:$0xff]
      %v3045 = vld [vmem:[%s300 + $0xa] sm:$0x3]
      %v3046 = vld [vmem:[%s7 + $0x30] sm:$0x11]
      %v3047 = vld [vmem:[%s7 + $0x38] sm:$0x11]
      %v3050 = vunpack.c.l.b16 %v3046
      %v3051 = vunpack.c.h.b16 %v3046
      %v3052 = vunpack.c.l.b16 %v3047
      %v3053 = vunpack.c.h.b16 %v3047
      %v3054 = vpack.c.b16 %v3050, %v3050
      %v3055 = vpack.c.b16 %v3051, %v3051
      %v3056 = vpack.c.b16 %v3052, %v3052
      %v3057 = vpack.c.b16 %v3053, %v3053
      %v3059 = vpack.i.b16 %v3054, %v3054
      %v3061 = vlaneseq
      %v3062 = vshrl.u32 %v3061, 7
      %v3063 = vsub.s32 0, %v3062
      %v3064 = vrot.slane %v3059, %v3063
      %v3066 = vpack.i.b16 %v3055, %v3055
      %v3068 = vlaneseq
      %v3069 = vshrl.u32 %v3068, 7
      %v3070 = vsub.s32 0, %v3069
      %v3071 = vrot.slane %v3066, %v3070
      %v3073 = vpack.i.b16 %v3056, %v3056
      %v3075 = vlaneseq
      %v3076 = vshrl.u32 %v3075, 7
      %v3077 = vsub.s32 0, %v3076
      %v3078 = vrot.slane %v3073, %v3077
      %v3080 = vpack.i.b16 %v3057, %v3057
      %v3082 = vlaneseq
      %v3083 = vshrl.u32 %v3082, 7
      %v3084 = vsub.s32 0, %v3083
      %v3085 = vrot.slane %v3080, %v3084
      %v3090 = vcombine.low %v3064, %v3071
      %v3091 = vcombine.low %v3078, %v3085
      %v3093 = vunpack.c.l.s4 1983009808
      %v3094 = vunpack.c.0.s8 %v3093
      %v3095 = vlaneseq
      %v3096 = vshrl.u32 %v3095, 7
      %v3097 = vsub.s32 %v3094, %v3096
      %v3098 = vrot.slane %v3090, %v3097
      %v3100 = vunpack.c.l.s4 1983009808
      %v3101 = vunpack.c.0.s8 %v3100
      %v3102 = vlaneseq
      %v3103 = vshrl.u32 %v3102, 7
      %v3104 = vsub.s32 %v3101, %v3103
      %v3105 = vrot.slane %v3091, %v3104
      %v3106 = vcombine.low %v3098, %v3105
      %3107 = vrot.lane.b32.xlu0 %v3106, 71
      %v3108 = vpop.permute.xlu0 %3107
      %v3109 = vrot.slane %v3108, 6
      %v3110 = vsel %vm647, %v3109, %v3108
      %v3113 = vmul.bf16 %v3044, %v3110
      %v3114 = vmul.bf16 %v3045, %v3109
      %v3117 = vcombine.high %v3113, %v3113
      %v3119 = vunpack.c.l.s4 1983009808
      %v3120 = vunpack.c.0.s8 %v3119
      %v3121 = vlaneseq
      %v3122 = vshrl.u32 %v3121, 7
      %v3123 = vsub.s32 %v3120, %v3122
      %v3124 = vrot.slane %v3113, %v3123
      %v3126 = vunpack.c.l.s4 1983009808
      %v3127 = vunpack.c.0.s8 %v3126
      %v3128 = vlaneseq
      %v3129 = vshrl.u32 %v3128, 7
      %v3130 = vsub.s32 %v3127, %v3129
      %v3131 = vrot.slane %v3117, %v3130
      %v3133 = vunpack.c.l.s4 1983009808
      %v3134 = vunpack.c.0.s8 %v3133
      %v3135 = vlaneseq
      %v3136 = vshrl.u32 %v3135, 7
      %v3137 = vsub.s32 %v3134, %v3136
      %v3138 = vrot.slane %v3114, %v3137
      %3139 = vrot.lane.b32.xlu0 %v3124, 57
      %v3140 = vpop.permute.xlu0 %3139
      %3141 = vrot.lane.b32.xlu0 %v3131, 57
      %v3142 = vpop.permute.xlu0 %3141
      %3143 = vrot.lane.b32.xlu0 %v3138, 57
      %v3144 = vpop.permute.xlu0 %3143
      %v3145 = vrot.slane %v3140, 4
      %v3146 = vrot.slane %v3142, 4
      %v3147 = vrot.slane %v3144, 4
      %v3148 = vsel %vm412, %v3145, %v3146
      %v3149 = vsel %vm607, %v3140, %v3148
      %v3150 = vsel %vm412, %v3146, %v3147
      %v3151 = vsel %vm607, %v3142, %v3150
      %3154 = vst [vmem:[#allocation3 + $0xc0] sm:$0x33] %v3149
      %3155 = vst [vmem:[#allocation3 + $0xc8] sm:$0x33] %v3151
      %v3156 = vld [vmem:[%s300 + $0x2] sm:$0xff]
      %v3157 = vld [vmem:[%s300 + $0xa] sm:$0x3]
      %v3158 = vld [vmem:[%s7 + $0x30] sm:$0x11]
      %v3159 = vld [vmem:[%s7 + $0x38] sm:$0x11]
      %v3162 = vunpack.c.l.b16 %v3158
      %v3163 = vunpack.c.h.b16 %v3158
      %v3164 = vunpack.c.l.b16 %v3159
      %v3165 = vunpack.c.h.b16 %v3159
      %v3166 = vpack.c.b16 %v3162, %v3162
      %v3167 = vpack.c.b16 %v3163, %v3163
      %v3168 = vpack.c.b16 %v3164, %v3164
      %v3169 = vpack.c.b16 %v3165, %v3165
      %v3171 = vshrl.u32 %v3166, 16
      %v3172 = vpack.i.b16 %v3171, %v3171
      %v3174 = vlaneseq
      %v3175 = vshrl.u32 %v3174, 7
      %v3176 = vsub.s32 0, %v3175
      %v3177 = vrot.slane %v3172, %v3176
      %v3179 = vshrl.u32 %v3167, 16
      %v3180 = vpack.i.b16 %v3179, %v3179
      %v3182 = vlaneseq
      %v3183 = vshrl.u32 %v3182, 7
      %v3184 = vsub.s32 0, %v3183
      %v3185 = vrot.slane %v3180, %v3184
      %v3187 = vshrl.u32 %v3168, 16
      %v3188 = vpack.i.b16 %v3187, %v3187
      %v3190 = vlaneseq
      %v3191 = vshrl.u32 %v3190, 7
      %v3192 = vsub.s32 0, %v3191
      %v3193 = vrot.slane %v3188, %v3192
      %v3195 = vshrl.u32 %v3169, 16
      %v3196 = vpack.i.b16 %v3195, %v3195
      %v3198 = vlaneseq
      %v3199 = vshrl.u32 %v3198, 7
      %v3200 = vsub.s32 0, %v3199
      %v3201 = vrot.slane %v3196, %v3200
      %v3206 = vcombine.low %v3177, %v3185
      %v3207 = vcombine.low %v3193, %v3201
      %v3209 = vunpack.c.l.s4 1983009808
      %v3210 = vunpack.c.0.s8 %v3209
      %v3211 = vlaneseq
      %v3212 = vshrl.u32 %v3211, 7
      %v3213 = vsub.s32 %v3210, %v3212
      %v3214 = vrot.slane %v3206, %v3213
      %v3216 = vunpack.c.l.s4 1983009808
      %v3217 = vunpack.c.0.s8 %v3216
      %v3218 = vlaneseq
      %v3219 = vshrl.u32 %v3218, 7
      %v3220 = vsub.s32 %v3217, %v3219
      %v3221 = vrot.slane %v3207, %v3220
      %v3222 = vcombine.low %v3214, %v3221
      %3223 = vrot.lane.b32.xlu0 %v3222, 72
      %v3224 = vpop.permute.xlu0 %3223
      %v3225 = vrot.slane %v3224, 6
      %v3226 = vsel %vm533, %v3225, %v3224
      %v3229 = vmul.bf16 %v3156, %v3226
      %v3230 = vmul.bf16 %v3157, %v3225
      %v3233 = vcombine.low %v3229, %v3229
      %v3235 = vunpack.c.l.s4 1983009808
      %v3236 = vunpack.c.0.s8 %v3235
      %v3237 = vlaneseq
      %v3238 = vshrl.u32 %v3237, 7
      %v3239 = vsub.s32 %v3236, %v3238
      %v3240 = vrot.slane %v3233, %v3239
      %v3242 = vunpack.c.l.s4 1983009808
      %v3243 = vunpack.c.0.s8 %v3242
      %v3244 = vlaneseq
      %v3245 = vshrl.u32 %v3244, 7
      %v3246 = vsub.s32 %v3243, %v3245
      %v3247 = vrot.slane %v3229, %v3246
      %v3248 = vcombine.low %v3230, %v3230
      %v3250 = vunpack.c.l.s4 1983009808
      %v3251 = vunpack.c.0.s8 %v3250
      %v3252 = vlaneseq
      %v3253 = vshrl.u32 %v3252, 7
      %v3254 = vsub.s32 %v3251, %v3253
      %v3255 = vrot.slane %v3248, %v3254
      %3256 = vrot.lane.b32.xlu0 %v3240, 56
      %v3257 = vpop.permute.xlu0 %3256
      %3258 = vrot.lane.b32.xlu0 %v3247, 56
      %v3259 = vpop.permute.xlu0 %3258
      %3260 = vrot.lane.b32.xlu0 %v3255, 56
      %v3261 = vpop.permute.xlu0 %3260
      %v3262 = vrot.slane %v3257, 4
      %v3263 = vrot.slane %v3259, 4
      %v3264 = vrot.slane %v3261, 4
      %v3265 = vsel %vm412, %v3262, %v3263
      %v3266 = vsel %vm492, %v3257, %v3265
      %v3267 = vsel %vm412, %v3263, %v3264
      %v3268 = vsel %vm492, %v3259, %v3267
      %3271 = vst [vmem:[#allocation3 + $0xc0] sm:$0xcc] %v3266
      %3272 = vst [vmem:[#allocation3 + $0xc8] sm:$0xcc] %v3268
      %v3273 = vld [vmem:[%s300 + $0x2] sm:$0xff]
      %v3274 = vld [vmem:[%s300 + $0xa] sm:$0x3]
      %v3275 = vld [vmem:[%s7 + $0x30] sm:$0x22]
      %v3276 = vld [vmem:[%s7 + $0x38] sm:$0x22]
      %v3279 = vunpack.c.l.b16 %v3275
      %v3280 = vunpack.c.h.b16 %v3275
      %v3281 = vunpack.c.l.b16 %v3276
      %v3282 = vunpack.c.h.b16 %v3276
      %v3283 = vpack.c.b16 %v3279, %v3279
      %v3284 = vpack.c.b16 %v3280, %v3280
      %v3285 = vpack.c.b16 %v3281, %v3281
      %v3286 = vpack.c.b16 %v3282, %v3282
      %v3288 = vpack.i.b16 %v3283, %v3283
      %v3290 = vlaneseq
      %v3291 = vshrl.u32 %v3290, 7
      %v3292 = vsub.s32 1, %v3291
      %v3293 = vrot.slane %v3288, %v3292
      %v3295 = vpack.i.b16 %v3284, %v3284
      %v3297 = vlaneseq
      %v3298 = vshrl.u32 %v3297, 7
      %v3299 = vsub.s32 1, %v3298
      %v3300 = vrot.slane %v3295, %v3299
      %v3302 = vpack.i.b16 %v3285, %v3285
      %v3304 = vlaneseq
      %v3305 = vshrl.u32 %v3304, 7
      %v3306 = vsub.s32 1, %v3305
      %v3307 = vrot.slane %v3302, %v3306
      %v3309 = vpack.i.b16 %v3286, %v3286
      %v3311 = vlaneseq
      %v3312 = vshrl.u32 %v3311, 7
      %v3313 = vsub.s32 1, %v3312
      %v3314 = vrot.slane %v3309, %v3313
      %v3319 = vcombine.low %v3293, %v3300
      %v3320 = vcombine.low %v3307, %v3314
      %v3322 = vunpack.c.l.s4 1983009808
      %v3323 = vunpack.c.0.s8 %v3322
      %v3324 = vlaneseq
      %v3325 = vshrl.u32 %v3324, 7
      %v3326 = vsub.s32 %v3323, %v3325
      %v3327 = vrot.slane %v3319, %v3326
      %v3329 = vunpack.c.l.s4 1983009808
      %v3330 = vunpack.c.0.s8 %v3329
      %v3331 = vlaneseq
      %v3332 = vshrl.u32 %v3331, 7
      %v3333 = vsub.s32 %v3330, %v3332
      %v3334 = vrot.slane %v3320, %v3333
      %v3335 = vcombine.low %v3327, %v3334
      %3336 = vrot.lane.b32.xlu0 %v3335, 73
      %v3337 = vpop.permute.xlu0 %3336
      %v3338 = vrot.slane %v3337, 6
      %v3339 = vsel %vm414, %v3338, %v3337
      %v3342 = vmul.bf16 %v3273, %v3339
      %v3343 = vmul.bf16 %v3274, %v3338
      %v3346 = vcombine.high %v3342, %v3342
      %v3348 = vunpack.c.l.s4 1983009808
      %v3349 = vunpack.c.0.s8 %v3348
      %v3350 = vlaneseq
      %v3351 = vshrl.u32 %v3350, 7
      %v3352 = vsub.s32 %v3349, %v3351
      %v3353 = vrot.slane %v3342, %v3352
      %v3355 = vunpack.c.l.s4 1983009808
      %v3356 = vunpack.c.0.s8 %v3355
      %v3357 = vlaneseq
      %v3358 = vshrl.u32 %v3357, 7
      %v3359 = vsub.s32 %v3356, %v3358
      %v3360 = vrot.slane %v3346, %v3359
      %v3362 = vunpack.c.l.s4 1983009808
      %v3363 = vunpack.c.0.s8 %v3362
      %v3364 = vlaneseq
      %v3365 = vshrl.u32 %v3364, 7
      %v3366 = vsub.s32 %v3363, %v3365
      %v3367 = vrot.slane %v3343, %v3366
      %3368 = vrot.lane.b32.xlu0 %v3353, 55
      %v3369 = vpop.permute.xlu0 %3368
      %3370 = vrot.lane.b32.xlu0 %v3360, 55
      %v3371 = vpop.permute.xlu0 %3370
      %3372 = vrot.lane.b32.xlu0 %v3367, 55
      %v3373 = vpop.permute.xlu0 %3372
      %v3374 = vrot.slane %v3369, 4
      %v3375 = vrot.slane %v3371, 4
      %v3376 = vrot.slane %v3373, 4
      %v3377 = vsel %vm412, %v3374, %v3375
      %v3378 = vsel %vm373, %v3369, %v3377
      %v3379 = vsel %vm412, %v3375, %v3376
      %v3380 = vsel %vm373, %v3371, %v3379
      %3383 = vst [vmem:[#allocation3 + $0xd0] sm:$0x33] %v3378
      %3384 = vst [vmem:[#allocation3 + $0xd8] sm:$0x33] %v3380
      %v3385 = vld [vmem:[%s1] sm:$0xf]
      %v3386 = vld [vmem:[#allocation3] sm:$0xff]
      %v3387 = vld [vmem:[#allocation3 + $0x8] sm:$0xff]
      %v3388 = vld [vmem:[#allocation3 + $0x10] sm:$0xff]
      %v3389 = vld [vmem:[#allocation3 + $0x18] sm:$0xff]
      %v3390 = vld [vmem:[#allocation3 + $0x20] sm:$0xff]
      %v3391 = vld [vmem:[#allocation3 + $0x28] sm:$0xff]
      %v3392 = vld [vmem:[#allocation3 + $0x30] sm:$0xff]
      %v3393 = vld [vmem:[#allocation3 + $0x38] sm:$0xff]
      %v3394 = vld [vmem:[#allocation3 + $0x40] sm:$0xff]
      %v3395 = vld [vmem:[#allocation3 + $0x48] sm:$0xff]
      %v3396 = vld [vmem:[#allocation3 + $0x50] sm:$0xff]
      %v3397 = vld [vmem:[#allocation3 + $0x58] sm:$0xff]
      %v3398 = vld [vmem:[#allocation3 + $0x60] sm:$0xff]
      %v3399 = vld [vmem:[#allocation3 + $0x68] sm:$0xff]
      %v3400 = vld [vmem:[#allocation3 + $0x70] sm:$0xff]
      %v3401 = vld [vmem:[#allocation3 + $0x78] sm:$0xff]
      %v3402 = vld [vmem:[#allocation3 + $0x80] sm:$0xff]
      %v3403 = vld [vmem:[#allocation3 + $0x88] sm:$0xff]
      %v3404 = vld [vmem:[#allocation3 + $0x90] sm:$0xff]
      %v3405 = vld [vmem:[#allocation3 + $0x98] sm:$0xff]
      %v3406 = vld [vmem:[#allocation3 + $0xa0] sm:$0xff]
      %v3407 = vld [vmem:[#allocation3 + $0xa8] sm:$0xff]
      %v3408 = vld [vmem:[#allocation3 + $0xb0] sm:$0xff]
      %v3409 = vld [vmem:[#allocation3 + $0xb8] sm:$0xff]
      %v3410 = vld [vmem:[#allocation3 + $0xc0] sm:$0xff]
      %v3411 = vld [vmem:[#allocation3 + $0xc8] sm:$0xff]
      %v3412 = vld [vmem:[#allocation3 + $0xd0] sm:$0x33]
      %v3413 = vld [vmem:[#allocation3 + $0xd8] sm:$0x33]
      %v3442 = vunpack.c.l.b16 %v3386
      %v3443 = vunpack.c.h.b16 %v3386
      %v3444 = vunpack.c.l.b16 %v3387
      %v3445 = vunpack.c.h.b16 %v3387
      %v3446 = vunpack.c.l.b16 %v3388
      %v3447 = vunpack.c.h.b16 %v3388
      %v3448 = vunpack.c.l.b16 %v3389
      %v3449 = vunpack.c.h.b16 %v3389
      %v3450 = vunpack.c.l.b16 %v3390
      %v3451 = vunpack.c.h.b16 %v3390
      %v3452 = vunpack.c.l.b16 %v3391
      %v3453 = vunpack.c.h.b16 %v3391
      %v3454 = vunpack.c.l.b16 %v3392
      %v3455 = vunpack.c.h.b16 %v3392
      %v3456 = vunpack.c.l.b16 %v3393
      %v3457 = vunpack.c.h.b16 %v3393
      %v3458 = vunpack.c.l.b16 %v3394
      %v3459 = vunpack.c.h.b16 %v3394
      %v3460 = vunpack.c.l.b16 %v3395
      %v3461 = vunpack.c.h.b16 %v3395
      %v3462 = vunpack.c.l.b16 %v3396
      %v3463 = vunpack.c.h.b16 %v3396
      %v3464 = vunpack.c.l.b16 %v3397
      %v3465 = vunpack.c.h.b16 %v3397
      %v3466 = vunpack.c.l.b16 %v3398
      %v3467 = vunpack.c.h.b16 %v3398
      %v3468 = vunpack.c.l.b16 %v3399
      %v3469 = vunpack.c.h.b16 %v3399
      %v3470 = vunpack.c.l.b16 %v3400
      %v3471 = vunpack.c.h.b16 %v3400
      %v3472 = vunpack.c.l.b16 %v3401
      %v3473 = vunpack.c.h.b16 %v3401
      %v3474 = vunpack.c.l.b16 %v3402
      %v3475 = vunpack.c.h.b16 %v3402
      %v3476 = vunpack.c.l.b16 %v3403
      %v3477 = vunpack.c.h.b16 %v3403
      %v3478 = vunpack.c.l.b16 %v3404
      %v3479 = vunpack.c.h.b16 %v3404
      %v3480 = vunpack.c.l.b16 %v3405
      %v3481 = vunpack.c.h.b16 %v3405
      %v3482 = vunpack.c.l.b16 %v3406
      %v3483 = vunpack.c.h.b16 %v3406
      %v3484 = vunpack.c.l.b16 %v3407
      %v3485 = vunpack.c.h.b16 %v3407
      %v3486 = vunpack.c.l.b16 %v3408
      %v3487 = vunpack.c.h.b16 %v3408
      %v3488 = vunpack.c.l.b16 %v3409
      %v3489 = vunpack.c.h.b16 %v3409
      %v3490 = vunpack.c.l.b16 %v3410
      %v3491 = vunpack.c.h.b16 %v3410
      %v3492 = vunpack.c.l.b16 %v3411
      %v3493 = vunpack.c.h.b16 %v3411
      %v3494 = vunpack.c.l.b16 %v3412
      %v3495 = vunpack.c.h.b16 %v3412
      %v3496 = vunpack.c.l.b16 %v3413
      %v3497 = vunpack.c.h.b16 %v3413
      %v3498 = vpack.c.b16 %v3446, %v3442
      %v3499 = vpack.c.b16 %v3447, %v3443
      %v3500 = vpack.c.b16 %v3448, %v3444
      %v3501 = vpack.c.b16 %v3449, %v3445
      %v3502 = vpack.c.b16 %v3454, %v3450
      %v3503 = vpack.c.b16 %v3455, %v3451
      %v3504 = vpack.c.b16 %v3456, %v3452
      %v3505 = vpack.c.b16 %v3457, %v3453
      %v3506 = vpack.c.b16 %v3462, %v3458
      %v3507 = vpack.c.b16 %v3463, %v3459
      %v3508 = vpack.c.b16 %v3464, %v3460
      %v3509 = vpack.c.b16 %v3465, %v3461
      %v3510 = vpack.c.b16 %v3470, %v3466
      %v3511 = vpack.c.b16 %v3471, %v3467
      %v3512 = vpack.c.b16 %v3472, %v3468
      %v3513 = vpack.c.b16 %v3473, %v3469
      %v3514 = vpack.c.b16 %v3478, %v3474
      %v3515 = vpack.c.b16 %v3479, %v3475
      %v3516 = vpack.c.b16 %v3480, %v3476
      %v3517 = vpack.c.b16 %v3481, %v3477
      %v3518 = vpack.c.b16 %v3486, %v3482
      %v3519 = vpack.c.b16 %v3487, %v3483
      %v3520 = vpack.c.b16 %v3488, %v3484
      %v3521 = vpack.c.b16 %v3489, %v3485
      %v3522 = vpack.c.b16 %v3494, %v3490
      %v3523 = vpack.c.b16 %v3495, %v3491
      %v3524 = vpack.c.b16 %v3496, %v3492
      %v3525 = vpack.c.b16 %v3497, %v3493
      %vm3550 = vcmask 883712
      %v3552 = vsel %vm3550, %v3385, 0
      %vm3554 = vcmask 1045504
      %v3556 = vsel %vm3554, %v3522, 0
      %v3559 = vsel %vm3554, %v3523, 0
      %v3562 = vsel %vm3554, %v3524, 0
      %v3565 = vsel %vm3554, %v3525, 0
      %3567 = vmatprep.subr.bf16.mxu0 0
      %3568 = vmatpush1.bf16.msra.mxu0 0
      %3569 = vmatprep.subr.bf16.mxu0 %v3559
      %3570 = vmatpush1.bf16.msra.mxu0 %v3556
      %3571 = vmatprep.subr.bf16.mxu0 %v3519
      %3572 = vmatpush1.bf16.msra.mxu0 %v3518
      %3573 = vmatprep.subr.bf16.mxu0 %v3515
      %3574 = vmatpush1.bf16.msra.mxu0 %v3514
      %3575 = vmatprep.subr.bf16.mxu0 %v3511
      %3576 = vmatpush1.bf16.msra.mxu0 %v3510
      %3577 = vmatprep.subr.bf16.mxu0 %v3507
      %3578 = vmatpush1.bf16.msra.mxu0 %v3506
      %3579 = vmatprep.subr.bf16.mxu0 %v3503
      %3580 = vmatpush1.bf16.msra.mxu0 %v3502
      %3581 = vmatprep.subr.bf16.mxu0 %v3499
      %3582 = vmatpush1.bf16.msra.mxu0 %v3498
      %3583 = vmatprep.subr.bf16.mxu0 0
      %3584 = vmatpush2.bf16.msra.mxu0 0
      %3585 = vmatprep.subr.bf16.mxu0 0
      %3586 = vmatpush2.bf16.msra.mxu0 0
      %3587 = vmatprep.subr.bf16.mxu0 0
      %3588 = vmatpush2.bf16.msra.mxu0 0
      %3589 = vmatprep.subr.bf16.mxu0 0
      %3590 = vmatpush2.bf16.msra.mxu0 0
      %3591 = vmatprep.subr.bf16.mxu0 0
      %3592 = vmatpush2.bf16.msra.mxu0 0
      %3593 = vmatprep.subr.bf16.mxu0 0
      %3594 = vmatpush2.bf16.msra.mxu0 0
      %3595 = vmatprep.subr.bf16.mxu0 0
      %3596 = vmatpush2.bf16.msra.mxu0 0
      %3597 = vmatprep.subr.bf16.mxu0 0
      %3598 = vmatpush2.bf16.msra.mxu0 0
      %3599 = vmatprep.mubr.bf16.mxu0 0
      %3600 = vmatmul.mubr.bf16.gmra.mxu0 %v3552
      %v3601 = vpop.f32.mrf.mxu0
      %v3602 = vadd.f32 0.0, %v3601
      %v3603 = vpop.f32.mrf.mxu0
      %v3604 = vadd.f32 0.0, %v3603
      %v3605 = vpop.f32.mrf.mxu0
      %v3606 = vpop.f32.mrf.mxu0
      %3607 = vdwg.mxu0
      %3608 = vmatprep.subr.bf16.mxu0 0
      %3609 = vmatpush1.bf16.msra.mxu0 0
      %3610 = vmatprep.subr.bf16.mxu0 %v3565
      %3611 = vmatpush1.bf16.msra.mxu0 %v3562
      %3612 = vmatprep.subr.bf16.mxu0 %v3521
      %3613 = vmatpush1.bf16.msra.mxu0 %v3520
      %3614 = vmatprep.subr.bf16.mxu0 %v3517
      %3615 = vmatpush1.bf16.msra.mxu0 %v3516
      %3616 = vmatprep.subr.bf16.mxu0 %v3513
      %3617 = vmatpush1.bf16.msra.mxu0 %v3512
      %3618 = vmatprep.subr.bf16.mxu0 %v3509
      %3619 = vmatpush1.bf16.msra.mxu0 %v3508
      %3620 = vmatprep.subr.bf16.mxu0 %v3505
      %3621 = vmatpush1.bf16.msra.mxu0 %v3504
      %3622 = vmatprep.subr.bf16.mxu0 %v3501
      %3623 = vmatpush1.bf16.msra.mxu0 %v3500
      %3624 = vmatprep.subr.bf16.mxu0 0
      %3625 = vmatpush2.bf16.msra.mxu0 0
      %3626 = vmatprep.subr.bf16.mxu0 0
      %3627 = vmatpush2.bf16.msra.mxu0 0
      %3628 = vmatprep.subr.bf16.mxu0 0
      %3629 = vmatpush2.bf16.msra.mxu0 0
      %3630 = vmatprep.subr.bf16.mxu0 0
      %3631 = vmatpush2.bf16.msra.mxu0 0
      %3632 = vmatprep.subr.bf16.mxu0 0
      %3633 = vmatpush2.bf16.msra.mxu0 0
      %3634 = vmatprep.subr.bf16.mxu0 0
      %3635 = vmatpush2.bf16.msra.mxu0 0
      %3636 = vmatprep.subr.bf16.mxu0 0
      %3637 = vmatpush2.bf16.msra.mxu0 0
      %3638 = vmatprep.subr.bf16.mxu0 0
      %3639 = vmatpush2.bf16.msra.mxu0 0
      %3640 = vmatprep.mubr.bf16.mxu0 0
      %3641 = vmatmul.mubr.bf16.gmra.mxu0 %v3552
      %v3642 = vpop.f32.mrf.mxu0
      %v3643 = vadd.f32 0.0, %v3642
      %v3644 = vpop.f32.mrf.mxu0
      %v3645 = vadd.f32 0.0, %v3644
      %v3646 = vpop.f32.mrf.mxu0
      %v3647 = vpop.f32.mrf.mxu0
      %3648 = vdwg.mxu0
      %v3649 = vld [vmem:[%s2] sm:$0xff]
      %3651 = vset.pattern.permute.xlu0 0
      %3652 = vperm.xlu0 %3651, %v3649
      %v3653 = vpop.permute.xlu0 %3652
      %v3655 = vmul.f32 %v3602, %v3653
      %v3656 = vmul.f32 %v3604, %v3653
      %v3657 = vmul.f32 %v3643, %v3653
      %v3658 = vmul.f32 %v3645, %v3653
      %v3659 = vld [vmem:[%s3] sm:$0xff]
      %3661 = vset.pattern.permute.xlu0 0
      %3662 = vperm.xlu0 %3661, %v3659
      %v3663 = vpop.permute.xlu0 %3662
      %v3665 = vadd.f32 %v3655, %v3663
      %v3666 = vadd.f32 %v3656, %v3663
      %v3667 = vadd.f32 %v3657, %v3663
      %v3668 = vadd.f32 %v3658, %v3663
      %v3669 = vmax.f32 %v3665, 0.0
      %v3670 = vmax.f32 %v3666, 0.0
      %v3671 = vmax.f32 %v3667, 0.0
      %v3672 = vmax.f32 %v3668, 0.0
      %3673 = vst [vmem:[#allocation2] sm:$0xf] 0
      %3674 = vst [vmem:[#allocation2 + $0x14] sm:$0xf] 0
      %v3675 = vpack.c.bf16 %v3669, %v3669
      %v3676 = vpack.c.bf16 %v3670, %v3670
      %v3677 = vpack.c.bf16 %v3671, %v3671
      %v3678 = vpack.c.bf16 %v3672, %v3672
      %v3683 = vunpack.c.l.b16 %v3675
      %v3684 = vunpack.c.l.b16 %v3676
      %v3685 = vunpack.c.l.b16 %v3677
      %v3686 = vunpack.c.l.b16 %v3678
      %v3687 = vpack.c.b16 %v3684, %v3683
      %v3688 = vpack.c.b16 %v3686, %v3685
      %3691 = vst [vmem:[#allocation2 + $0x4] sm:$0xff] %v3687
      %3692 = vst [vmem:[#allocation2 + $0xc] sm:$0xff] %v3688
      %v3693 = vld [vmem:[#allocation2] sm:$0xff]
      %v3694 = vld [vmem:[#allocation2 + $0x8] sm:$0xff]
      %v3695 = vld [vmem:[#allocation2 + $0x10] sm:$0xf]
      %v3696 = vld [vmem:[%s7] sm:$0x11]
      %v3697 = vld [vmem:[%s7 + $0x8] sm:$0x11]
      %v3700 = vunpack.c.l.b16 %v3696
      %v3701 = vunpack.c.h.b16 %v3696
      %v3702 = vunpack.c.l.b16 %v3697
      %v3703 = vunpack.c.h.b16 %v3697
      %v3704 = vpack.c.b16 %v3700, %v3700
      %v3705 = vpack.c.b16 %v3701, %v3701
      %v3706 = vpack.c.b16 %v3702, %v3702
      %v3707 = vpack.c.b16 %v3703, %v3703
      %v3709 = vpack.i.b16 %v3704, %v3704
      %v3711 = vlaneseq
      %v3712 = vshrl.u32 %v3711, 7
      %v3713 = vsub.s32 0, %v3712
      %v3714 = vrot.slane %v3709, %v3713
      %v3716 = vpack.i.b16 %v3705, %v3705
      %v3718 = vlaneseq
      %v3719 = vshrl.u32 %v3718, 7
      %v3720 = vsub.s32 0, %v3719
      %v3721 = vrot.slane %v3716, %v3720
      %v3723 = vpack.i.b16 %v3706, %v3706
      %v3725 = vlaneseq
      %v3726 = vshrl.u32 %v3725, 7
      %v3727 = vsub.s32 0, %v3726
      %v3728 = vrot.slane %v3723, %v3727
      %v3730 = vpack.i.b16 %v3707, %v3707
      %v3732 = vlaneseq
      %v3733 = vshrl.u32 %v3732, 7
      %v3734 = vsub.s32 0, %v3733
      %v3735 = vrot.slane %v3730, %v3734
      %v3740 = vunpack.c.l.b16 %v3714
      %v3741 = vunpack.c.l.b16 %v3721
      %v3742 = vunpack.c.l.b16 %v3728
      %v3743 = vunpack.c.l.b16 %v3735
      %v3744 = vpack.c.b16 %v3741, %v3740
      %v3745 = vpack.c.b16 %v3743, %v3742
      %3746 = vrot.lane.b32.xlu0 %v3744, 55
      %v3747 = vpop.permute.xlu0 %3746
      %3748 = vrot.lane.b32.xlu0 %v3745, 55
      %v3749 = vpop.permute.xlu0 %3748
      %v3750 = vrot.slane %v3747, 4
      %v3751 = vrot.slane %v3749, 4
      %v3752 = vsel %vm373, %v3750, %v3747
      %v3753 = vsel %vm412, %v3750, %v3751
      %v3754 = vsel %vm373, %v3753, %v3749
      %v3758 = vmul.bf16 %v3693, %v3752
      %v3759 = vmul.bf16 %v3694, %v3754
      %v3760 = vmul.bf16 %v3695, %v3751
      %3764 = vrot.lane.b32.xlu0 %v3758, 73
      %v3765 = vpop.permute.xlu0 %3764
      %3766 = vrot.lane.b32.xlu0 %v3759, 73
      %v3767 = vpop.permute.xlu0 %3766
      %3768 = vrot.lane.b32.xlu0 %v3760, 73
      %v3769 = vpop.permute.xlu0 %3768
      %v3770 = vrot.slane %v3765, 4
      %v3771 = vrot.slane %v3767, 4
      %v3772 = vrot.slane %v3769, 4
      %v3773 = vsel %vm412, %v3770, %v3771
      %v3774 = vsel %vm414, %v3765, %v3773
      %v3775 = vsel %vm412, %v3771, %v3772
      %v3776 = vsel %vm414, %v3767, %v3775
      %3779 = vst [vmem:[#allocation3] sm:$0xff] %v3774
      %3780 = vst [vmem:[#allocation3 + $0x8] sm:$0xff] %v3776
      %v3781 = vld [vmem:[#allocation2] sm:$0xff]
      %v3782 = vld [vmem:[#allocation2 + $0x8] sm:$0xff]
      %v3783 = vld [vmem:[#allocation2 + $0x10] sm:$0xf]
      %v3784 = vld [vmem:[%s7] sm:$0x11]
      %v3785 = vld [vmem:[%s7 + $0x8] sm:$0x11]
      %v3788 = vunpack.c.l.b16 %v3784
      %v3789 = vunpack.c.h.b16 %v3784
      %v3790 = vunpack.c.l.b16 %v3785
      %v3791 = vunpack.c.h.b16 %v3785
      %v3792 = vpack.c.b16 %v3788, %v3788
      %v3793 = vpack.c.b16 %v3789, %v3789
      %v3794 = vpack.c.b16 %v3790, %v3790
      %v3795 = vpack.c.b16 %v3791, %v3791
      %v3797 = vshrl.u32 %v3792, 16
      %v3798 = vpack.i.b16 %v3797, %v3797
      %v3800 = vlaneseq
      %v3801 = vshrl.u32 %v3800, 7
      %v3802 = vsub.s32 0, %v3801
      %v3803 = vrot.slane %v3798, %v3802
      %v3805 = vshrl.u32 %v3793, 16
      %v3806 = vpack.i.b16 %v3805, %v3805
      %v3808 = vlaneseq
      %v3809 = vshrl.u32 %v3808, 7
      %v3810 = vsub.s32 0, %v3809
      %v3811 = vrot.slane %v3806, %v3810
      %v3813 = vshrl.u32 %v3794, 16
      %v3814 = vpack.i.b16 %v3813, %v3813
      %v3816 = vlaneseq
      %v3817 = vshrl.u32 %v3816, 7
      %v3818 = vsub.s32 0, %v3817
      %v3819 = vrot.slane %v3814, %v3818
      %v3821 = vshrl.u32 %v3795, 16
      %v3822 = vpack.i.b16 %v3821, %v3821
      %v3824 = vlaneseq
      %v3825 = vshrl.u32 %v3824, 7
      %v3826 = vsub.s32 0, %v3825
      %v3827 = vrot.slane %v3822, %v3826
      %v3832 = vunpack.c.l.b16 %v3803
      %v3833 = vunpack.c.l.b16 %v3811
      %v3834 = vunpack.c.l.b16 %v3819
      %v3835 = vunpack.c.l.b16 %v3827
      %v3836 = vpack.c.b16 %v3833, %v3832
      %v3837 = vpack.c.b16 %v3835, %v3834
      %3838 = vrot.lane.b32.xlu0 %v3836, 56
      %v3839 = vpop.permute.xlu0 %3838
      %3840 = vrot.lane.b32.xlu0 %v3837, 56
      %v3841 = vpop.permute.xlu0 %3840
      %v3842 = vrot.slane %v3839, 4
      %v3843 = vrot.slane %v3841, 4
      %v3844 = vsel %vm492, %v3842, %v3839
      %v3845 = vsel %vm412, %v3842, %v3843
      %v3846 = vsel %vm492, %v3845, %v3841
      %v3850 = vmul.bf16 %v3781, %v3844
      %v3851 = vmul.bf16 %v3782, %v3846
      %v3852 = vmul.bf16 %v3783, %v3843
      %3856 = vrot.lane.b32.xlu0 %v3850, 72
      %v3857 = vpop.permute.xlu0 %3856
      %3858 = vrot.lane.b32.xlu0 %v3851, 72
      %v3859 = vpop.permute.xlu0 %3858
      %3860 = vrot.lane.b32.xlu0 %v3852, 72
      %v3861 = vpop.permute.xlu0 %3860
      %v3862 = vrot.slane %v3857, 4
      %v3863 = vrot.slane %v3859, 4
      %v3864 = vrot.slane %v3861, 4
      %v3865 = vsel %vm412, %v3862, %v3863
      %v3866 = vsel %vm533, %v3857, %v3865
      %v3867 = vsel %vm412, %v3863, %v3864
      %v3868 = vsel %vm533, %v3859, %v3867
      %3871 = vst [vmem:[#allocation3 + $0x10] sm:$0xff] %v3866
      %3872 = vst [vmem:[#allocation3 + $0x18] sm:$0xff] %v3868
      %v3873 = vld [vmem:[#allocation2] sm:$0xff]
      %v3874 = vld [vmem:[#allocation2 + $0x8] sm:$0xff]
      %v3875 = vld [vmem:[#allocation2 + $0x10] sm:$0xf]
      %v3876 = vld [vmem:[%s7] sm:$0x22]
      %v3877 = vld [vmem:[%s7 + $0x8] sm:$0x22]
      %v3880 = vunpack.c.l.b16 %v3876
      %v3881 = vunpack.c.h.b16 %v3876
      %v3882 = vunpack.c.l.b16 %v3877
      %v3883 = vunpack.c.h.b16 %v3877
      %v3884 = vpack.c.b16 %v3880, %v3880
      %v3885 = vpack.c.b16 %v3881, %v3881
      %v3886 = vpack.c.b16 %v3882, %v3882
      %v3887 = vpack.c.b16 %v3883, %v3883
      %v3889 = vpack.i.b16 %v3884, %v3884
      %v3891 = vlaneseq
      %v3892 = vshrl.u32 %v3891, 7
      %v3893 = vsub.s32 1, %v3892
      %v3894 = vrot.slane %v3889, %v3893
      %v3896 = vpack.i.b16 %v3885, %v3885
      %v3898 = vlaneseq
      %v3899 = vshrl.u32 %v3898, 7
      %v3900 = vsub.s32 1, %v3899
      %v3901 = vrot.slane %v3896, %v3900
      %v3903 = vpack.i.b16 %v3886, %v3886
      %v3905 = vlaneseq
      %v3906 = vshrl.u32 %v3905, 7
      %v3907 = vsub.s32 1, %v3906
      %v3908 = vrot.slane %v3903, %v3907
      %v3910 = vpack.i.b16 %v3887, %v3887
      %v3912 = vlaneseq
      %v3913 = vshrl.u32 %v3912, 7
      %v3914 = vsub.s32 1, %v3913
      %v3915 = vrot.slane %v3910, %v3914
      %v3920 = vunpack.c.l.b16 %v3894
      %v3921 = vunpack.c.l.b16 %v3901
      %v3922 = vunpack.c.l.b16 %v3908
      %v3923 = vunpack.c.l.b16 %v3915
      %v3924 = vpack.c.b16 %v3921, %v3920
      %v3925 = vpack.c.b16 %v3923, %v3922
      %3926 = vrot.lane.b32.xlu0 %v3924, 57
      %v3927 = vpop.permute.xlu0 %3926
      %3928 = vrot.lane.b32.xlu0 %v3925, 57
      %v3929 = vpop.permute.xlu0 %3928
      %v3930 = vrot.slane %v3927, 4
      %v3931 = vrot.slane %v3929, 4
      %v3932 = vsel %vm607, %v3930, %v3927
      %v3933 = vsel %vm412, %v3930, %v3931
      %v3934 = vsel %vm607, %v3933, %v3929
      %v3938 = vmul.bf16 %v3873, %v3932
      %v3939 = vmul.bf16 %v3874, %v3934
      %v3940 = vmul.bf16 %v3875, %v3931
      %3944 = vrot.lane.b32.xlu0 %v3938, 71
      %v3945 = vpop.permute.xlu0 %3944
      %3946 = vrot.lane.b32.xlu0 %v3939, 71
      %v3947 = vpop.permute.xlu0 %3946
      %3948 = vrot.lane.b32.xlu0 %v3940, 71
      %v3949 = vpop.permute.xlu0 %3948
      %v3950 = vrot.slane %v3945, 4
      %v3951 = vrot.slane %v3947, 4
      %v3952 = vrot.slane %v3949, 4
      %v3953 = vsel %vm412, %v3950, %v3951
      %v3954 = vsel %vm647, %v3945, %v3953
      %v3955 = vsel %vm412, %v3951, %v3952
      %v3956 = vsel %vm647, %v3947, %v3955
      %3959 = vst [vmem:[#allocation3 + $0x20] sm:$0xff] %v3954
      %3960 = vst [vmem:[#allocation3 + $0x28] sm:$0xff] %v3956
      %v3961 = vld [vmem:[#allocation2] sm:$0xff]
      %v3962 = vld [vmem:[#allocation2 + $0x8] sm:$0xff]
      %v3963 = vld [vmem:[#allocation2 + $0x10] sm:$0xf]
      %v3964 = vld [vmem:[%s7] sm:$0x22]
      %v3965 = vld [vmem:[%s7 + $0x8] sm:$0x22]
      %v3968 = vunpack.c.l.b16 %v3964
      %v3969 = vunpack.c.h.b16 %v3964
      %v3970 = vunpack.c.l.b16 %v3965
      %v3971 = vunpack.c.h.b16 %v3965
      %v3972 = vpack.c.b16 %v3968, %v3968
      %v3973 = vpack.c.b16 %v3969, %v3969
      %v3974 = vpack.c.b16 %v3970, %v3970
      %v3975 = vpack.c.b16 %v3971, %v3971
      %v3977 = vshrl.u32 %v3972, 16
      %v3978 = vpack.i.b16 %v3977, %v3977
      %v3980 = vlaneseq
      %v3981 = vshrl.u32 %v3980, 7
      %v3982 = vsub.s32 1, %v3981
      %v3983 = vrot.slane %v3978, %v3982
      %v3985 = vshrl.u32 %v3973, 16
      %v3986 = vpack.i.b16 %v3985, %v3985
      %v3988 = vlaneseq
      %v3989 = vshrl.u32 %v3988, 7
      %v3990 = vsub.s32 1, %v3989
      %v3991 = vrot.slane %v3986, %v3990
      %v3993 = vshrl.u32 %v3974, 16
      %v3994 = vpack.i.b16 %v3993, %v3993
      %v3996 = vlaneseq
      %v3997 = vshrl.u32 %v3996, 7
      %v3998 = vsub.s32 1, %v3997
      %v3999 = vrot.slane %v3994, %v3998
      %v4001 = vshrl.u32 %v3975, 16
      %v4002 = vpack.i.b16 %v4001, %v4001
      %v4004 = vlaneseq
      %v4005 = vshrl.u32 %v4004, 7
      %v4006 = vsub.s32 1, %v4005
      %v4007 = vrot.slane %v4002, %v4006
      %v4012 = vunpack.c.l.b16 %v3983
      %v4013 = vunpack.c.l.b16 %v3991
      %v4014 = vunpack.c.l.b16 %v3999
      %v4015 = vunpack.c.l.b16 %v4007
      %v4016 = vpack.c.b16 %v4013, %v4012
      %v4017 = vpack.c.b16 %v4015, %v4014
      %4018 = vrot.lane.b32.xlu0 %v4016, 63
      %v4019 = vpop.permute.xlu0 %4018
      %4020 = vrot.lane.b32.xlu0 %v4017, 63
      %v4021 = vpop.permute.xlu0 %4020
      %v4022 = vrot.slane %v4019, 4
      %v4023 = vrot.slane %v4021, 4
      %v4024 = vsel %vm725, %v4022, %v4019
      %v4025 = vsel %vm412, %v4022, %v4023
      %v4026 = vsel %vm725, %v4025, %v4021
      %v4030 = vmul.bf16 %v3961, %v4024
      %v4031 = vmul.bf16 %v3962, %v4026
      %v4032 = vmul.bf16 %v3963, %v4023
      %4036 = vrot.lane.b32.xlu0 %v4030, 65
      %v4037 = vpop.permute.xlu0 %4036
      %4038 = vrot.lane.b32.xlu0 %v4031, 65
      %v4039 = vpop.permute.xlu0 %4038
      %4040 = vrot.lane.b32.xlu0 %v4032, 65
      %v4041 = vpop.permute.xlu0 %4040
      %v4042 = vrot.slane %v4037, 4
      %v4043 = vrot.slane %v4039, 4
      %v4044 = vrot.slane %v4041, 4
      %v4045 = vsel %vm412, %v4042, %v4043
      %v4046 = vsel %vm766, %v4037, %v4045
      %v4047 = vsel %vm412, %v4043, %v4044
      %v4048 = vsel %vm766, %v4039, %v4047
      %4051 = vst [vmem:[#allocation3 + $0x30] sm:$0xff] %v4046
      %4052 = vst [vmem:[#allocation3 + $0x38] sm:$0xff] %v4048
      %v4053 = vld [vmem:[#allocation2] sm:$0xff]
      %v4054 = vld [vmem:[#allocation2 + $0x8] sm:$0xff]
      %v4055 = vld [vmem:[#allocation2 + $0x10] sm:$0xf]
      %v4056 = vld [vmem:[%s7] sm:$0x44]
      %v4057 = vld [vmem:[%s7 + $0x8] sm:$0x44]
      %v4060 = vunpack.c.l.b16 %v4056
      %v4061 = vunpack.c.h.b16 %v4056
      %v4062 = vunpack.c.l.b16 %v4057
      %v4063 = vunpack.c.h.b16 %v4057
      %v4064 = vpack.c.b16 %v4060, %v4060
      %v4065 = vpack.c.b16 %v4061, %v4061
      %v4066 = vpack.c.b16 %v4062, %v4062
      %v4067 = vpack.c.b16 %v4063, %v4063
      %v4069 = vpack.i.b16 %v4064, %v4064
      %v4071 = vlaneseq
      %v4072 = vshrl.u32 %v4071, 7
      %v4073 = vsub.s32 2, %v4072
      %v4074 = vrot.slane %v4069, %v4073
      %v4076 = vpack.i.b16 %v4065, %v4065
      %v4078 = vlaneseq
      %v4079 = vshrl.u32 %v4078, 7
      %v4080 = vsub.s32 2, %v4079
      %v4081 = vrot.slane %v4076, %v4080
      %v4083 = vpack.i.b16 %v4066, %v4066
      %v4085 = vlaneseq
      %v4086 = vshrl.u32 %v4085, 7
      %v4087 = vsub.s32 2, %v4086
      %v4088 = vrot.slane %v4083, %v4087
      %v4090 = vpack.i.b16 %v4067, %v4067
      %v4092 = vlaneseq
      %v4093 = vshrl.u32 %v4092, 7
      %v4094 = vsub.s32 2, %v4093
      %v4095 = vrot.slane %v4090, %v4094
      %v4100 = vunpack.c.l.b16 %v4074
      %v4101 = vunpack.c.l.b16 %v4081
      %v4102 = vunpack.c.l.b16 %v4088
      %v4103 = vunpack.c.l.b16 %v4095
      %v4104 = vpack.c.b16 %v4101, %v4100
      %v4105 = vpack.c.b16 %v4103, %v4102
      %4106 = vrot.lane.b32.xlu0 %v4104, 64
      %v4107 = vpop.permute.xlu0 %4106
      %4108 = vrot.lane.b32.xlu0 %v4105, 64
      %v4109 = vpop.permute.xlu0 %4108
      %v4110 = vrot.slane %v4107, 4
      %v4111 = vrot.slane %v4109, 4
      %v4112 = vsel %vm840, %v4110, %v4107
      %v4113 = vsel %vm412, %v4110, %v4111
      %v4114 = vsel %vm840, %v4113, %v4109
      %v4118 = vmul.bf16 %v4053, %v4112
      %v4119 = vmul.bf16 %v4054, %v4114
      %v4120 = vmul.bf16 %v4055, %v4111
      %4124 = vrot.lane.b32.xlu0 %v4118, 64
      %v4125 = vpop.permute.xlu0 %4124
      %4126 = vrot.lane.b32.xlu0 %v4119, 64
      %v4127 = vpop.permute.xlu0 %4126
      %4128 = vrot.lane.b32.xlu0 %v4120, 64
      %v4129 = vpop.permute.xlu0 %4128
      %v4130 = vrot.slane %v4125, 4
      %v4131 = vrot.slane %v4127, 4
      %v4132 = vrot.slane %v4129, 4
      %v4133 = vsel %vm412, %v4130, %v4131
      %v4134 = vsel %vm840, %v4125, %v4133
      %v4135 = vsel %vm412, %v4131, %v4132
      %v4136 = vsel %vm840, %v4127, %v4135
      %4139 = vst [vmem:[#allocation3 + $0x40] sm:$0xff] %v4134
      %4140 = vst [vmem:[#allocation3 + $0x48] sm:$0xff] %v4136
      %v4141 = vld [vmem:[#allocation2] sm:$0xff]
      %v4142 = vld [vmem:[#allocation2 + $0x8] sm:$0xff]
      %v4143 = vld [vmem:[#allocation2 + $0x10] sm:$0xf]
      %v4144 = vld [vmem:[%s7] sm:$0x44]
      %v4145 = vld [vmem:[%s7 + $0x8] sm:$0x44]
      %v4148 = vunpack.c.l.b16 %v4144
      %v4149 = vunpack.c.h.b16 %v4144
      %v4150 = vunpack.c.l.b16 %v4145
      %v4151 = vunpack.c.h.b16 %v4145
      %v4152 = vpack.c.b16 %v4148, %v4148
      %v4153 = vpack.c.b16 %v4149, %v4149
      %v4154 = vpack.c.b16 %v4150, %v4150
      %v4155 = vpack.c.b16 %v4151, %v4151
      %v4157 = vshrl.u32 %v4152, 16
      %v4158 = vpack.i.b16 %v4157, %v4157
      %v4160 = vlaneseq
      %v4161 = vshrl.u32 %v4160, 7
      %v4162 = vsub.s32 2, %v4161
      %v4163 = vrot.slane %v4158, %v4162
      %v4165 = vshrl.u32 %v4153, 16
      %v4166 = vpack.i.b16 %v4165, %v4165
      %v4168 = vlaneseq
      %v4169 = vshrl.u32 %v4168, 7
      %v4170 = vsub.s32 2, %v4169
      %v4171 = vrot.slane %v4166, %v4170
      %v4173 = vshrl.u32 %v4154, 16
      %v4174 = vpack.i.b16 %v4173, %v4173
      %v4176 = vlaneseq
      %v4177 = vshrl.u32 %v4176, 7
      %v4178 = vsub.s32 2, %v4177
      %v4179 = vrot.slane %v4174, %v4178
      %v4181 = vshrl.u32 %v4155, 16
      %v4182 = vpack.i.b16 %v4181, %v4181
      %v4184 = vlaneseq
      %v4185 = vshrl.u32 %v4184, 7
      %v4186 = vsub.s32 2, %v4185
      %v4187 = vrot.slane %v4182, %v4186
      %v4192 = vunpack.c.l.b16 %v4163
      %v4193 = vunpack.c.l.b16 %v4171
      %v4194 = vunpack.c.l.b16 %v4179
      %v4195 = vunpack.c.l.b16 %v4187
      %v4196 = vpack.c.b16 %v4193, %v4192
      %v4197 = vpack.c.b16 %v4195, %v4194
      %4198 = vrot.lane.b32.xlu0 %v4196, 65
      %v4199 = vpop.permute.xlu0 %4198
      %4200 = vrot.lane.b32.xlu0 %v4197, 65
      %v4201 = vpop.permute.xlu0 %4200
      %v4202 = vrot.slane %v4199, 4
      %v4203 = vrot.slane %v4201, 4
      %v4204 = vsel %vm766, %v4202, %v4199
      %v4205 = vsel %vm412, %v4202, %v4203
      %v4206 = vsel %vm766, %v4205, %v4201
      %v4210 = vmul.bf16 %v4141, %v4204
      %v4211 = vmul.bf16 %v4142, %v4206
      %v4212 = vmul.bf16 %v4143, %v4203
      %4216 = vrot.lane.b32.xlu0 %v4210, 63
      %v4217 = vpop.permute.xlu0 %4216
      %4218 = vrot.lane.b32.xlu0 %v4211, 63
      %v4219 = vpop.permute.xlu0 %4218
      %4220 = vrot.lane.b32.xlu0 %v4212, 63
      %v4221 = vpop.permute.xlu0 %4220
      %v4222 = vrot.slane %v4217, 4
      %v4223 = vrot.slane %v4219, 4
      %v4224 = vrot.slane %v4221, 4
      %v4225 = vsel %vm412, %v4222, %v4223
      %v4226 = vsel %vm725, %v4217, %v4225
      %v4227 = vsel %vm412, %v4223, %v4224
      %v4228 = vsel %vm725, %v4219, %v4227
      %4231 = vst [vmem:[#allocation3 + $0x50] sm:$0xff] %v4226
      %4232 = vst [vmem:[#allocation3 + $0x58] sm:$0xff] %v4228
      %v4233 = vld [vmem:[#allocation2] sm:$0xff]
      %v4234 = vld [vmem:[#allocation2 + $0x8] sm:$0xff]
      %v4235 = vld [vmem:[#allocation2 + $0x10] sm:$0xf]
      %v4236 = vld [vmem:[%s7] sm:$0x88]
      %v4237 = vld [vmem:[%s7 + $0x8] sm:$0x88]
      %v4240 = vunpack.c.l.b16 %v4236
      %v4241 = vunpack.c.h.b16 %v4236
      %v4242 = vunpack.c.l.b16 %v4237
      %v4243 = vunpack.c.h.b16 %v4237
      %v4244 = vpack.c.b16 %v4240, %v4240
      %v4245 = vpack.c.b16 %v4241, %v4241
      %v4246 = vpack.c.b16 %v4242, %v4242
      %v4247 = vpack.c.b16 %v4243, %v4243
      %v4249 = vpack.i.b16 %v4244, %v4244
      %v4251 = vlaneseq
      %v4252 = vshrl.u32 %v4251, 7
      %v4253 = vsub.s32 3, %v4252
      %v4254 = vrot.slane %v4249, %v4253
      %v4256 = vpack.i.b16 %v4245, %v4245
      %v4258 = vlaneseq
      %v4259 = vshrl.u32 %v4258, 7
      %v4260 = vsub.s32 3, %v4259
      %v4261 = vrot.slane %v4256, %v4260
      %v4263 = vpack.i.b16 %v4246, %v4246
      %v4265 = vlaneseq
      %v4266 = vshrl.u32 %v4265, 7
      %v4267 = vsub.s32 3, %v4266
      %v4268 = vrot.slane %v4263, %v4267
      %v4270 = vpack.i.b16 %v4247, %v4247
      %v4272 = vlaneseq
      %v4273 = vshrl.u32 %v4272, 7
      %v4274 = vsub.s32 3, %v4273
      %v4275 = vrot.slane %v4270, %v4274
      %v4280 = vunpack.c.l.b16 %v4254
      %v4281 = vunpack.c.l.b16 %v4261
      %v4282 = vunpack.c.l.b16 %v4268
      %v4283 = vunpack.c.l.b16 %v4275
      %v4284 = vpack.c.b16 %v4281, %v4280
      %v4285 = vpack.c.b16 %v4283, %v4282
      %4286 = vrot.lane.b32.xlu0 %v4284, 71
      %v4287 = vpop.permute.xlu0 %4286
      %4288 = vrot.lane.b32.xlu0 %v4285, 71
      %v4289 = vpop.permute.xlu0 %4288
      %v4290 = vrot.slane %v4287, 4
      %v4291 = vrot.slane %v4289, 4
      %v4292 = vsel %vm647, %v4290, %v4287
      %v4293 = vsel %vm412, %v4290, %v4291
      %v4294 = vsel %vm647, %v4293, %v4289
      %v4298 = vmul.bf16 %v4233, %v4292
      %v4299 = vmul.bf16 %v4234, %v4294
      %v4300 = vmul.bf16 %v4235, %v4291
      %4304 = vrot.lane.b32.xlu0 %v4298, 57
      %v4305 = vpop.permute.xlu0 %4304
      %4306 = vrot.lane.b32.xlu0 %v4299, 57
      %v4307 = vpop.permute.xlu0 %4306
      %4308 = vrot.lane.b32.xlu0 %v4300, 57
      %v4309 = vpop.permute.xlu0 %4308
      %v4310 = vrot.slane %v4305, 4
      %v4311 = vrot.slane %v4307, 4
      %v4312 = vrot.slane %v4309, 4
      %v4313 = vsel %vm412, %v4310, %v4311
      %v4314 = vsel %vm607, %v4305, %v4313
      %v4315 = vsel %vm412, %v4311, %v4312
      %v4316 = vsel %vm607, %v4307, %v4315
      %4319 = vst [vmem:[#allocation3 + $0x60] sm:$0xff] %v4314
      %4320 = vst [vmem:[#allocation3 + $0x68] sm:$0xff] %v4316
      %v4321 = vld [vmem:[#allocation2] sm:$0xff]
      %v4322 = vld [vmem:[#allocation2 + $0x8] sm:$0xff]
      %v4323 = vld [vmem:[#allocation2 + $0x10] sm:$0xf]
      %v4324 = vld [vmem:[%s7] sm:$0x88]
      %v4325 = vld [vmem:[%s7 + $0x8] sm:$0x88]
      %v4328 = vunpack.c.l.b16 %v4324
      %v4329 = vunpack.c.h.b16 %v4324
      %v4330 = vunpack.c.l.b16 %v4325
      %v4331 = vunpack.c.h.b16 %v4325
      %v4332 = vpack.c.b16 %v4328, %v4328
      %v4333 = vpack.c.b16 %v4329, %v4329
      %v4334 = vpack.c.b16 %v4330, %v4330
      %v4335 = vpack.c.b16 %v4331, %v4331
      %v4337 = vshrl.u32 %v4332, 16
      %v4338 = vpack.i.b16 %v4337, %v4337
      %v4340 = vlaneseq
      %v4341 = vshrl.u32 %v4340, 7
      %v4342 = vsub.s32 3, %v4341
      %v4343 = vrot.slane %v4338, %v4342
      %v4345 = vshrl.u32 %v4333, 16
      %v4346 = vpack.i.b16 %v4345, %v4345
      %v4348 = vlaneseq
      %v4349 = vshrl.u32 %v4348, 7
      %v4350 = vsub.s32 3, %v4349
      %v4351 = vrot.slane %v4346, %v4350
      %v4353 = vshrl.u32 %v4334, 16
      %v4354 = vpack.i.b16 %v4353, %v4353
      %v4356 = vlaneseq
      %v4357 = vshrl.u32 %v4356, 7
      %v4358 = vsub.s32 3, %v4357
      %v4359 = vrot.slane %v4354, %v4358
      %v4361 = vshrl.u32 %v4335, 16
      %v4362 = vpack.i.b16 %v4361, %v4361
      %v4364 = vlaneseq
      %v4365 = vshrl.u32 %v4364, 7
      %v4366 = vsub.s32 3, %v4365
      %v4367 = vrot.slane %v4362, %v4366
      %v4372 = vunpack.c.l.b16 %v4343
      %v4373 = vunpack.c.l.b16 %v4351
      %v4374 = vunpack.c.l.b16 %v4359
      %v4375 = vunpack.c.l.b16 %v4367
      %v4376 = vpack.c.b16 %v4373, %v4372
      %v4377 = vpack.c.b16 %v4375, %v4374
      %4378 = vrot.lane.b32.xlu0 %v4376, 72
      %v4379 = vpop.permute.xlu0 %4378
      %4380 = vrot.lane.b32.xlu0 %v4377, 72
      %v4381 = vpop.permute.xlu0 %4380
      %v4382 = vrot.slane %v4379, 4
      %v4383 = vrot.slane %v4381, 4
      %v4384 = vsel %vm533, %v4382, %v4379
      %v4385 = vsel %vm412, %v4382, %v4383
      %v4386 = vsel %vm533, %v4385, %v4381
      %v4390 = vmul.bf16 %v4321, %v4384
      %v4391 = vmul.bf16 %v4322, %v4386
      %v4392 = vmul.bf16 %v4323, %v4383
      %4396 = vrot.lane.b32.xlu0 %v4390, 56
      %v4397 = vpop.permute.xlu0 %4396
      %4398 = vrot.lane.b32.xlu0 %v4391, 56
      %v4399 = vpop.permute.xlu0 %4398
      %4400 = vrot.lane.b32.xlu0 %v4392, 56
      %v4401 = vpop.permute.xlu0 %4400
      %v4402 = vrot.slane %v4397, 4
      %v4403 = vrot.slane %v4399, 4
      %v4404 = vrot.slane %v4401, 4
      %v4405 = vsel %vm412, %v4402, %v4403
      %v4406 = vsel %vm492, %v4397, %v4405
      %v4407 = vsel %vm412, %v4403, %v4404
      %v4408 = vsel %vm492, %v4399, %v4407
      %4411 = vst [vmem:[#allocation3 + $0x70] sm:$0xff] %v4406
      %4412 = vst [vmem:[#allocation3 + $0x78] sm:$0xff] %v4408
      %v4413 = vld [vmem:[#allocation2] sm:$0xff]
      %v4414 = vld [vmem:[#allocation2 + $0x8] sm:$0xff]
      %v4415 = vld [vmem:[#allocation2 + $0x10] sm:$0xf]
      %v4416 = vld [vmem:[%s7 + $0x10] sm:$0x11]
      %v4417 = vld [vmem:[%s7 + $0x18] sm:$0x11]
      %v4420 = vunpack.c.l.b16 %v4416
      %v4421 = vunpack.c.h.b16 %v4416
      %v4422 = vunpack.c.l.b16 %v4417
      %v4423 = vunpack.c.h.b16 %v4417
      %v4424 = vpack.c.b16 %v4420, %v4420
      %v4425 = vpack.c.b16 %v4421, %v4421
      %v4426 = vpack.c.b16 %v4422, %v4422
      %v4427 = vpack.c.b16 %v4423, %v4423
      %v4429 = vpack.i.b16 %v4424, %v4424
      %v4431 = vlaneseq
      %v4432 = vshrl.u32 %v4431, 7
      %v4433 = vsub.s32 0, %v4432
      %v4434 = vrot.slane %v4429, %v4433
      %v4436 = vpack.i.b16 %v4425, %v4425
      %v4438 = vlaneseq
      %v4439 = vshrl.u32 %v4438, 7
      %v4440 = vsub.s32 0, %v4439
      %v4441 = vrot.slane %v4436, %v4440
      %v4443 = vpack.i.b16 %v4426, %v4426
      %v4445 = vlaneseq
      %v4446 = vshrl.u32 %v4445, 7
      %v4447 = vsub.s32 0, %v4446
      %v4448 = vrot.slane %v4443, %v4447
      %v4450 = vpack.i.b16 %v4427, %v4427
      %v4452 = vlaneseq
      %v4453 = vshrl.u32 %v4452, 7
      %v4454 = vsub.s32 0, %v4453
      %v4455 = vrot.slane %v4450, %v4454
      %v4460 = vunpack.c.l.b16 %v4434
      %v4461 = vunpack.c.l.b16 %v4441
      %v4462 = vunpack.c.l.b16 %v4448
      %v4463 = vunpack.c.l.b16 %v4455
      %v4464 = vpack.c.b16 %v4461, %v4460
      %v4465 = vpack.c.b16 %v4463, %v4462
      %4466 = vrot.lane.b32.xlu0 %v4464, 73
      %v4467 = vpop.permute.xlu0 %4466
      %4468 = vrot.lane.b32.xlu0 %v4465, 73
      %v4469 = vpop.permute.xlu0 %4468
      %v4470 = vrot.slane %v4467, 4
      %v4471 = vrot.slane %v4469, 4
      %v4472 = vsel %vm414, %v4470, %v4467
      %v4473 = vsel %vm412, %v4470, %v4471
      %v4474 = vsel %vm414, %v4473, %v4469
      %v4478 = vmul.bf16 %v4413, %v4472
      %v4479 = vmul.bf16 %v4414, %v4474
      %v4480 = vmul.bf16 %v4415, %v4471
      %4484 = vrot.lane.b32.xlu0 %v4478, 55
      %v4485 = vpop.permute.xlu0 %4484
      %4486 = vrot.lane.b32.xlu0 %v4479, 55
      %v4487 = vpop.permute.xlu0 %4486
      %4488 = vrot.lane.b32.xlu0 %v4480, 55
      %v4489 = vpop.permute.xlu0 %4488
      %v4490 = vrot.slane %v4485, 4
      %v4491 = vrot.slane %v4487, 4
      %v4492 = vrot.slane %v4489, 4
      %v4493 = vsel %vm412, %v4490, %v4491
      %v4494 = vsel %vm373, %v4485, %v4493
      %v4495 = vsel %vm412, %v4491, %v4492
      %v4496 = vsel %vm373, %v4487, %v4495
      %4499 = vst [vmem:[#allocation3 + $0x80] sm:$0xff] %v4494
      %4500 = vst [vmem:[#allocation3 + $0x88] sm:$0xff] %v4496
      %v4501 = vld [vmem:[#allocation2] sm:$0xff]
      %v4502 = vld [vmem:[#allocation2 + $0x8] sm:$0xff]
      %v4503 = vld [vmem:[#allocation2 + $0x10] sm:$0xf]
      %v4504 = vld [vmem:[%s7 + $0x10] sm:$0x11]
      %v4505 = vld [vmem:[%s7 + $0x18] sm:$0x11]
      %v4508 = vunpack.c.l.b16 %v4504
      %v4509 = vunpack.c.h.b16 %v4504
      %v4510 = vunpack.c.l.b16 %v4505
      %v4511 = vunpack.c.h.b16 %v4505
      %v4512 = vpack.c.b16 %v4508, %v4508
      %v4513 = vpack.c.b16 %v4509, %v4509
      %v4514 = vpack.c.b16 %v4510, %v4510
      %v4515 = vpack.c.b16 %v4511, %v4511
      %v4517 = vshrl.u32 %v4512, 16
      %v4518 = vpack.i.b16 %v4517, %v4517
      %v4520 = vlaneseq
      %v4521 = vshrl.u32 %v4520, 7
      %v4522 = vsub.s32 0, %v4521
      %v4523 = vrot.slane %v4518, %v4522
      %v4525 = vshrl.u32 %v4513, 16
      %v4526 = vpack.i.b16 %v4525, %v4525
      %v4528 = vlaneseq
      %v4529 = vshrl.u32 %v4528, 7
      %v4530 = vsub.s32 0, %v4529
      %v4531 = vrot.slane %v4526, %v4530
      %v4533 = vshrl.u32 %v4514, 16
      %v4534 = vpack.i.b16 %v4533, %v4533
      %v4536 = vlaneseq
      %v4537 = vshrl.u32 %v4536, 7
      %v4538 = vsub.s32 0, %v4537
      %v4539 = vrot.slane %v4534, %v4538
      %v4541 = vshrl.u32 %v4515, 16
      %v4542 = vpack.i.b16 %v4541, %v4541
      %v4544 = vlaneseq
      %v4545 = vshrl.u32 %v4544, 7
      %v4546 = vsub.s32 0, %v4545
      %v4547 = vrot.slane %v4542, %v4546
      %v4552 = vunpack.c.l.b16 %v4523
      %v4553 = vunpack.c.l.b16 %v4531
      %v4554 = vunpack.c.l.b16 %v4539
      %v4555 = vunpack.c.l.b16 %v4547
      %v4556 = vpack.c.b16 %v4553, %v4552
      %v4557 = vpack.c.b16 %v4555, %v4554
      %4558 = vrot.lane.b32.xlu0 %v4556, 119
      %v4559 = vpop.permute.xlu0 %4558
      %4560 = vrot.lane.b32.xlu0 %v4557, 119
      %v4561 = vpop.permute.xlu0 %4560
      %v4562 = vrot.slane %v4559, 4
      %v4563 = vrot.slane %v4561, 4
      %v4564 = vsel %vm1415, %v4562, %v4559
      %v4565 = vsel %vm412, %v4562, %v4563
      %v4566 = vsel %vm1415, %v4565, %v4561
      %v4570 = vmul.bf16 %v4501, %v4564
      %v4571 = vmul.bf16 %v4502, %v4566
      %v4572 = vmul.bf16 %v4503, %v4563
      %4576 = vrot.lane.b32.xlu0 %v4570, 9
      %v4577 = vpop.permute.xlu0 %4576
      %4578 = vrot.lane.b32.xlu0 %v4571, 9
      %v4579 = vpop.permute.xlu0 %4578
      %4580 = vrot.lane.b32.xlu0 %v4572, 9
      %v4581 = vpop.permute.xlu0 %4580
      %v4582 = vrot.slane %v4577, 4
      %v4583 = vrot.slane %v4579, 4
      %v4584 = vrot.slane %v4581, 4
      %v4585 = vsel %vm412, %v4582, %v4583
      %v4586 = vsel %vm1456, %v4577, %v4585
      %v4587 = vsel %vm412, %v4583, %v4584
      %v4588 = vsel %vm1456, %v4579, %v4587
      %4591 = vst [vmem:[#allocation3 + $0x90] sm:$0xff] %v4586
      %4592 = vst [vmem:[#allocation3 + $0x98] sm:$0xff] %v4588
      %v4593 = vld [vmem:[#allocation2] sm:$0xff]
      %v4594 = vld [vmem:[#allocation2 + $0x8] sm:$0xff]
      %v4595 = vld [vmem:[#allocation2 + $0x10] sm:$0xf]
      %v4596 = vld [vmem:[%s7 + $0x10] sm:$0x22]
      %v4597 = vld [vmem:[%s7 + $0x18] sm:$0x22]
      %v4600 = vunpack.c.l.b16 %v4596
      %v4601 = vunpack.c.h.b16 %v4596
      %v4602 = vunpack.c.l.b16 %v4597
      %v4603 = vunpack.c.h.b16 %v4597
      %v4604 = vpack.c.b16 %v4600, %v4600
      %v4605 = vpack.c.b16 %v4601, %v4601
      %v4606 = vpack.c.b16 %v4602, %v4602
      %v4607 = vpack.c.b16 %v4603, %v4603
      %v4609 = vpack.i.b16 %v4604, %v4604
      %v4611 = vlaneseq
      %v4612 = vshrl.u32 %v4611, 7
      %v4613 = vsub.s32 1, %v4612
      %v4614 = vrot.slane %v4609, %v4613
      %v4616 = vpack.i.b16 %v4605, %v4605
      %v4618 = vlaneseq
      %v4619 = vshrl.u32 %v4618, 7
      %v4620 = vsub.s32 1, %v4619
      %v4621 = vrot.slane %v4616, %v4620
      %v4623 = vpack.i.b16 %v4606, %v4606
      %v4625 = vlaneseq
      %v4626 = vshrl.u32 %v4625, 7
      %v4627 = vsub.s32 1, %v4626
      %v4628 = vrot.slane %v4623, %v4627
      %v4630 = vpack.i.b16 %v4607, %v4607
      %v4632 = vlaneseq
      %v4633 = vshrl.u32 %v4632, 7
      %v4634 = vsub.s32 1, %v4633
      %v4635 = vrot.slane %v4630, %v4634
      %v4640 = vunpack.c.l.b16 %v4614
      %v4641 = vunpack.c.l.b16 %v4621
      %v4642 = vunpack.c.l.b16 %v4628
      %v4643 = vunpack.c.l.b16 %v4635
      %v4644 = vpack.c.b16 %v4641, %v4640
      %v4645 = vpack.c.b16 %v4643, %v4642
      %4646 = vrot.lane.b32.xlu0 %v4644, 120
      %v4647 = vpop.permute.xlu0 %4646
      %4648 = vrot.lane.b32.xlu0 %v4645, 120
      %v4649 = vpop.permute.xlu0 %4648
      %v4650 = vrot.slane %v4647, 4
      %v4651 = vrot.slane %v4649, 4
      %v4652 = vsel %vm1530, %v4650, %v4647
      %v4653 = vsel %vm412, %v4650, %v4651
      %v4654 = vsel %vm1530, %v4653, %v4649
      %v4658 = vmul.bf16 %v4593, %v4652
      %v4659 = vmul.bf16 %v4594, %v4654
      %v4660 = vmul.bf16 %v4595, %v4651
      %4664 = vrot.lane.b32.xlu0 %v4658, 8
      %v4665 = vpop.permute.xlu0 %4664
      %4666 = vrot.lane.b32.xlu0 %v4659, 8
      %v4667 = vpop.permute.xlu0 %4666
      %4668 = vrot.lane.b32.xlu0 %v4660, 8
      %v4669 = vpop.permute.xlu0 %4668
      %v4670 = vrot.slane %v4665, 4
      %v4671 = vrot.slane %v4667, 4
      %v4672 = vrot.slane %v4669, 4
      %v4673 = vsel %vm412, %v4670, %v4671
      %v4674 = vsel %vm1570, %v4665, %v4673
      %v4675 = vsel %vm412, %v4671, %v4672
      %v4676 = vsel %vm1570, %v4667, %v4675
      %4679 = vst [vmem:[#allocation3 + $0xa0] sm:$0xff] %v4674
      %4680 = vst [vmem:[#allocation3 + $0xa8] sm:$0xff] %v4676
      %v4681 = vld [vmem:[#allocation2] sm:$0xff]
      %v4682 = vld [vmem:[#allocation2 + $0x8] sm:$0xff]
      %v4683 = vld [vmem:[#allocation2 + $0x10] sm:$0xf]
      %v4684 = vld [vmem:[%s7 + $0x10] sm:$0x22]
      %v4685 = vld [vmem:[%s7 + $0x18] sm:$0x22]
      %v4688 = vunpack.c.l.b16 %v4684
      %v4689 = vunpack.c.h.b16 %v4684
      %v4690 = vunpack.c.l.b16 %v4685
      %v4691 = vunpack.c.h.b16 %v4685
      %v4692 = vpack.c.b16 %v4688, %v4688
      %v4693 = vpack.c.b16 %v4689, %v4689
      %v4694 = vpack.c.b16 %v4690, %v4690
      %v4695 = vpack.c.b16 %v4691, %v4691
      %v4697 = vshrl.u32 %v4692, 16
      %v4698 = vpack.i.b16 %v4697, %v4697
      %v4700 = vlaneseq
      %v4701 = vshrl.u32 %v4700, 7
      %v4702 = vsub.s32 1, %v4701
      %v4703 = vrot.slane %v4698, %v4702
      %v4705 = vshrl.u32 %v4693, 16
      %v4706 = vpack.i.b16 %v4705, %v4705
      %v4708 = vlaneseq
      %v4709 = vshrl.u32 %v4708, 7
      %v4710 = vsub.s32 1, %v4709
      %v4711 = vrot.slane %v4706, %v4710
      %v4713 = vshrl.u32 %v4694, 16
      %v4714 = vpack.i.b16 %v4713, %v4713
      %v4716 = vlaneseq
      %v4717 = vshrl.u32 %v4716, 7
      %v4718 = vsub.s32 1, %v4717
      %v4719 = vrot.slane %v4714, %v4718
      %v4721 = vshrl.u32 %v4695, 16
      %v4722 = vpack.i.b16 %v4721, %v4721
      %v4724 = vlaneseq
      %v4725 = vshrl.u32 %v4724, 7
      %v4726 = vsub.s32 1, %v4725
      %v4727 = vrot.slane %v4722, %v4726
      %v4732 = vunpack.c.l.b16 %v4703
      %v4733 = vunpack.c.l.b16 %v4711
      %v4734 = vunpack.c.l.b16 %v4719
      %v4735 = vunpack.c.l.b16 %v4727
      %v4736 = vpack.c.b16 %v4733, %v4732
      %v4737 = vpack.c.b16 %v4735, %v4734
      %4738 = vrot.lane.b32.xlu0 %v4736, 121
      %v4739 = vpop.permute.xlu0 %4738
      %4740 = vrot.lane.b32.xlu0 %v4737, 121
      %v4741 = vpop.permute.xlu0 %4740
      %v4742 = vrot.slane %v4739, 4
      %v4743 = vrot.slane %v4741, 4
      %v4744 = vsel %vm1648, %v4742, %v4739
      %v4745 = vsel %vm412, %v4742, %v4743
      %v4746 = vsel %vm1648, %v4745, %v4741
      %v4750 = vmul.bf16 %v4681, %v4744
      %v4751 = vmul.bf16 %v4682, %v4746
      %v4752 = vmul.bf16 %v4683, %v4743
      %4756 = vrot.lane.b32.xlu0 %v4750, 7
      %v4757 = vpop.permute.xlu0 %4756
      %4758 = vrot.lane.b32.xlu0 %v4751, 7
      %v4759 = vpop.permute.xlu0 %4758
      %4760 = vrot.lane.b32.xlu0 %v4752, 7
      %v4761 = vpop.permute.xlu0 %4760
      %v4762 = vrot.slane %v4757, 4
      %v4763 = vrot.slane %v4759, 4
      %v4764 = vrot.slane %v4761, 4
      %v4765 = vsel %vm412, %v4762, %v4763
      %v4766 = vsel %vm1689, %v4757, %v4765
      %v4767 = vsel %vm412, %v4763, %v4764
      %v4768 = vsel %vm1689, %v4759, %v4767
      %4771 = vst [vmem:[#allocation3 + $0xb0] sm:$0xff] %v4766
      %4772 = vst [vmem:[#allocation3 + $0xb8] sm:$0xff] %v4768
      %v4773 = vld [vmem:[#allocation2] sm:$0xff]
      %v4774 = vld [vmem:[#allocation2 + $0x8] sm:$0xff]
      %v4775 = vld [vmem:[#allocation2 + $0x10] sm:$0xf]
      %v4776 = vld [vmem:[%s7 + $0x10] sm:$0x44]
      %v4777 = vld [vmem:[%s7 + $0x18] sm:$0x44]
      %v4780 = vunpack.c.l.b16 %v4776
      %v4781 = vunpack.c.h.b16 %v4776
      %v4782 = vunpack.c.l.b16 %v4777
      %v4783 = vunpack.c.h.b16 %v4777
      %v4784 = vpack.c.b16 %v4780, %v4780
      %v4785 = vpack.c.b16 %v4781, %v4781
      %v4786 = vpack.c.b16 %v4782, %v4782
      %v4787 = vpack.c.b16 %v4783, %v4783
      %v4789 = vpack.i.b16 %v4784, %v4784
      %v4791 = vlaneseq
      %v4792 = vshrl.u32 %v4791, 7
      %v4793 = vsub.s32 2, %v4792
      %v4794 = vrot.slane %v4789, %v4793
      %v4796 = vpack.i.b16 %v4785, %v4785
      %v4798 = vlaneseq
      %v4799 = vshrl.u32 %v4798, 7
      %v4800 = vsub.s32 2, %v4799
      %v4801 = vrot.slane %v4796, %v4800
      %v4803 = vpack.i.b16 %v4786, %v4786
      %v4805 = vlaneseq
      %v4806 = vshrl.u32 %v4805, 7
      %v4807 = vsub.s32 2, %v4806
      %v4808 = vrot.slane %v4803, %v4807
      %v4810 = vpack.i.b16 %v4787, %v4787
      %v4812 = vlaneseq
      %v4813 = vshrl.u32 %v4812, 7
      %v4814 = vsub.s32 2, %v4813
      %v4815 = vrot.slane %v4810, %v4814
      %v4820 = vunpack.c.l.b16 %v4794
      %v4821 = vunpack.c.l.b16 %v4801
      %v4822 = vunpack.c.l.b16 %v4808
      %v4823 = vunpack.c.l.b16 %v4815
      %v4824 = vpack.c.b16 %v4821, %v4820
      %v4825 = vpack.c.b16 %v4823, %v4822
      %4826 = vrot.lane.b32.xlu0 %v4824, 127
      %v4827 = vpop.permute.xlu0 %4826
      %4828 = vrot.lane.b32.xlu0 %v4825, 127
      %v4829 = vpop.permute.xlu0 %4828
      %v4830 = vrot.slane %v4827, 4
      %v4831 = vrot.slane %v4829, 4
      %v4832 = vsel %vm1763, %v4830, %v4827
      %v4833 = vsel %vm412, %v4830, %v4831
      %v4834 = vsel %vm1763, %v4833, %v4829
      %v4838 = vmul.bf16 %v4773, %v4832
      %v4839 = vmul.bf16 %v4774, %v4834
      %v4840 = vmul.bf16 %v4775, %v4831
      %4844 = vrot.lane.b32.xlu0 %v4838, 1
      %v4845 = vpop.permute.xlu0 %4844
      %4846 = vrot.lane.b32.xlu0 %v4839, 1
      %v4847 = vpop.permute.xlu0 %4846
      %4848 = vrot.lane.b32.xlu0 %v4840, 1
      %v4849 = vpop.permute.xlu0 %4848
      %v4850 = vrot.slane %v4845, 4
      %v4851 = vrot.slane %v4847, 4
      %v4852 = vrot.slane %v4849, 4
      %v4853 = vsel %vm412, %v4850, %v4851
      %v4854 = vsel %vm1803, %v4845, %v4853
      %v4855 = vsel %vm412, %v4851, %v4852
      %v4856 = vsel %vm1803, %v4847, %v4855
      %4859 = vst [vmem:[#allocation3 + $0xc0] sm:$0xff] %v4854
      %4860 = vst [vmem:[#allocation3 + $0xc8] sm:$0xff] %v4856
      %v4861 = vld [vmem:[#allocation2 + $0x4] sm:$0xff]
      %v4862 = vld [vmem:[#allocation2 + $0xc] sm:$0xff]
      %v4863 = vld [vmem:[%s7 + $0x10] sm:$0x44]
      %v4864 = vld [vmem:[%s7 + $0x18] sm:$0x44]
      %v4867 = vunpack.c.l.b16 %v4863
      %v4868 = vunpack.c.h.b16 %v4863
      %v4869 = vunpack.c.l.b16 %v4864
      %v4870 = vunpack.c.h.b16 %v4864
      %v4871 = vpack.c.b16 %v4867, %v4867
      %v4872 = vpack.c.b16 %v4868, %v4868
      %v4873 = vpack.c.b16 %v4869, %v4869
      %v4874 = vpack.c.b16 %v4870, %v4870
      %v4876 = vshrl.u32 %v4871, 16
      %v4877 = vpack.i.b16 %v4876, %v4876
      %v4879 = vlaneseq
      %v4880 = vshrl.u32 %v4879, 7
      %v4881 = vsub.s32 2, %v4880
      %v4882 = vrot.slane %v4877, %v4881
      %v4884 = vshrl.u32 %v4872, 16
      %v4885 = vpack.i.b16 %v4884, %v4884
      %v4887 = vlaneseq
      %v4888 = vshrl.u32 %v4887, 7
      %v4889 = vsub.s32 2, %v4888
      %v4890 = vrot.slane %v4885, %v4889
      %v4892 = vshrl.u32 %v4873, 16
      %v4893 = vpack.i.b16 %v4892, %v4892
      %v4895 = vlaneseq
      %v4896 = vshrl.u32 %v4895, 7
      %v4897 = vsub.s32 2, %v4896
      %v4898 = vrot.slane %v4893, %v4897
      %v4900 = vshrl.u32 %v4874, 16
      %v4901 = vpack.i.b16 %v4900, %v4900
      %v4903 = vlaneseq
      %v4904 = vshrl.u32 %v4903, 7
      %v4905 = vsub.s32 2, %v4904
      %v4906 = vrot.slane %v4901, %v4905
      %v4911 = vunpack.c.l.b16 %v4882
      %v4912 = vunpack.c.l.b16 %v4890
      %v4913 = vunpack.c.l.b16 %v4898
      %v4914 = vunpack.c.l.b16 %v4906
      %v4915 = vpack.c.b16 %v4912, %v4911
      %v4916 = vpack.c.b16 %v4914, %v4913
      %v4919 = vmul.bf16 %v4861, %v4915
      %v4920 = vmul.bf16 %v4862, %v4916
      %4921 = vst [vmem:[#allocation3 + $0xd0] sm:$0xff] %v4919
      %4922 = vst [vmem:[#allocation3 + $0xd8] sm:$0xff] %v4920
      %v4923 = vld [vmem:[#allocation2 + $0x4] sm:$0xff]
      %v4924 = vld [vmem:[#allocation2 + $0xc] sm:$0xff]
      %v4925 = vld [vmem:[#allocation2 + $0x14] sm:$0xf]
      %v4926 = vld [vmem:[%s7 + $0x10] sm:$0x88]
      %v4927 = vld [vmem:[%s7 + $0x18] sm:$0x88]
      %v4930 = vunpack.c.l.b16 %v4926
      %v4931 = vunpack.c.h.b16 %v4926
      %v4932 = vunpack.c.l.b16 %v4927
      %v4933 = vunpack.c.h.b16 %v4927
      %v4934 = vpack.c.b16 %v4930, %v4930
      %v4935 = vpack.c.b16 %v4931, %v4931
      %v4936 = vpack.c.b16 %v4932, %v4932
      %v4937 = vpack.c.b16 %v4933, %v4933
      %v4939 = vpack.i.b16 %v4934, %v4934
      %v4941 = vlaneseq
      %v4942 = vshrl.u32 %v4941, 7
      %v4943 = vsub.s32 3, %v4942
      %v4944 = vrot.slane %v4939, %v4943
      %v4946 = vpack.i.b16 %v4935, %v4935
      %v4948 = vlaneseq
      %v4949 = vshrl.u32 %v4948, 7
      %v4950 = vsub.s32 3, %v4949
      %v4951 = vrot.slane %v4946, %v4950
      %v4953 = vpack.i.b16 %v4936, %v4936
      %v4955 = vlaneseq
      %v4956 = vshrl.u32 %v4955, 7
      %v4957 = vsub.s32 3, %v4956
      %v4958 = vrot.slane %v4953, %v4957
      %v4960 = vpack.i.b16 %v4937, %v4937
      %v4962 = vlaneseq
      %v4963 = vshrl.u32 %v4962, 7
      %v4964 = vsub.s32 3, %v4963
      %v4965 = vrot.slane %v4960, %v4964
      %v4970 = vunpack.c.l.b16 %v4944
      %v4971 = vunpack.c.l.b16 %v4951
      %v4972 = vunpack.c.l.b16 %v4958
      %v4973 = vunpack.c.l.b16 %v4965
      %v4974 = vpack.c.b16 %v4971, %v4970
      %v4975 = vpack.c.b16 %v4973, %v4972
      %4976 = vrot.lane.b32.xlu0 %v4974, 1
      %v4977 = vpop.permute.xlu0 %4976
      %4978 = vrot.lane.b32.xlu0 %v4975, 1
      %v4979 = vpop.permute.xlu0 %4978
      %v4980 = vrot.slane %v4977, 4
      %v4981 = vrot.slane %v4979, 4
      %v4982 = vsel %vm1803, %v4980, %v4977
      %v4983 = vsel %vm412, %v4980, %v4981
      %v4984 = vsel %vm1803, %v4983, %v4979
      %v4988 = vmul.bf16 %v4923, %v4982
      %v4989 = vmul.bf16 %v4924, %v4984
      %v4990 = vmul.bf16 %v4925, %v4981
      %4994 = vrot.lane.b32.xlu0 %v4988, 127
      %v4995 = vpop.permute.xlu0 %4994
      %4996 = vrot.lane.b32.xlu0 %v4989, 127
      %v4997 = vpop.permute.xlu0 %4996
      %4998 = vrot.lane.b32.xlu0 %v4990, 127
      %v4999 = vpop.permute.xlu0 %4998
      %v5000 = vrot.slane %v4995, 4
      %v5001 = vrot.slane %v4997, 4
      %v5002 = vrot.slane %v4999, 4
      %v5003 = vsel %vm412, %v5000, %v5001
      %v5004 = vsel %vm1763, %v4995, %v5003
      %v5005 = vsel %vm412, %v5001, %v5002
      %v5006 = vsel %vm1763, %v4997, %v5005
      %5009 = vst [vmem:[#allocation3 + $0xe0] sm:$0xff] %v5004
      %5010 = vst [vmem:[#allocation3 + $0xe8] sm:$0xff] %v5006
      %v5011 = vld [vmem:[#allocation2 + $0x4] sm:$0xff]
      %v5012 = vld [vmem:[#allocation2 + $0xc] sm:$0xff]
      %v5013 = vld [vmem:[#allocation2 + $0x14] sm:$0xf]
      %v5014 = vld [vmem:[%s7 + $0x10] sm:$0x88]
      %v5015 = vld [vmem:[%s7 + $0x18] sm:$0x88]
      %v5018 = vunpack.c.l.b16 %v5014
      %v5019 = vunpack.c.h.b16 %v5014
      %v5020 = vunpack.c.l.b16 %v5015
      %v5021 = vunpack.c.h.b16 %v5015
      %v5022 = vpack.c.b16 %v5018, %v5018
      %v5023 = vpack.c.b16 %v5019, %v5019
      %v5024 = vpack.c.b16 %v5020, %v5020
      %v5025 = vpack.c.b16 %v5021, %v5021
      %v5027 = vshrl.u32 %v5022, 16
      %v5028 = vpack.i.b16 %v5027, %v5027
      %v5030 = vlaneseq
      %v5031 = vshrl.u32 %v5030, 7
      %v5032 = vsub.s32 3, %v5031
      %v5033 = vrot.slane %v5028, %v5032
      %v5035 = vshrl.u32 %v5023, 16
      %v5036 = vpack.i.b16 %v5035, %v5035
      %v5038 = vlaneseq
      %v5039 = vshrl.u32 %v5038, 7
      %v5040 = vsub.s32 3, %v5039
      %v5041 = vrot.slane %v5036, %v5040
      %v5043 = vshrl.u32 %v5024, 16
      %v5044 = vpack.i.b16 %v5043, %v5043
      %v5046 = vlaneseq
      %v5047 = vshrl.u32 %v5046, 7
      %v5048 = vsub.s32 3, %v5047
      %v5049 = vrot.slane %v5044, %v5048
      %v5051 = vshrl.u32 %v5025, 16
      %v5052 = vpack.i.b16 %v5051, %v5051
      %v5054 = vlaneseq
      %v5055 = vshrl.u32 %v5054, 7
      %v5056 = vsub.s32 3, %v5055
      %v5057 = vrot.slane %v5052, %v5056
      %v5062 = vunpack.c.l.b16 %v5033
      %v5063 = vunpack.c.l.b16 %v5041
      %v5064 = vunpack.c.l.b16 %v5049
      %v5065 = vunpack.c.l.b16 %v5057
      %v5066 = vpack.c.b16 %v5063, %v5062
      %v5067 = vpack.c.b16 %v5065, %v5064
      %5068 = vrot.lane.b32.xlu0 %v5066, 7
      %v5069 = vpop.permute.xlu0 %5068
      %5070 = vrot.lane.b32.xlu0 %v5067, 7
      %v5071 = vpop.permute.xlu0 %5070
      %v5072 = vrot.slane %v5069, 4
      %v5073 = vrot.slane %v5071, 4
      %v5074 = vsel %vm1689, %v5072, %v5069
      %v5075 = vsel %vm412, %v5072, %v5073
      %v5076 = vsel %vm1689, %v5075, %v5071
      %v5080 = vmul.bf16 %v5011, %v5074
      %v5081 = vmul.bf16 %v5012, %v5076
      %v5082 = vmul.bf16 %v5013, %v5073
      %5086 = vrot.lane.b32.xlu0 %v5080, 121
      %v5087 = vpop.permute.xlu0 %5086
      %5088 = vrot.lane.b32.xlu0 %v5081, 121
      %v5089 = vpop.permute.xlu0 %5088
      %5090 = vrot.lane.b32.xlu0 %v5082, 121
      %v5091 = vpop.permute.xlu0 %5090
      %v5092 = vrot.slane %v5087, 4
      %v5093 = vrot.slane %v5089, 4
      %v5094 = vrot.slane %v5091, 4
      %v5095 = vsel %vm412, %v5092, %v5093
      %v5096 = vsel %vm1648, %v5087, %v5095
      %v5097 = vsel %vm412, %v5093, %v5094
      %v5098 = vsel %vm1648, %v5089, %v5097
      %5101 = vst [vmem:[#allocation3 + $0xf0] sm:$0xff] %v5096
      %5102 = vst [vmem:[#allocation3 + $0xf8] sm:$0xff] %v5098
      %v5103 = vld [vmem:[#allocation2 + $0x4] sm:$0xff]
      %v5104 = vld [vmem:[#allocation2 + $0xc] sm:$0xff]
      %v5105 = vld [vmem:[#allocation2 + $0x14] sm:$0xf]
      %v5106 = vld [vmem:[%s7 + $0x20] sm:$0x11]
      %v5107 = vld [vmem:[%s7 + $0x28] sm:$0x11]
      %v5110 = vunpack.c.l.b16 %v5106
      %v5111 = vunpack.c.h.b16 %v5106
      %v5112 = vunpack.c.l.b16 %v5107
      %v5113 = vunpack.c.h.b16 %v5107
      %v5114 = vpack.c.b16 %v5110, %v5110
      %v5115 = vpack.c.b16 %v5111, %v5111
      %v5116 = vpack.c.b16 %v5112, %v5112
      %v5117 = vpack.c.b16 %v5113, %v5113
      %v5119 = vpack.i.b16 %v5114, %v5114
      %v5121 = vlaneseq
      %v5122 = vshrl.u32 %v5121, 7
      %v5123 = vsub.s32 0, %v5122
      %v5124 = vrot.slane %v5119, %v5123
      %v5126 = vpack.i.b16 %v5115, %v5115
      %v5128 = vlaneseq
      %v5129 = vshrl.u32 %v5128, 7
      %v5130 = vsub.s32 0, %v5129
      %v5131 = vrot.slane %v5126, %v5130
      %v5133 = vpack.i.b16 %v5116, %v5116
      %v5135 = vlaneseq
      %v5136 = vshrl.u32 %v5135, 7
      %v5137 = vsub.s32 0, %v5136
      %v5138 = vrot.slane %v5133, %v5137
      %v5140 = vpack.i.b16 %v5117, %v5117
      %v5142 = vlaneseq
      %v5143 = vshrl.u32 %v5142, 7
      %v5144 = vsub.s32 0, %v5143
      %v5145 = vrot.slane %v5140, %v5144
      %v5150 = vunpack.c.l.b16 %v5124
      %v5151 = vunpack.c.l.b16 %v5131
      %v5152 = vunpack.c.l.b16 %v5138
      %v5153 = vunpack.c.l.b16 %v5145
      %v5154 = vpack.c.b16 %v5151, %v5150
      %v5155 = vpack.c.b16 %v5153, %v5152
      %5156 = vrot.lane.b32.xlu0 %v5154, 8
      %v5157 = vpop.permute.xlu0 %5156
      %5158 = vrot.lane.b32.xlu0 %v5155, 8
      %v5159 = vpop.permute.xlu0 %5158
      %v5160 = vrot.slane %v5157, 4
      %v5161 = vrot.slane %v5159, 4
      %v5162 = vsel %vm1570, %v5160, %v5157
      %v5163 = vsel %vm412, %v5160, %v5161
      %v5164 = vsel %vm1570, %v5163, %v5159
      %v5168 = vmul.bf16 %v5103, %v5162
      %v5169 = vmul.bf16 %v5104, %v5164
      %v5170 = vmul.bf16 %v5105, %v5161
      %5174 = vrot.lane.b32.xlu0 %v5168, 120
      %v5175 = vpop.permute.xlu0 %5174
      %5176 = vrot.lane.b32.xlu0 %v5169, 120
      %v5177 = vpop.permute.xlu0 %5176
      %5178 = vrot.lane.b32.xlu0 %v5170, 120
      %v5179 = vpop.permute.xlu0 %5178
      %v5180 = vrot.slane %v5175, 4
      %v5181 = vrot.slane %v5177, 4
      %v5182 = vrot.slane %v5179, 4
      %v5183 = vsel %vm412, %v5180, %v5181
      %v5184 = vsel %vm1530, %v5175, %v5183
      %v5185 = vsel %vm412, %v5181, %v5182
      %v5186 = vsel %vm1530, %v5177, %v5185
      %5189 = vst [vmem:[#allocation3 + $0x100] sm:$0xff] %v5184
      %5190 = vst [vmem:[#allocation3 + $0x108] sm:$0xff] %v5186
      %v5191 = vld [vmem:[#allocation2 + $0x4] sm:$0xff]
      %v5192 = vld [vmem:[#allocation2 + $0xc] sm:$0xff]
      %v5193 = vld [vmem:[#allocation2 + $0x14] sm:$0xf]
      %v5194 = vld [vmem:[%s7 + $0x20] sm:$0x11]
      %v5195 = vld [vmem:[%s7 + $0x28] sm:$0x11]
      %v5198 = vunpack.c.l.b16 %v5194
      %v5199 = vunpack.c.h.b16 %v5194
      %v5200 = vunpack.c.l.b16 %v5195
      %v5201 = vunpack.c.h.b16 %v5195
      %v5202 = vpack.c.b16 %v5198, %v5198
      %v5203 = vpack.c.b16 %v5199, %v5199
      %v5204 = vpack.c.b16 %v5200, %v5200
      %v5205 = vpack.c.b16 %v5201, %v5201
      %v5207 = vshrl.u32 %v5202, 16
      %v5208 = vpack.i.b16 %v5207, %v5207
      %v5210 = vlaneseq
      %v5211 = vshrl.u32 %v5210, 7
      %v5212 = vsub.s32 0, %v5211
      %v5213 = vrot.slane %v5208, %v5212
      %v5215 = vshrl.u32 %v5203, 16
      %v5216 = vpack.i.b16 %v5215, %v5215
      %v5218 = vlaneseq
      %v5219 = vshrl.u32 %v5218, 7
      %v5220 = vsub.s32 0, %v5219
      %v5221 = vrot.slane %v5216, %v5220
      %v5223 = vshrl.u32 %v5204, 16
      %v5224 = vpack.i.b16 %v5223, %v5223
      %v5226 = vlaneseq
      %v5227 = vshrl.u32 %v5226, 7
      %v5228 = vsub.s32 0, %v5227
      %v5229 = vrot.slane %v5224, %v5228
      %v5231 = vshrl.u32 %v5205, 16
      %v5232 = vpack.i.b16 %v5231, %v5231
      %v5234 = vlaneseq
      %v5235 = vshrl.u32 %v5234, 7
      %v5236 = vsub.s32 0, %v5235
      %v5237 = vrot.slane %v5232, %v5236
      %v5242 = vunpack.c.l.b16 %v5213
      %v5243 = vunpack.c.l.b16 %v5221
      %v5244 = vunpack.c.l.b16 %v5229
      %v5245 = vunpack.c.l.b16 %v5237
      %v5246 = vpack.c.b16 %v5243, %v5242
      %v5247 = vpack.c.b16 %v5245, %v5244
      %5248 = vrot.lane.b32.xlu0 %v5246, 9
      %v5249 = vpop.permute.xlu0 %5248
      %5250 = vrot.lane.b32.xlu0 %v5247, 9
      %v5251 = vpop.permute.xlu0 %5250
      %v5252 = vrot.slane %v5249, 4
      %v5253 = vrot.slane %v5251, 4
      %v5254 = vsel %vm1456, %v5252, %v5249
      %v5255 = vsel %vm412, %v5252, %v5253
      %v5256 = vsel %vm1456, %v5255, %v5251
      %v5260 = vmul.bf16 %v5191, %v5254
      %v5261 = vmul.bf16 %v5192, %v5256
      %v5262 = vmul.bf16 %v5193, %v5253
      %5266 = vrot.lane.b32.xlu0 %v5260, 119
      %v5267 = vpop.permute.xlu0 %5266
      %5268 = vrot.lane.b32.xlu0 %v5261, 119
      %v5269 = vpop.permute.xlu0 %5268
      %5270 = vrot.lane.b32.xlu0 %v5262, 119
      %v5271 = vpop.permute.xlu0 %5270
      %v5272 = vrot.slane %v5267, 4
      %v5273 = vrot.slane %v5269, 4
      %v5274 = vrot.slane %v5271, 4
      %v5275 = vsel %vm412, %v5272, %v5273
      %v5276 = vsel %vm1415, %v5267, %v5275
      %v5277 = vsel %vm412, %v5273, %v5274
      %v5278 = vsel %vm1415, %v5269, %v5277
      %5281 = vst [vmem:[#allocation3 + $0x110] sm:$0xff] %v5276
      %5282 = vst [vmem:[#allocation3 + $0x118] sm:$0xff] %v5278
      %v5283 = vld [vmem:[#allocation2 + $0x4] sm:$0xff]
      %v5284 = vld [vmem:[#allocation2 + $0xc] sm:$0xff]
      %v5285 = vld [vmem:[#allocation2 + $0x14] sm:$0xf]
      %v5286 = vld [vmem:[%s7 + $0x20] sm:$0x22]
      %v5287 = vld [vmem:[%s7 + $0x28] sm:$0x22]
      %v5290 = vunpack.c.l.b16 %v5286
      %v5291 = vunpack.c.h.b16 %v5286
      %v5292 = vunpack.c.l.b16 %v5287
      %v5293 = vunpack.c.h.b16 %v5287
      %v5294 = vpack.c.b16 %v5290, %v5290
      %v5295 = vpack.c.b16 %v5291, %v5291
      %v5296 = vpack.c.b16 %v5292, %v5292
      %v5297 = vpack.c.b16 %v5293, %v5293
      %v5299 = vpack.i.b16 %v5294, %v5294
      %v5301 = vlaneseq
      %v5302 = vshrl.u32 %v5301, 7
      %v5303 = vsub.s32 1, %v5302
      %v5304 = vrot.slane %v5299, %v5303
      %v5306 = vpack.i.b16 %v5295, %v5295
      %v5308 = vlaneseq
      %v5309 = vshrl.u32 %v5308, 7
      %v5310 = vsub.s32 1, %v5309
      %v5311 = vrot.slane %v5306, %v5310
      %v5313 = vpack.i.b16 %v5296, %v5296
      %v5315 = vlaneseq
      %v5316 = vshrl.u32 %v5315, 7
      %v5317 = vsub.s32 1, %v5316
      %v5318 = vrot.slane %v5313, %v5317
      %v5320 = vpack.i.b16 %v5297, %v5297
      %v5322 = vlaneseq
      %v5323 = vshrl.u32 %v5322, 7
      %v5324 = vsub.s32 1, %v5323
      %v5325 = vrot.slane %v5320, %v5324
      %v5330 = vunpack.c.l.b16 %v5304
      %v5331 = vunpack.c.l.b16 %v5311
      %v5332 = vunpack.c.l.b16 %v5318
      %v5333 = vunpack.c.l.b16 %v5325
      %v5334 = vpack.c.b16 %v5331, %v5330
      %v5335 = vpack.c.b16 %v5333, %v5332
      %5336 = vrot.lane.b32.xlu0 %v5334, 55
      %v5337 = vpop.permute.xlu0 %5336
      %5338 = vrot.lane.b32.xlu0 %v5335, 55
      %v5339 = vpop.permute.xlu0 %5338
      %v5340 = vrot.slane %v5337, 4
      %v5341 = vrot.slane %v5339, 4
      %v5342 = vsel %vm373, %v5340, %v5337
      %v5343 = vsel %vm412, %v5340, %v5341
      %v5344 = vsel %vm373, %v5343, %v5339
      %v5348 = vmul.bf16 %v5283, %v5342
      %v5349 = vmul.bf16 %v5284, %v5344
      %v5350 = vmul.bf16 %v5285, %v5341
      %5354 = vrot.lane.b32.xlu0 %v5348, 73
      %v5355 = vpop.permute.xlu0 %5354
      %5356 = vrot.lane.b32.xlu0 %v5349, 73
      %v5357 = vpop.permute.xlu0 %5356
      %5358 = vrot.lane.b32.xlu0 %v5350, 73
      %v5359 = vpop.permute.xlu0 %5358
      %v5360 = vrot.slane %v5355, 4
      %v5361 = vrot.slane %v5357, 4
      %v5362 = vrot.slane %v5359, 4
      %v5363 = vsel %vm412, %v5360, %v5361
      %v5364 = vsel %vm414, %v5355, %v5363
      %v5365 = vsel %vm412, %v5361, %v5362
      %v5366 = vsel %vm414, %v5357, %v5365
      %5369 = vst [vmem:[#allocation3 + $0x120] sm:$0xff] %v5364
      %5370 = vst [vmem:[#allocation3 + $0x128] sm:$0xff] %v5366
      %v5371 = vld [vmem:[#allocation2 + $0x4] sm:$0xff]
      %v5372 = vld [vmem:[#allocation2 + $0xc] sm:$0xff]
      %v5373 = vld [vmem:[#allocation2 + $0x14] sm:$0xf]
      %v5374 = vld [vmem:[%s7 + $0x20] sm:$0x22]
      %v5375 = vld [vmem:[%s7 + $0x28] sm:$0x22]
      %v5378 = vunpack.c.l.b16 %v5374
      %v5379 = vunpack.c.h.b16 %v5374
      %v5380 = vunpack.c.l.b16 %v5375
      %v5381 = vunpack.c.h.b16 %v5375
      %v5382 = vpack.c.b16 %v5378, %v5378
      %v5383 = vpack.c.b16 %v5379, %v5379
      %v5384 = vpack.c.b16 %v5380, %v5380
      %v5385 = vpack.c.b16 %v5381, %v5381
      %v5387 = vshrl.u32 %v5382, 16
      %v5388 = vpack.i.b16 %v5387, %v5387
      %v5390 = vlaneseq
      %v5391 = vshrl.u32 %v5390, 7
      %v5392 = vsub.s32 1, %v5391
      %v5393 = vrot.slane %v5388, %v5392
      %v5395 = vshrl.u32 %v5383, 16
      %v5396 = vpack.i.b16 %v5395, %v5395
      %v5398 = vlaneseq
      %v5399 = vshrl.u32 %v5398, 7
      %v5400 = vsub.s32 1, %v5399
      %v5401 = vrot.slane %v5396, %v5400
      %v5403 = vshrl.u32 %v5384, 16
      %v5404 = vpack.i.b16 %v5403, %v5403
      %v5406 = vlaneseq
      %v5407 = vshrl.u32 %v5406, 7
      %v5408 = vsub.s32 1, %v5407
      %v5409 = vrot.slane %v5404, %v5408
      %v5411 = vshrl.u32 %v5385, 16
      %v5412 = vpack.i.b16 %v5411, %v5411
      %v5414 = vlaneseq
      %v5415 = vshrl.u32 %v5414, 7
      %v5416 = vsub.s32 1, %v5415
      %v5417 = vrot.slane %v5412, %v5416
      %v5422 = vunpack.c.l.b16 %v5393
      %v5423 = vunpack.c.l.b16 %v5401
      %v5424 = vunpack.c.l.b16 %v5409
      %v5425 = vunpack.c.l.b16 %v5417
      %v5426 = vpack.c.b16 %v5423, %v5422
      %v5427 = vpack.c.b16 %v5425, %v5424
      %5428 = vrot.lane.b32.xlu0 %v5426, 56
      %v5429 = vpop.permute.xlu0 %5428
      %5430 = vrot.lane.b32.xlu0 %v5427, 56
      %v5431 = vpop.permute.xlu0 %5430
      %v5432 = vrot.slane %v5429, 4
      %v5433 = vrot.slane %v5431, 4
      %v5434 = vsel %vm492, %v5432, %v5429
      %v5435 = vsel %vm412, %v5432, %v5433
      %v5436 = vsel %vm492, %v5435, %v5431
      %v5440 = vmul.bf16 %v5371, %v5434
      %v5441 = vmul.bf16 %v5372, %v5436
      %v5442 = vmul.bf16 %v5373, %v5433
      %5446 = vrot.lane.b32.xlu0 %v5440, 72
      %v5447 = vpop.permute.xlu0 %5446
      %5448 = vrot.lane.b32.xlu0 %v5441, 72
      %v5449 = vpop.permute.xlu0 %5448
      %5450 = vrot.lane.b32.xlu0 %v5442, 72
      %v5451 = vpop.permute.xlu0 %5450
      %v5452 = vrot.slane %v5447, 4
      %v5453 = vrot.slane %v5449, 4
      %v5454 = vrot.slane %v5451, 4
      %v5455 = vsel %vm412, %v5452, %v5453
      %v5456 = vsel %vm533, %v5447, %v5455
      %v5457 = vsel %vm412, %v5453, %v5454
      %v5458 = vsel %vm533, %v5449, %v5457
      %5461 = vst [vmem:[#allocation3 + $0x130] sm:$0xff] %v5456
      %5462 = vst [vmem:[#allocation3 + $0x138] sm:$0xff] %v5458
      %v5463 = vld [vmem:[#allocation2 + $0x4] sm:$0xff]
      %v5464 = vld [vmem:[#allocation2 + $0xc] sm:$0xff]
      %v5465 = vld [vmem:[#allocation2 + $0x14] sm:$0xf]
      %v5466 = vld [vmem:[%s7 + $0x20] sm:$0x44]
      %v5467 = vld [vmem:[%s7 + $0x28] sm:$0x44]
      %v5470 = vunpack.c.l.b16 %v5466
      %v5471 = vunpack.c.h.b16 %v5466
      %v5472 = vunpack.c.l.b16 %v5467
      %v5473 = vunpack.c.h.b16 %v5467
      %v5474 = vpack.c.b16 %v5470, %v5470
      %v5475 = vpack.c.b16 %v5471, %v5471
      %v5476 = vpack.c.b16 %v5472, %v5472
      %v5477 = vpack.c.b16 %v5473, %v5473
      %v5479 = vpack.i.b16 %v5474, %v5474
      %v5481 = vlaneseq
      %v5482 = vshrl.u32 %v5481, 7
      %v5483 = vsub.s32 2, %v5482
      %v5484 = vrot.slane %v5479, %v5483
      %v5486 = vpack.i.b16 %v5475, %v5475
      %v5488 = vlaneseq
      %v5489 = vshrl.u32 %v5488, 7
      %v5490 = vsub.s32 2, %v5489
      %v5491 = vrot.slane %v5486, %v5490
      %v5493 = vpack.i.b16 %v5476, %v5476
      %v5495 = vlaneseq
      %v5496 = vshrl.u32 %v5495, 7
      %v5497 = vsub.s32 2, %v5496
      %v5498 = vrot.slane %v5493, %v5497
      %v5500 = vpack.i.b16 %v5477, %v5477
      %v5502 = vlaneseq
      %v5503 = vshrl.u32 %v5502, 7
      %v5504 = vsub.s32 2, %v5503
      %v5505 = vrot.slane %v5500, %v5504
      %v5510 = vunpack.c.l.b16 %v5484
      %v5511 = vunpack.c.l.b16 %v5491
      %v5512 = vunpack.c.l.b16 %v5498
      %v5513 = vunpack.c.l.b16 %v5505
      %v5514 = vpack.c.b16 %v5511, %v5510
      %v5515 = vpack.c.b16 %v5513, %v5512
      %5516 = vrot.lane.b32.xlu0 %v5514, 57
      %v5517 = vpop.permute.xlu0 %5516
      %5518 = vrot.lane.b32.xlu0 %v5515, 57
      %v5519 = vpop.permute.xlu0 %5518
      %v5520 = vrot.slane %v5517, 4
      %v5521 = vrot.slane %v5519, 4
      %v5522 = vsel %vm607, %v5520, %v5517
      %v5523 = vsel %vm412, %v5520, %v5521
      %v5524 = vsel %vm607, %v5523, %v5519
      %v5528 = vmul.bf16 %v5463, %v5522
      %v5529 = vmul.bf16 %v5464, %v5524
      %v5530 = vmul.bf16 %v5465, %v5521
      %5534 = vrot.lane.b32.xlu0 %v5528, 71
      %v5535 = vpop.permute.xlu0 %5534
      %5536 = vrot.lane.b32.xlu0 %v5529, 71
      %v5537 = vpop.permute.xlu0 %5536
      %5538 = vrot.lane.b32.xlu0 %v5530, 71
      %v5539 = vpop.permute.xlu0 %5538
      %v5540 = vrot.slane %v5535, 4
      %v5541 = vrot.slane %v5537, 4
      %v5542 = vrot.slane %v5539, 4
      %v5543 = vsel %vm412, %v5540, %v5541
      %v5544 = vsel %vm647, %v5535, %v5543
      %v5545 = vsel %vm412, %v5541, %v5542
      %v5546 = vsel %vm647, %v5537, %v5545
      %5549 = vst [vmem:[#allocation3 + $0x140] sm:$0xff] %v5544
      %5550 = vst [vmem:[#allocation3 + $0x148] sm:$0xff] %v5546
      %v5551 = vld [vmem:[#allocation2 + $0x4] sm:$0xff]
      %v5552 = vld [vmem:[#allocation2 + $0xc] sm:$0xff]
      %v5553 = vld [vmem:[#allocation2 + $0x14] sm:$0xf]
      %v5554 = vld [vmem:[%s7 + $0x20] sm:$0x44]
      %v5555 = vld [vmem:[%s7 + $0x28] sm:$0x44]
      %v5558 = vunpack.c.l.b16 %v5554
      %v5559 = vunpack.c.h.b16 %v5554
      %v5560 = vunpack.c.l.b16 %v5555
      %v5561 = vunpack.c.h.b16 %v5555
      %v5562 = vpack.c.b16 %v5558, %v5558
      %v5563 = vpack.c.b16 %v5559, %v5559
      %v5564 = vpack.c.b16 %v5560, %v5560
      %v5565 = vpack.c.b16 %v5561, %v5561
      %v5567 = vshrl.u32 %v5562, 16
      %v5568 = vpack.i.b16 %v5567, %v5567
      %v5570 = vlaneseq
      %v5571 = vshrl.u32 %v5570, 7
      %v5572 = vsub.s32 2, %v5571
      %v5573 = vrot.slane %v5568, %v5572
      %v5575 = vshrl.u32 %v5563, 16
      %v5576 = vpack.i.b16 %v5575, %v5575
      %v5578 = vlaneseq
      %v5579 = vshrl.u32 %v5578, 7
      %v5580 = vsub.s32 2, %v5579
      %v5581 = vrot.slane %v5576, %v5580
      %v5583 = vshrl.u32 %v5564, 16
      %v5584 = vpack.i.b16 %v5583, %v5583
      %v5586 = vlaneseq
      %v5587 = vshrl.u32 %v5586, 7
      %v5588 = vsub.s32 2, %v5587
      %v5589 = vrot.slane %v5584, %v5588
      %v5591 = vshrl.u32 %v5565, 16
      %v5592 = vpack.i.b16 %v5591, %v5591
      %v5594 = vlaneseq
      %v5595 = vshrl.u32 %v5594, 7
      %v5596 = vsub.s32 2, %v5595
      %v5597 = vrot.slane %v5592, %v5596
      %v5602 = vunpack.c.l.b16 %v5573
      %v5603 = vunpack.c.l.b16 %v5581
      %v5604 = vunpack.c.l.b16 %v5589
      %v5605 = vunpack.c.l.b16 %v5597
      %v5606 = vpack.c.b16 %v5603, %v5602
      %v5607 = vpack.c.b16 %v5605, %v5604
      %5608 = vrot.lane.b32.xlu0 %v5606, 63
      %v5609 = vpop.permute.xlu0 %5608
      %5610 = vrot.lane.b32.xlu0 %v5607, 63
      %v5611 = vpop.permute.xlu0 %5610
      %v5612 = vrot.slane %v5609, 4
      %v5613 = vrot.slane %v5611, 4
      %v5614 = vsel %vm725, %v5612, %v5609
      %v5615 = vsel %vm412, %v5612, %v5613
      %v5616 = vsel %vm725, %v5615, %v5611
      %v5620 = vmul.bf16 %v5551, %v5614
      %v5621 = vmul.bf16 %v5552, %v5616
      %v5622 = vmul.bf16 %v5553, %v5613
      %5626 = vrot.lane.b32.xlu0 %v5620, 65
      %v5627 = vpop.permute.xlu0 %5626
      %5628 = vrot.lane.b32.xlu0 %v5621, 65
      %v5629 = vpop.permute.xlu0 %5628
      %5630 = vrot.lane.b32.xlu0 %v5622, 65
      %v5631 = vpop.permute.xlu0 %5630
      %v5632 = vrot.slane %v5627, 4
      %v5633 = vrot.slane %v5629, 4
      %v5634 = vrot.slane %v5631, 4
      %v5635 = vsel %vm412, %v5632, %v5633
      %v5636 = vsel %vm766, %v5627, %v5635
      %v5637 = vsel %vm412, %v5633, %v5634
      %v5638 = vsel %vm766, %v5629, %v5637
      %5641 = vst [vmem:[#allocation3 + $0x150] sm:$0xff] %v5636
      %5642 = vst [vmem:[#allocation3 + $0x158] sm:$0xff] %v5638
      %v5643 = vld [vmem:[#allocation2 + $0x4] sm:$0xff]
      %v5644 = vld [vmem:[#allocation2 + $0xc] sm:$0xff]
      %v5645 = vld [vmem:[#allocation2 + $0x14] sm:$0xf]
      %v5646 = vld [vmem:[%s7 + $0x20] sm:$0x88]
      %v5647 = vld [vmem:[%s7 + $0x28] sm:$0x88]
      %v5650 = vunpack.c.l.b16 %v5646
      %v5651 = vunpack.c.h.b16 %v5646
      %v5652 = vunpack.c.l.b16 %v5647
      %v5653 = vunpack.c.h.b16 %v5647
      %v5654 = vpack.c.b16 %v5650, %v5650
      %v5655 = vpack.c.b16 %v5651, %v5651
      %v5656 = vpack.c.b16 %v5652, %v5652
      %v5657 = vpack.c.b16 %v5653, %v5653
      %v5659 = vpack.i.b16 %v5654, %v5654
      %v5661 = vlaneseq
      %v5662 = vshrl.u32 %v5661, 7
      %v5663 = vsub.s32 3, %v5662
      %v5664 = vrot.slane %v5659, %v5663
      %v5666 = vpack.i.b16 %v5655, %v5655
      %v5668 = vlaneseq
      %v5669 = vshrl.u32 %v5668, 7
      %v5670 = vsub.s32 3, %v5669
      %v5671 = vrot.slane %v5666, %v5670
      %v5673 = vpack.i.b16 %v5656, %v5656
      %v5675 = vlaneseq
      %v5676 = vshrl.u32 %v5675, 7
      %v5677 = vsub.s32 3, %v5676
      %v5678 = vrot.slane %v5673, %v5677
      %v5680 = vpack.i.b16 %v5657, %v5657
      %v5682 = vlaneseq
      %v5683 = vshrl.u32 %v5682, 7
      %v5684 = vsub.s32 3, %v5683
      %v5685 = vrot.slane %v5680, %v5684
      %v5690 = vunpack.c.l.b16 %v5664
      %v5691 = vunpack.c.l.b16 %v5671
      %v5692 = vunpack.c.l.b16 %v5678
      %v5693 = vunpack.c.l.b16 %v5685
      %v5694 = vpack.c.b16 %v5691, %v5690
      %v5695 = vpack.c.b16 %v5693, %v5692
      %5696 = vrot.lane.b32.xlu0 %v5694, 64
      %v5697 = vpop.permute.xlu0 %5696
      %5698 = vrot.lane.b32.xlu0 %v5695, 64
      %v5699 = vpop.permute.xlu0 %5698
      %v5700 = vrot.slane %v5697, 4
      %v5701 = vrot.slane %v5699, 4
      %v5702 = vsel %vm840, %v5700, %v5697
      %v5703 = vsel %vm412, %v5700, %v5701
      %v5704 = vsel %vm840, %v5703, %v5699
      %v5708 = vmul.bf16 %v5643, %v5702
      %v5709 = vmul.bf16 %v5644, %v5704
      %v5710 = vmul.bf16 %v5645, %v5701
      %5714 = vrot.lane.b32.xlu0 %v5708, 64
      %v5715 = vpop.permute.xlu0 %5714
      %5716 = vrot.lane.b32.xlu0 %v5709, 64
      %v5717 = vpop.permute.xlu0 %5716
      %5718 = vrot.lane.b32.xlu0 %v5710, 64
      %v5719 = vpop.permute.xlu0 %5718
      %v5720 = vrot.slane %v5715, 4
      %v5721 = vrot.slane %v5717, 4
      %v5722 = vrot.slane %v5719, 4
      %v5723 = vsel %vm412, %v5720, %v5721
      %v5724 = vsel %vm840, %v5715, %v5723
      %v5725 = vsel %vm412, %v5721, %v5722
      %v5726 = vsel %vm840, %v5717, %v5725
      %5729 = vst [vmem:[#allocation3 + $0x160] sm:$0xff] %v5724
      %5730 = vst [vmem:[#allocation3 + $0x168] sm:$0xff] %v5726
      %v5731 = vld [vmem:[#allocation2 + $0x4] sm:$0xff]
      %v5732 = vld [vmem:[#allocation2 + $0xc] sm:$0xff]
      %v5733 = vld [vmem:[#allocation2 + $0x14] sm:$0xf]
      %v5734 = vld [vmem:[%s7 + $0x20] sm:$0x88]
      %v5735 = vld [vmem:[%s7 + $0x28] sm:$0x88]
      %v5738 = vunpack.c.l.b16 %v5734
      %v5739 = vunpack.c.h.b16 %v5734
      %v5740 = vunpack.c.l.b16 %v5735
      %v5741 = vunpack.c.h.b16 %v5735
      %v5742 = vpack.c.b16 %v5738, %v5738
      %v5743 = vpack.c.b16 %v5739, %v5739
      %v5744 = vpack.c.b16 %v5740, %v5740
      %v5745 = vpack.c.b16 %v5741, %v5741
      %v5747 = vshrl.u32 %v5742, 16
      %v5748 = vpack.i.b16 %v5747, %v5747
      %v5750 = vlaneseq
      %v5751 = vshrl.u32 %v5750, 7
      %v5752 = vsub.s32 3, %v5751
      %v5753 = vrot.slane %v5748, %v5752
      %v5755 = vshrl.u32 %v5743, 16
      %v5756 = vpack.i.b16 %v5755, %v5755
      %v5758 = vlaneseq
      %v5759 = vshrl.u32 %v5758, 7
      %v5760 = vsub.s32 3, %v5759
      %v5761 = vrot.slane %v5756, %v5760
      %v5763 = vshrl.u32 %v5744, 16
      %v5764 = vpack.i.b16 %v5763, %v5763
      %v5766 = vlaneseq
      %v5767 = vshrl.u32 %v5766, 7
      %v5768 = vsub.s32 3, %v5767
      %v5769 = vrot.slane %v5764, %v5768
      %v5771 = vshrl.u32 %v5745, 16
      %v5772 = vpack.i.b16 %v5771, %v5771
      %v5774 = vlaneseq
      %v5775 = vshrl.u32 %v5774, 7
      %v5776 = vsub.s32 3, %v5775
      %v5777 = vrot.slane %v5772, %v5776
      %v5782 = vunpack.c.l.b16 %v5753
      %v5783 = vunpack.c.l.b16 %v5761
      %v5784 = vunpack.c.l.b16 %v5769
      %v5785 = vunpack.c.l.b16 %v5777
      %v5786 = vpack.c.b16 %v5783, %v5782
      %v5787 = vpack.c.b16 %v5785, %v5784
      %5788 = vrot.lane.b32.xlu0 %v5786, 65
      %v5789 = vpop.permute.xlu0 %5788
      %5790 = vrot.lane.b32.xlu0 %v5787, 65
      %v5791 = vpop.permute.xlu0 %5790
      %v5792 = vrot.slane %v5789, 4
      %v5793 = vrot.slane %v5791, 4
      %v5794 = vsel %vm766, %v5792, %v5789
      %v5795 = vsel %vm412, %v5792, %v5793
      %v5796 = vsel %vm766, %v5795, %v5791
      %v5800 = vmul.bf16 %v5731, %v5794
      %v5801 = vmul.bf16 %v5732, %v5796
      %v5802 = vmul.bf16 %v5733, %v5793
      %5806 = vrot.lane.b32.xlu0 %v5800, 63
      %v5807 = vpop.permute.xlu0 %5806
      %5808 = vrot.lane.b32.xlu0 %v5801, 63
      %v5809 = vpop.permute.xlu0 %5808
      %5810 = vrot.lane.b32.xlu0 %v5802, 63
      %v5811 = vpop.permute.xlu0 %5810
      %v5812 = vrot.slane %v5807, 4
      %v5813 = vrot.slane %v5809, 4
      %v5814 = vrot.slane %v5811, 4
      %v5815 = vsel %vm412, %v5812, %v5813
      %v5816 = vsel %vm725, %v5807, %v5815
      %v5817 = vsel %vm412, %v5813, %v5814
      %v5818 = vsel %vm725, %v5809, %v5817
      %5821 = vst [vmem:[#allocation3 + $0x170] sm:$0xff] %v5816
      %5822 = vst [vmem:[#allocation3 + $0x178] sm:$0xff] %v5818
      %v5823 = vld [vmem:[#allocation2 + $0x4] sm:$0xff]
      %v5824 = vld [vmem:[#allocation2 + $0xc] sm:$0xff]
      %v5825 = vld [vmem:[#allocation2 + $0x14] sm:$0xf]
      %v5826 = vld [vmem:[%s7 + $0x30] sm:$0x11]
      %v5827 = vld [vmem:[%s7 + $0x38] sm:$0x11]
      %v5830 = vunpack.c.l.b16 %v5826
      %v5831 = vunpack.c.h.b16 %v5826
      %v5832 = vunpack.c.l.b16 %v5827
      %v5833 = vunpack.c.h.b16 %v5827
      %v5834 = vpack.c.b16 %v5830, %v5830
      %v5835 = vpack.c.b16 %v5831, %v5831
      %v5836 = vpack.c.b16 %v5832, %v5832
      %v5837 = vpack.c.b16 %v5833, %v5833
      %v5839 = vpack.i.b16 %v5834, %v5834
      %v5841 = vlaneseq
      %v5842 = vshrl.u32 %v5841, 7
      %v5843 = vsub.s32 0, %v5842
      %v5844 = vrot.slane %v5839, %v5843
      %v5846 = vpack.i.b16 %v5835, %v5835
      %v5848 = vlaneseq
      %v5849 = vshrl.u32 %v5848, 7
      %v5850 = vsub.s32 0, %v5849
      %v5851 = vrot.slane %v5846, %v5850
      %v5853 = vpack.i.b16 %v5836, %v5836
      %v5855 = vlaneseq
      %v5856 = vshrl.u32 %v5855, 7
      %v5857 = vsub.s32 0, %v5856
      %v5858 = vrot.slane %v5853, %v5857
      %v5860 = vpack.i.b16 %v5837, %v5837
      %v5862 = vlaneseq
      %v5863 = vshrl.u32 %v5862, 7
      %v5864 = vsub.s32 0, %v5863
      %v5865 = vrot.slane %v5860, %v5864
      %v5870 = vunpack.c.l.b16 %v5844
      %v5871 = vunpack.c.l.b16 %v5851
      %v5872 = vunpack.c.l.b16 %v5858
      %v5873 = vunpack.c.l.b16 %v5865
      %v5874 = vpack.c.b16 %v5871, %v5870
      %v5875 = vpack.c.b16 %v5873, %v5872
      %5876 = vrot.lane.b32.xlu0 %v5874, 71
      %v5877 = vpop.permute.xlu0 %5876
      %5878 = vrot.lane.b32.xlu0 %v5875, 71
      %v5879 = vpop.permute.xlu0 %5878
      %v5880 = vrot.slane %v5877, 4
      %v5881 = vrot.slane %v5879, 4
      %v5882 = vsel %vm647, %v5880, %v5877
      %v5883 = vsel %vm412, %v5880, %v5881
      %v5884 = vsel %vm647, %v5883, %v5879
      %v5888 = vmul.bf16 %v5823, %v5882
      %v5889 = vmul.bf16 %v5824, %v5884
      %v5890 = vmul.bf16 %v5825, %v5881
      %5894 = vrot.lane.b32.xlu0 %v5888, 57
      %v5895 = vpop.permute.xlu0 %5894
      %5896 = vrot.lane.b32.xlu0 %v5889, 57
      %v5897 = vpop.permute.xlu0 %5896
      %5898 = vrot.lane.b32.xlu0 %v5890, 57
      %v5899 = vpop.permute.xlu0 %5898
      %v5900 = vrot.slane %v5895, 4
      %v5901 = vrot.slane %v5897, 4
      %v5902 = vrot.slane %v5899, 4
      %v5903 = vsel %vm412, %v5900, %v5901
      %v5904 = vsel %vm607, %v5895, %v5903
      %v5905 = vsel %vm412, %v5901, %v5902
      %v5906 = vsel %vm607, %v5897, %v5905
      %5909 = vst [vmem:[#allocation3 + $0x180] sm:$0xff] %v5904
      %5910 = vst [vmem:[#allocation3 + $0x188] sm:$0xff] %v5906
      %v5911 = vld [vmem:[#allocation2 + $0x4] sm:$0xff]
      %v5912 = vld [vmem:[#allocation2 + $0xc] sm:$0xff]
      %v5913 = vld [vmem:[#allocation2 + $0x14] sm:$0xf]
      %v5914 = vld [vmem:[%s7 + $0x30] sm:$0x11]
      %v5915 = vld [vmem:[%s7 + $0x38] sm:$0x11]
      %v5918 = vunpack.c.l.b16 %v5914
      %v5919 = vunpack.c.h.b16 %v5914
      %v5920 = vunpack.c.l.b16 %v5915
      %v5921 = vunpack.c.h.b16 %v5915
      %v5922 = vpack.c.b16 %v5918, %v5918
      %v5923 = vpack.c.b16 %v5919, %v5919
      %v5924 = vpack.c.b16 %v5920, %v5920
      %v5925 = vpack.c.b16 %v5921, %v5921
      %v5927 = vshrl.u32 %v5922, 16
      %v5928 = vpack.i.b16 %v5927, %v5927
      %v5930 = vlaneseq
      %v5931 = vshrl.u32 %v5930, 7
      %v5932 = vsub.s32 0, %v5931
      %v5933 = vrot.slane %v5928, %v5932
      %v5935 = vshrl.u32 %v5923, 16
      %v5936 = vpack.i.b16 %v5935, %v5935
      %v5938 = vlaneseq
      %v5939 = vshrl.u32 %v5938, 7
      %v5940 = vsub.s32 0, %v5939
      %v5941 = vrot.slane %v5936, %v5940
      %v5943 = vshrl.u32 %v5924, 16
      %v5944 = vpack.i.b16 %v5943, %v5943
      %v5946 = vlaneseq
      %v5947 = vshrl.u32 %v5946, 7
      %v5948 = vsub.s32 0, %v5947
      %v5949 = vrot.slane %v5944, %v5948
      %v5951 = vshrl.u32 %v5925, 16
      %v5952 = vpack.i.b16 %v5951, %v5951
      %v5954 = vlaneseq
      %v5955 = vshrl.u32 %v5954, 7
      %v5956 = vsub.s32 0, %v5955
      %v5957 = vrot.slane %v5952, %v5956
      %v5962 = vunpack.c.l.b16 %v5933
      %v5963 = vunpack.c.l.b16 %v5941
      %v5964 = vunpack.c.l.b16 %v5949
      %v5965 = vunpack.c.l.b16 %v5957
      %v5966 = vpack.c.b16 %v5963, %v5962
      %v5967 = vpack.c.b16 %v5965, %v5964
      %5968 = vrot.lane.b32.xlu0 %v5966, 72
      %v5969 = vpop.permute.xlu0 %5968
      %5970 = vrot.lane.b32.xlu0 %v5967, 72
      %v5971 = vpop.permute.xlu0 %5970
      %v5972 = vrot.slane %v5969, 4
      %v5973 = vrot.slane %v5971, 4
      %v5974 = vsel %vm533, %v5972, %v5969
      %v5975 = vsel %vm412, %v5972, %v5973
      %v5976 = vsel %vm533, %v5975, %v5971
      %v5980 = vmul.bf16 %v5911, %v5974
      %v5981 = vmul.bf16 %v5912, %v5976
      %v5982 = vmul.bf16 %v5913, %v5973
      %5986 = vrot.lane.b32.xlu0 %v5980, 56
      %v5987 = vpop.permute.xlu0 %5986
      %5988 = vrot.lane.b32.xlu0 %v5981, 56
      %v5989 = vpop.permute.xlu0 %5988
      %5990 = vrot.lane.b32.xlu0 %v5982, 56
      %v5991 = vpop.permute.xlu0 %5990
      %v5992 = vrot.slane %v5987, 4
      %v5993 = vrot.slane %v5989, 4
      %v5994 = vrot.slane %v5991, 4
      %v5995 = vsel %vm412, %v5992, %v5993
      %v5996 = vsel %vm492, %v5987, %v5995
      %v5997 = vsel %vm412, %v5993, %v5994
      %v5998 = vsel %vm492, %v5989, %v5997
      %6001 = vst [vmem:[#allocation3 + $0x190] sm:$0xff] %v5996
      %6002 = vst [vmem:[#allocation3 + $0x198] sm:$0xff] %v5998
      %v6003 = vld [vmem:[#allocation2 + $0x4] sm:$0xff]
      %v6004 = vld [vmem:[#allocation2 + $0xc] sm:$0xff]
      %v6005 = vld [vmem:[#allocation2 + $0x14] sm:$0xf]
      %v6006 = vld [vmem:[%s7 + $0x30] sm:$0x22]
      %v6007 = vld [vmem:[%s7 + $0x38] sm:$0x22]
      %v6010 = vunpack.c.l.b16 %v6006
      %v6011 = vunpack.c.h.b16 %v6006
      %v6012 = vunpack.c.l.b16 %v6007
      %v6013 = vunpack.c.h.b16 %v6007
      %v6014 = vpack.c.b16 %v6010, %v6010
      %v6015 = vpack.c.b16 %v6011, %v6011
      %v6016 = vpack.c.b16 %v6012, %v6012
      %v6017 = vpack.c.b16 %v6013, %v6013
      %v6019 = vpack.i.b16 %v6014, %v6014
      %v6021 = vlaneseq
      %v6022 = vshrl.u32 %v6021, 7
      %v6023 = vsub.s32 1, %v6022
      %v6024 = vrot.slane %v6019, %v6023
      %v6026 = vpack.i.b16 %v6015, %v6015
      %v6028 = vlaneseq
      %v6029 = vshrl.u32 %v6028, 7
      %v6030 = vsub.s32 1, %v6029
      %v6031 = vrot.slane %v6026, %v6030
      %v6033 = vpack.i.b16 %v6016, %v6016
      %v6035 = vlaneseq
      %v6036 = vshrl.u32 %v6035, 7
      %v6037 = vsub.s32 1, %v6036
      %v6038 = vrot.slane %v6033, %v6037
      %v6040 = vpack.i.b16 %v6017, %v6017
      %v6042 = vlaneseq
      %v6043 = vshrl.u32 %v6042, 7
      %v6044 = vsub.s32 1, %v6043
      %v6045 = vrot.slane %v6040, %v6044
      %v6050 = vunpack.c.l.b16 %v6024
      %v6051 = vunpack.c.l.b16 %v6031
      %v6052 = vunpack.c.l.b16 %v6038
      %v6053 = vunpack.c.l.b16 %v6045
      %v6054 = vpack.c.b16 %v6051, %v6050
      %v6055 = vpack.c.b16 %v6053, %v6052
      %6056 = vrot.lane.b32.xlu0 %v6054, 73
      %v6057 = vpop.permute.xlu0 %6056
      %6058 = vrot.lane.b32.xlu0 %v6055, 73
      %v6059 = vpop.permute.xlu0 %6058
      %v6060 = vrot.slane %v6057, 4
      %v6061 = vrot.slane %v6059, 4
      %v6062 = vsel %vm414, %v6060, %v6057
      %v6063 = vsel %vm412, %v6060, %v6061
      %v6064 = vsel %vm414, %v6063, %v6059
      %v6068 = vmul.bf16 %v6003, %v6062
      %v6069 = vmul.bf16 %v6004, %v6064
      %v6070 = vmul.bf16 %v6005, %v6061
      %6074 = vrot.lane.b32.xlu0 %v6068, 55
      %v6075 = vpop.permute.xlu0 %6074
      %6076 = vrot.lane.b32.xlu0 %v6069, 55
      %v6077 = vpop.permute.xlu0 %6076
      %6078 = vrot.lane.b32.xlu0 %v6070, 55
      %v6079 = vpop.permute.xlu0 %6078
      %v6080 = vrot.slane %v6075, 4
      %v6081 = vrot.slane %v6077, 4
      %v6082 = vrot.slane %v6079, 4
      %v6083 = vsel %vm412, %v6080, %v6081
      %v6084 = vsel %vm373, %v6075, %v6083
      %v6085 = vsel %vm412, %v6081, %v6082
      %v6086 = vsel %vm373, %v6077, %v6085
      %6089 = vst [vmem:[#allocation3 + $0x1a0] sm:$0xff] %v6084
      %6090 = vst [vmem:[#allocation3 + $0x1a8] sm:$0xff] %v6086
      %v6091 = vld [vmem:[%s4] sm:$0xff]
      %v6092 = vld [vmem:[#allocation3] sm:$0xff]
      %v6093 = vld [vmem:[#allocation3 + $0x8] sm:$0xff]
      %v6094 = vld [vmem:[#allocation3 + $0x10] sm:$0xff]
      %v6095 = vld [vmem:[#allocation3 + $0x18] sm:$0xff]
      %v6096 = vld [vmem:[#allocation3 + $0x20] sm:$0xff]
      %v6097 = vld [vmem:[#allocation3 + $0x28] sm:$0xff]
      %v6098 = vld [vmem:[#allocation3 + $0x30] sm:$0xff]
      %v6099 = vld [vmem:[#allocation3 + $0x38] sm:$0xff]
      %v6100 = vld [vmem:[#allocation3 + $0x40] sm:$0xff]
      %v6101 = vld [vmem:[#allocation3 + $0x48] sm:$0xff]
      %v6102 = vld [vmem:[#allocation3 + $0x50] sm:$0xff]
      %v6103 = vld [vmem:[#allocation3 + $0x58] sm:$0xff]
      %v6104 = vld [vmem:[#allocation3 + $0x60] sm:$0xff]
      %v6105 = vld [vmem:[#allocation3 + $0x68] sm:$0xff]
      %v6106 = vld [vmem:[#allocation3 + $0x70] sm:$0xff]
      %v6107 = vld [vmem:[#allocation3 + $0x78] sm:$0xff]
      %v6108 = vld [vmem:[#allocation3 + $0x80] sm:$0xff]
      %v6109 = vld [vmem:[#allocation3 + $0x88] sm:$0xff]
      %v6110 = vld [vmem:[#allocation3 + $0x90] sm:$0xff]
      %v6111 = vld [vmem:[#allocation3 + $0x98] sm:$0xff]
      %v6112 = vld [vmem:[#allocation3 + $0xa0] sm:$0xff]
      %v6113 = vld [vmem:[#allocation3 + $0xa8] sm:$0xff]
      %v6114 = vld [vmem:[#allocation3 + $0xb0] sm:$0xff]
      %v6115 = vld [vmem:[#allocation3 + $0xb8] sm:$0xff]
      %v6116 = vld [vmem:[#allocation3 + $0xc0] sm:$0xff]
      %v6117 = vld [vmem:[#allocation3 + $0xc8] sm:$0xff]
      %v6118 = vld [vmem:[#allocation3 + $0xd0] sm:$0xff]
      %v6119 = vld [vmem:[#allocation3 + $0xd8] sm:$0xff]
      %v6120 = vld [vmem:[#allocation3 + $0xe0] sm:$0xff]
      %v6121 = vld [vmem:[#allocation3 + $0xe8] sm:$0xff]
      %v6122 = vld [vmem:[#allocation3 + $0xf0] sm:$0xff]
      %v6123 = vld [vmem:[#allocation3 + $0xf8] sm:$0xff]
      %v6124 = vld [vmem:[#allocation3 + $0x100] sm:$0xff]
      %v6125 = vld [vmem:[#allocation3 + $0x108] sm:$0xff]
      %v6126 = vld [vmem:[#allocation3 + $0x110] sm:$0xff]
      %v6127 = vld [vmem:[#allocation3 + $0x118] sm:$0xff]
      %v6128 = vld [vmem:[#allocation3 + $0x120] sm:$0xff]
      %v6129 = vld [vmem:[#allocation3 + $0x128] sm:$0xff]
      %v6130 = vld [vmem:[#allocation3 + $0x130] sm:$0xff]
      %v6131 = vld [vmem:[#allocation3 + $0x138] sm:$0xff]
      %v6132 = vld [vmem:[#allocation3 + $0x140] sm:$0xff]
      %v6133 = vld [vmem:[#allocation3 + $0x148] sm:$0xff]
      %v6134 = vld [vmem:[#allocation3 + $0x150] sm:$0xff]
      %v6135 = vld [vmem:[#allocation3 + $0x158] sm:$0xff]
      %v6136 = vld [vmem:[#allocation3 + $0x160] sm:$0xff]
      %v6137 = vld [vmem:[#allocation3 + $0x168] sm:$0xff]
      %v6138 = vld [vmem:[#allocation3 + $0x170] sm:$0xff]
      %v6139 = vld [vmem:[#allocation3 + $0x178] sm:$0xff]
      %v6140 = vld [vmem:[#allocation3 + $0x180] sm:$0xff]
      %v6141 = vld [vmem:[#allocation3 + $0x188] sm:$0xff]
      %v6142 = vld [vmem:[#allocation3 + $0x190] sm:$0xff]
      %v6143 = vld [vmem:[#allocation3 + $0x198] sm:$0xff]
      %v6144 = vld [vmem:[#allocation3 + $0x1a0] sm:$0xff]
      %v6145 = vld [vmem:[#allocation3 + $0x1a8] sm:$0xff]
      %v6147 = vunpack.c.l.b16 %v6091
      %v6148 = vunpack.c.h.b16 %v6091
      %v6149 = vpack.c.b16 %v6147, %v6147
      %v6150 = vpack.c.b16 %v6148, %v6148
      %v6206 = vunpack.c.l.b16 %v6092
      %v6207 = vunpack.c.h.b16 %v6092
      %v6208 = vunpack.c.l.b16 %v6093
      %v6209 = vunpack.c.h.b16 %v6093
      %v6210 = vunpack.c.l.b16 %v6094
      %v6211 = vunpack.c.h.b16 %v6094
      %v6212 = vunpack.c.l.b16 %v6095
      %v6213 = vunpack.c.h.b16 %v6095
      %v6214 = vunpack.c.l.b16 %v6096
      %v6215 = vunpack.c.h.b16 %v6096
      %v6216 = vunpack.c.l.b16 %v6097
      %v6217 = vunpack.c.h.b16 %v6097
      %v6218 = vunpack.c.l.b16 %v6098
      %v6219 = vunpack.c.h.b16 %v6098
      %v6220 = vunpack.c.l.b16 %v6099
      %v6221 = vunpack.c.h.b16 %v6099
      %v6222 = vunpack.c.l.b16 %v6100
      %v6223 = vunpack.c.h.b16 %v6100
      %v6224 = vunpack.c.l.b16 %v6101
      %v6225 = vunpack.c.h.b16 %v6101
      %v6226 = vunpack.c.l.b16 %v6102
      %v6227 = vunpack.c.h.b16 %v6102
      %v6228 = vunpack.c.l.b16 %v6103
      %v6229 = vunpack.c.h.b16 %v6103
      %v6230 = vunpack.c.l.b16 %v6104
      %v6231 = vunpack.c.h.b16 %v6104
      %v6232 = vunpack.c.l.b16 %v6105
      %v6233 = vunpack.c.h.b16 %v6105
      %v6234 = vunpack.c.l.b16 %v6106
      %v6235 = vunpack.c.h.b16 %v6106
      %v6236 = vunpack.c.l.b16 %v6107
      %v6237 = vunpack.c.h.b16 %v6107
      %v6238 = vunpack.c.l.b16 %v6108
      %v6239 = vunpack.c.h.b16 %v6108
      %v6240 = vunpack.c.l.b16 %v6109
      %v6241 = vunpack.c.h.b16 %v6109
      %v6242 = vunpack.c.l.b16 %v6110
      %v6243 = vunpack.c.h.b16 %v6110
      %v6244 = vunpack.c.l.b16 %v6111
      %v6245 = vunpack.c.h.b16 %v6111
      %v6246 = vunpack.c.l.b16 %v6112
      %v6247 = vunpack.c.h.b16 %v6112
      %v6248 = vunpack.c.l.b16 %v6113
      %v6249 = vunpack.c.h.b16 %v6113
      %v6250 = vunpack.c.l.b16 %v6114
      %v6251 = vunpack.c.h.b16 %v6114
      %v6252 = vunpack.c.l.b16 %v6115
      %v6253 = vunpack.c.h.b16 %v6115
      %v6254 = vunpack.c.l.b16 %v6116
      %v6255 = vunpack.c.h.b16 %v6116
      %v6256 = vunpack.c.l.b16 %v6117
      %v6257 = vunpack.c.h.b16 %v6117
      %v6258 = vunpack.c.l.b16 %v6118
      %v6259 = vunpack.c.h.b16 %v6118
      %v6260 = vunpack.c.l.b16 %v6119
      %v6261 = vunpack.c.h.b16 %v6119
      %v6262 = vunpack.c.l.b16 %v6120
      %v6263 = vunpack.c.h.b16 %v6120
      %v6264 = vunpack.c.l.b16 %v6121
      %v6265 = vunpack.c.h.b16 %v6121
      %v6266 = vunpack.c.l.b16 %v6122
      %v6267 = vunpack.c.h.b16 %v6122
      %v6268 = vunpack.c.l.b16 %v6123
      %v6269 = vunpack.c.h.b16 %v6123
      %v6270 = vunpack.c.l.b16 %v6124
      %v6271 = vunpack.c.h.b16 %v6124
      %v6272 = vunpack.c.l.b16 %v6125
      %v6273 = vunpack.c.h.b16 %v6125
      %v6274 = vunpack.c.l.b16 %v6126
      %v6275 = vunpack.c.h.b16 %v6126
      %v6276 = vunpack.c.l.b16 %v6127
      %v6277 = vunpack.c.h.b16 %v6127
      %v6278 = vunpack.c.l.b16 %v6128
      %v6279 = vunpack.c.h.b16 %v6128
      %v6280 = vunpack.c.l.b16 %v6129
      %v6281 = vunpack.c.h.b16 %v6129
      %v6282 = vunpack.c.l.b16 %v6130
      %v6283 = vunpack.c.h.b16 %v6130
      %v6284 = vunpack.c.l.b16 %v6131
      %v6285 = vunpack.c.h.b16 %v6131
      %v6286 = vunpack.c.l.b16 %v6132
      %v6287 = vunpack.c.h.b16 %v6132
      %v6288 = vunpack.c.l.b16 %v6133
      %v6289 = vunpack.c.h.b16 %v6133
      %v6290 = vunpack.c.l.b16 %v6134
      %v6291 = vunpack.c.h.b16 %v6134
      %v6292 = vunpack.c.l.b16 %v6135
      %v6293 = vunpack.c.h.b16 %v6135
      %v6294 = vunpack.c.l.b16 %v6136
      %v6295 = vunpack.c.h.b16 %v6136
      %v6296 = vunpack.c.l.b16 %v6137
      %v6297 = vunpack.c.h.b16 %v6137
      %v6298 = vunpack.c.l.b16 %v6138
      %v6299 = vunpack.c.h.b16 %v6138
      %v6300 = vunpack.c.l.b16 %v6139
      %v6301 = vunpack.c.h.b16 %v6139
      %v6302 = vunpack.c.l.b16 %v6140
      %v6303 = vunpack.c.h.b16 %v6140
      %v6304 = vunpack.c.l.b16 %v6141
      %v6305 = vunpack.c.h.b16 %v6141
      %v6306 = vunpack.c.l.b16 %v6142
      %v6307 = vunpack.c.h.b16 %v6142
      %v6308 = vunpack.c.l.b16 %v6143
      %v6309 = vunpack.c.h.b16 %v6143
      %v6310 = vunpack.c.l.b16 %v6144
      %v6311 = vunpack.c.h.b16 %v6144
      %v6312 = vunpack.c.l.b16 %v6145
      %v6313 = vunpack.c.h.b16 %v6145
      %v6314 = vpack.c.b16 %v6210, %v6206
      %v6315 = vpack.c.b16 %v6211, %v6207
      %v6316 = vpack.c.b16 %v6212, %v6208
      %v6317 = vpack.c.b16 %v6213, %v6209
      %v6318 = vpack.c.b16 %v6218, %v6214
      %v6319 = vpack.c.b16 %v6219, %v6215
      %v6320 = vpack.c.b16 %v6220, %v6216
      %v6321 = vpack.c.b16 %v6221, %v6217
      %v6322 = vpack.c.b16 %v6226, %v6222
      %v6323 = vpack.c.b16 %v6227, %v6223
      %v6324 = vpack.c.b16 %v6228, %v6224
      %v6325 = vpack.c.b16 %v6229, %v6225
      %v6326 = vpack.c.b16 %v6234, %v6230
      %v6327 = vpack.c.b16 %v6235, %v6231
      %v6328 = vpack.c.b16 %v6236, %v6232
      %v6329 = vpack.c.b16 %v6237, %v6233
      %v6330 = vpack.c.b16 %v6242, %v6238
      %v6331 = vpack.c.b16 %v6243, %v6239
      %v6332 = vpack.c.b16 %v6244, %v6240
      %v6333 = vpack.c.b16 %v6245, %v6241
      %v6334 = vpack.c.b16 %v6250, %v6246
      %v6335 = vpack.c.b16 %v6251, %v6247
      %v6336 = vpack.c.b16 %v6252, %v6248
      %v6337 = vpack.c.b16 %v6253, %v6249
      %v6338 = vpack.c.b16 %v6258, %v6254
      %v6339 = vpack.c.b16 %v6259, %v6255
      %v6340 = vpack.c.b16 %v6260, %v6256
      %v6341 = vpack.c.b16 %v6261, %v6257
      %v6342 = vpack.c.b16 %v6266, %v6262
      %v6343 = vpack.c.b16 %v6267, %v6263
      %v6344 = vpack.c.b16 %v6268, %v6264
      %v6345 = vpack.c.b16 %v6269, %v6265
      %v6346 = vpack.c.b16 %v6274, %v6270
      %v6347 = vpack.c.b16 %v6275, %v6271
      %v6348 = vpack.c.b16 %v6276, %v6272
      %v6349 = vpack.c.b16 %v6277, %v6273
      %v6350 = vpack.c.b16 %v6282, %v6278
      %v6351 = vpack.c.b16 %v6283, %v6279
      %v6352 = vpack.c.b16 %v6284, %v6280
      %v6353 = vpack.c.b16 %v6285, %v6281
      %v6354 = vpack.c.b16 %v6290, %v6286
      %v6355 = vpack.c.b16 %v6291, %v6287
      %v6356 = vpack.c.b16 %v6292, %v6288
      %v6357 = vpack.c.b16 %v6293, %v6289
      %v6358 = vpack.c.b16 %v6298, %v6294
      %v6359 = vpack.c.b16 %v6299, %v6295
      %v6360 = vpack.c.b16 %v6300, %v6296
      %v6361 = vpack.c.b16 %v6301, %v6297
      %v6362 = vpack.c.b16 %v6306, %v6302
      %v6363 = vpack.c.b16 %v6307, %v6303
      %v6364 = vpack.c.b16 %v6308, %v6304
      %v6365 = vpack.c.b16 %v6309, %v6305
      %v6366 = vpack.c.b16 %v6310, %v6310
      %v6367 = vpack.c.b16 %v6311, %v6311
      %v6368 = vpack.c.b16 %v6312, %v6312
      %v6369 = vpack.c.b16 %v6313, %v6313
      %vm6422 = vcmask 719872
      %v6424 = vsel %vm6422, %v6150, 0
      %vm6426 = vcmask 1043456
      %v6428 = vsel %vm6426, %v6366, 0
      %v6431 = vsel %vm6426, %v6367, 0
      %v6434 = vsel %vm6426, %v6368, 0
      %v6437 = vsel %vm6426, %v6369, 0
      %6439 = vmatprep.subr.bf16.mxu0 %v6343
      %6440 = vmatpush1.bf16.msra.mxu0 %v6342
      %6441 = vmatprep.subr.bf16.mxu0 %v6339
      %6442 = vmatpush1.bf16.msra.mxu0 %v6338
      %6443 = vmatprep.subr.bf16.mxu0 %v6335
      %6444 = vmatpush1.bf16.msra.mxu0 %v6334
      %6445 = vmatprep.subr.bf16.mxu0 %v6331
      %6446 = vmatpush1.bf16.msra.mxu0 %v6330
      %6447 = vmatprep.subr.bf16.mxu0 %v6327
      %6448 = vmatpush1.bf16.msra.mxu0 %v6326
      %6449 = vmatprep.subr.bf16.mxu0 %v6323
      %6450 = vmatpush1.bf16.msra.mxu0 %v6322
      %6451 = vmatprep.subr.bf16.mxu0 %v6319
      %6452 = vmatpush1.bf16.msra.mxu0 %v6318
      %6453 = vmatprep.subr.bf16.mxu0 %v6315
      %6454 = vmatpush1.bf16.msra.mxu0 %v6314
      %6455 = vmatprep.subr.bf16.mxu0 0
      %6456 = vmatpush2.bf16.msra.mxu0 0
      %6457 = vmatprep.subr.bf16.mxu0 0
      %6458 = vmatpush2.bf16.msra.mxu0 0
      %6459 = vmatprep.subr.bf16.mxu0 %v6431
      %6460 = vmatpush2.bf16.msra.mxu0 %v6428
      %6461 = vmatprep.subr.bf16.mxu0 %v6363
      %6462 = vmatpush2.bf16.msra.mxu0 %v6362
      %6463 = vmatprep.subr.bf16.mxu0 %v6359
      %6464 = vmatpush2.bf16.msra.mxu0 %v6358
      %6465 = vmatprep.subr.bf16.mxu0 %v6355
      %6466 = vmatpush2.bf16.msra.mxu0 %v6354
      %6467 = vmatprep.subr.bf16.mxu0 %v6351
      %6468 = vmatpush2.bf16.msra.mxu0 %v6350
      %6469 = vmatprep.subr.bf16.mxu0 %v6347
      %6470 = vmatpush2.bf16.msra.mxu0 %v6346
      %6471 = vmatprep.mubr.bf16.mxu0 %v6424
      %6472 = vmatmul.mubr.bf16.gmra.mxu0 %v6149
      %v6473 = vpop.f32.mrf.mxu0
      %v6474 = vadd.f32 0.0, %v6473
      %v6475 = vpop.f32.mrf.mxu0
      %v6476 = vadd.f32 0.0, %v6475
      %v6477 = vpop.f32.mrf.mxu0
      %v6478 = vpop.f32.mrf.mxu0
      %6479 = vdwg.mxu0
      %6480 = vmatprep.subr.bf16.mxu0 %v6345
      %6481 = vmatpush1.bf16.msra.mxu0 %v6344
      %6482 = vmatprep.subr.bf16.mxu0 %v6341
      %6483 = vmatpush1.bf16.msra.mxu0 %v6340
      %6484 = vmatprep.subr.bf16.mxu0 %v6337
      %6485 = vmatpush1.bf16.msra.mxu0 %v6336
      %6486 = vmatprep.subr.bf16.mxu0 %v6333
      %6487 = vmatpush1.bf16.msra.mxu0 %v6332
      %6488 = vmatprep.subr.bf16.mxu0 %v6329
      %6489 = vmatpush1.bf16.msra.mxu0 %v6328
      %6490 = vmatprep.subr.bf16.mxu0 %v6325
      %6491 = vmatpush1.bf16.msra.mxu0 %v6324
      %6492 = vmatprep.subr.bf16.mxu0 %v6321
      %6493 = vmatpush1.bf16.msra.mxu0 %v6320
      %6494 = vmatprep.subr.bf16.mxu0 %v6317
      %6495 = vmatpush1.bf16.msra.mxu0 %v6316
      %6496 = vmatprep.subr.bf16.mxu0 0
      %6497 = vmatpush2.bf16.msra.mxu0 0
      %6498 = vmatprep.subr.bf16.mxu0 0
      %6499 = vmatpush2.bf16.msra.mxu0 0
      %6500 = vmatprep.subr.bf16.mxu0 %v6437
      %6501 = vmatpush2.bf16.msra.mxu0 %v6434
      %6502 = vmatprep.subr.bf16.mxu0 %v6365
      %6503 = vmatpush2.bf16.msra.mxu0 %v6364
      %6504 = vmatprep.subr.bf16.mxu0 %v6361
      %6505 = vmatpush2.bf16.msra.mxu0 %v6360
      %6506 = vmatprep.subr.bf16.mxu0 %v6357
      %6507 = vmatpush2.bf16.msra.mxu0 %v6356
      %6508 = vmatprep.subr.bf16.mxu0 %v6353
      %6509 = vmatpush2.bf16.msra.mxu0 %v6352
      %6510 = vmatprep.subr.bf16.mxu0 %v6349
      %6511 = vmatpush2.bf16.msra.mxu0 %v6348
      %6512 = vmatprep.mubr.bf16.mxu0 %v6424
      %6513 = vmatmul.mubr.bf16.gmra.mxu0 %v6149
      %v6514 = vpop.f32.mrf.mxu0
      %v6515 = vadd.f32 0.0, %v6514
      %v6516 = vpop.f32.mrf.mxu0
      %v6517 = vadd.f32 0.0, %v6516
      %v6518 = vpop.f32.mrf.mxu0
      %v6519 = vpop.f32.mrf.mxu0
      %6520 = vdwg.mxu0
      %v6521 = vld [vmem:[%s5] sm:$0xff]
      %6523 = vset.pattern.permute.xlu0 0
      %6524 = vperm.xlu0 %6523, %v6521
      %v6525 = vpop.permute.xlu0 %6524
      %v6527 = vmul.f32 %v6474, %v6525
      %v6528 = vmul.f32 %v6476, %v6525
      %v6529 = vmul.f32 %v6515, %v6525
      %v6530 = vmul.f32 %v6517, %v6525
      %v6531 = vld [vmem:[%s6] sm:$0xff]
      %6533 = vset.pattern.permute.xlu0 0
      %6534 = vperm.xlu0 %6533, %v6531
      %v6535 = vpop.permute.xlu0 %6534
      %v6537 = vadd.f32 %v6527, %v6535
      %v6538 = vadd.f32 %v6528, %v6535
      %v6539 = vadd.f32 %v6529, %v6535
      %v6540 = vadd.f32 %v6530, %v6535
      %v6541 = vmax.f32 %v6537, 0.0
      %v6542 = vmax.f32 %v6538, 0.0
      %v6543 = vmax.f32 %v6539, 0.0
      %v6544 = vmax.f32 %v6540, 0.0
      %v6545 = vadd.f32 %v6541, %v3669
      %v6546 = vadd.f32 %v6542, %v3670
      %v6547 = vadd.f32 %v6543, %v3671
      %v6548 = vadd.f32 %v6544, %v3672
      %6549 = vst [vmem:[%s305] sm:$0xff] %v6545
      %6550 = vst [vmem:[%s305 + $0x8] sm:$0xff] %v6546
      %6551 = vst [vmem:[%s305 + $0x10] sm:$0xff] %v6547
      %6552 = vst [vmem:[%s305 + $0x18] sm:$0xff] %v6548
      %p6553 = scmp.lt.s32.totalorder %s19, 1
      %s6554 = scalar_select %p6553, %s19, 1
      %s6555 = smul.addr %s6554, 4
      %s6556 = smul.addr %s6555, 8
      %s6557 = scalar_lea.vmem %s8, %s6556
      // Predicated region
      $region53: #{down_forward.1} parent=51 // pred_check
        %p6558 = pneg %p210
      $region54: #{down_forward.1} parent=51 // pred_check_branch
        %6560 = sbr.rel (%p6558) target = $region56
      $region55: #{down_forward.1} parent=51 // pred_region
        _
      $region56: #{down_forward.1} parent=51 // pred_fallthru
        _
    $region52: #{down_forward.1} parent=5 // pred_fallthru
      _
    %p6561 = scmp.le.s32.totalorder 2, %s14
    // Predicated region
    $region57: #{down_forward.1} parent=5 // pred_check
      %p6562 = pneg %p6561
    $region58: #{down_forward.1} parent=5 // pred_check_branch
      %6564 = sbr.rel (%p6562) target = $region60
    $region59: #{down_forward.1} parent=5 // pred_region
      %s6565 = ssub.s32 %s14, 2
      // Predicated region
      $region61: #{down_forward.1} parent=59 // pred_check
        %p6566 = pneg %p216
      $region62: #{down_forward.1} parent=59 // pred_check_branch
        %6568 = sbr.rel (%p6566) target = $region64
      $region63: #{down_forward.1} parent=59 // pred_region
        %p6569 = scmp.lt.s32.totalorder %s20, 1
        %s6570 = scalar_select %p6569, %s20, 1
        %s6571 = smul.addr %s6570, 4
        %s6572 = smul.addr %s6571, 8
        %s6573 = scalar_lea.vmem %s8, %s6572
      $region64: #{down_forward.1} parent=59 // pred_fallthru
        _
    $region60: #{down_forward.1} parent=5 // pred_fallthru
      _
  $region6: #{down_forward.1} parent=0 // loop_footer
    %s18 = sadd.s32 1, %s14
  $region7: #{down_forward.1} parent=0 // loop_footer_branch
    %13 = sbr.rel target = $region3
  $region8: #{down_forward.1} parent=0 // loop_exit
    _

</llo_original>
